<compile_context>
chip_gen: v5e
topology: v5e:2x2
jax: 0.10.0
libtpu: 0.0.40
codegen_flags: <defaults>
</compile_context>

<pallas_src>
import functools

import jax
import jax.numpy as jnp
from jax.experimental import pallas as pl
from jax.experimental.pallas import tpu as pltpu


def _gelu(x):
    # tanh-approximate GELU (EUP-friendly).
    return 0.5 * x * (1.0 + jnp.tanh(0.7978845608028654 * (x + 0.044715 * x * x * x)))


def _apply_act(x, act):
    if act is None:
        return x
    if act == "relu":
        return jnp.maximum(x, 0.0)
    if act == "gelu":
        return _gelu(x)
    raise ValueError(f"unsupported activation: {act}")


# -----------------------------------------------------------------------------
# Kernel 1: fused 1x1-conv GEMM, channels-on-sublanes / spatial-on-lanes layout
#   out[b, :, s_tile] = act((W @ a[b, :, s_tile] + bias + extra) * scale + shift)
# -----------------------------------------------------------------------------
def _pick_spatial_tile(S, K, N, a_item, out_item, has_extra, batch):
    """Largest lane-dense spatial tile whose blocks stay well inside VMEM."""
    budget = 20 * 1024 * 1024          # per-step block bytes (~2x when double-buffered)

    def step_bytes(t):
        b = K * t * a_item + N * K * 2 + N * t * out_item + 3 * N * 4
        if has_extra:
            b += N * t * 4
        return b

    if S % 128 != 0:
        return S                       # full-extent lane block (exempt from the 128 rule)
    t = min(S, 2048)
    t -= t % 128
    while t > 128 and (S % t != 0 or step_bytes(t) > budget):
        t -= 128
    if S % t != 0:
        t = 128
    # v7x has 2 TensorCores sharded over parallel grid axes: keep >= 2 programs.
    if batch == 1 and t == S and S % 256 == 0:
        t = S // 2
    return t


def conv1x1_nchw(a, w, bias, *, extra=None, scale=None, shift=None, act=None,
                 out_dtype=jnp.bfloat16):
    """a: (B, K, S); w: (N, K); bias/scale/shift: (N,); extra: (B, N, S) f32."""
    B, K, S = a.shape
    N = w.shape[0]
    assert w.shape == (N, K)
    has_extra = extra is not None
    has_bn = scale is not None

    a_item = jnp.dtype(a.dtype).itemsize
    out_item = jnp.dtype(out_dtype).itemsize
    T = _pick_spatial_tile(S, K, N, a_item, out_item, has_extra, B)
    n_t = S // T

    args = [a, w.astype(jnp.bfloat16), bias.reshape(N, 1).astype(jnp.float32)]
    in_specs = [
        pl.BlockSpec((1, K, T), lambda b, t: (b, 0, t)),
        pl.BlockSpec((N, K), lambda b, t: (0, 0)),
        pl.BlockSpec((N, 1), lambda b, t: (0, 0)),
    ]
    if has_bn:
        args += [scale.reshape(N, 1).astype(jnp.float32),
                 shift.reshape(N, 1).astype(jnp.float32)]
        in_specs += [pl.BlockSpec((N, 1), lambda b, t: (0, 0)),
                     pl.BlockSpec((N, 1), lambda b, t: (0, 0))]
    if has_extra:
        assert extra.shape == (B, N, S)
        args.append(extra)
        in_specs.append(pl.BlockSpec((1, N, T), lambda b, t: (b, 0, t)))

    def kernel(*refs):
        a_ref, w_ref, b_ref = refs[0], refs[1], refs[2]
        pos = 3
        if has_bn:
            sc_ref, sh_ref = refs[3], refs[4]
            pos = 5
        if has_extra:
            e_ref = refs[pos]
            pos += 1
        o_ref = refs[pos]

        a_blk = a_ref[0]                              # (K, T)
        w_blk = w_ref[...]                            # (N, K) bf16
        if K < 8:
            # Degenerate contraction (e.g. the 1-channel stem): keep it on the VPU.
            acc = jnp.zeros((N, T), jnp.float32)
            for k in range(K):
                acc = acc + (w_blk[:, k:k + 1].astype(jnp.float32)
                             * a_blk[k:k + 1, :].astype(jnp.float32))
        else:
            acc = jnp.dot(w_blk, a_blk.astype(jnp.bfloat16),
                          preferred_element_type=jnp.float32)    # MXU, f32 acc
        r = acc + b_ref[...]
        if has_extra:
            r = r + e_ref[0]
        if has_bn:
            r = r * sc_ref[...] + sh_ref[...]
        r = _apply_act(r, act)
        o_ref[0] = r.astype(o_ref.dtype)

    step_bytes = (K * T * a_item + N * K * 2 + N * T * out_item
                  + (N * T * 4 if has_extra else 0) + 3 * N * 4)
    vmem_limit = int(min(48 << 20, max(3 * step_bytes + (2 << 20), 32 << 20)))

    return pl.pallas_call(
        kernel,
        out_shape=jax.ShapeDtypeStruct((B, N, S), out_dtype),
        grid=(B, n_t),
        in_specs=in_specs,
        out_specs=pl.BlockSpec((1, N, T), lambda b, t: (b, 0, t)),
        compiler_params=pltpu.CompilerParams(
            dimension_semantics=("parallel", "parallel"),
            vmem_limit_bytes=vmem_limit),
    )(*args)


def conv2d_nchw(h, w, b, *, H, W, ksize=1, pad=0, extra=None, scale=None,
                shift=None, act=None, out_dtype=jnp.bfloat16):
    """h: (B, Cin, H*W) -> (B, Cout, H*W).  ksize>1 goes through im2col."""
    B, Cin, S = h.shape
    if ksize == 1:
        a = h
    else:
        # TODO(synk): im2col materializes ksize^2 shifted copies in HBM.
        assert 2 * pad == ksize - 1, "only same-size convs are supported"
        x4 = h.reshape(B, Cin, H, W)
        xp = jnp.pad(x4, ((0, 0), (0, 0), (pad, pad), (pad, pad)))
        cols = [xp[:, :, dh:dh + H, dw:dw + W]
                for dh in range(ksize) for dw in range(ksize)]
        a = jnp.concatenate(cols, axis=1).reshape(B, ksize * ksize * Cin, S)
    return conv1x1_nchw(a, w, b, extra=extra, scale=scale, shift=shift,
                        act=act, out_dtype=out_dtype)


# -----------------------------------------------------------------------------
# Kernel 2: per-Fourier-mode complex channel mixing, modes on the lane axis
#   out[b, co, m] = sum_ci x[b, ci, m] * w[ci, co, m]   (complex, VPU)
# -----------------------------------------------------------------------------
def _pick_mode_tile(Mm, Cin, Cout):
    budget = 16 * 1024 * 1024

    def step_bytes(t):
        return 2 * Cin * t * 4 + 2 * Cin * Cout * t * 4 + 2 * Cout * t * 4

    if Mm % 128 != 0:
        return Mm
    t = min(Mm, 2048)
    t -= t % 128
    while t > 128 and (Mm % t != 0 or step_bytes(t) > budget):
        t -= 128
    if Mm % t != 0:
        t = 128
    return t


def spectral_complex_mix(xr, xi, wr_t, wi_t):
    """xr/xi: (B, Cin, Mm) f32; wr_t/wi_t: (Cin, Cout, Mm) f32
       -> real/imag (B, Cout, Mm) f32."""
    B, Cin, Mm = xr.shape
    Cout = wr_t.shape[1]
    Mc = _pick_mode_tile(Mm, Cin, Cout)
    n_mc = Mm // Mc

    def kernel(xr_ref, xi_ref, wr_ref, wi_ref, or_ref, oi_ref):
        xr_b = xr_ref[0]                     # (Cin, Mc) f32
        xi_b = xi_ref[0]
        acc_r = jnp.zeros((Cout, Mc), jnp.float32)
        acc_i = jnp.zeros((Cout, Mc), jnp.float32)
        # VPU broadcast-multiply-accumulate over Cin; modes stay lane-dense.
        for ci in range(Cin):
            ar = xr_b[ci:ci + 1, :]          # (1, Mc) -> broadcast over Cout sublanes
            ai = xi_b[ci:ci + 1, :]
            br = wr_ref[ci]                  # (Cout, Mc)
            bi = wi_ref[ci]
            acc_r = acc_r + ar * br - ai * bi
            acc_i = acc_i + ar * bi + ai * br
        or_ref[0] = acc_r
        oi_ref[0] = acc_i

    out_r, out_i = pl.pallas_call(
        kernel,
        out_shape=(jax.ShapeDtypeStruct((B, Cout, Mm), jnp.float32),
                   jax.ShapeDtypeStruct((B, Cout, Mm), jnp.float32)),
        grid=(B, n_mc),
        in_specs=[
            pl.BlockSpec((1, Cin, Mc), lambda b, m: (b, 0, m)),
            pl.BlockSpec((1, Cin, Mc), lambda b, m: (b, 0, m)),
            pl.BlockSpec((Cin, Cout, Mc), lambda b, m: (0, 0, m)),
            pl.BlockSpec((Cin, Cout, Mc), lambda b, m: (0, 0, m)),
        ],
        out_specs=(
            pl.BlockSpec((1, Cout, Mc), lambda b, m: (b, 0, m)),
            pl.BlockSpec((1, Cout, Mc), lambda b, m: (b, 0, m)),
        ),
        compiler_params=pltpu.CompilerParams(
            dimension_semantics=("parallel", "parallel"),
            vmem_limit_bytes=32 << 20),
    )(xr, xi, wr_t, wi_t)
    return out_r, out_i


def spectral_conv2d_nchw(x_bchw, wr_t, wi_t, m1, m2):
    """FNOConv2d on NCHW input: keep (m1, m2) low modes, per-mode complex mix."""
    B, Cin, H, W = x_bchw.shape
    Cout = wr_t.shape[1]
    Wh = W // 2 + 1
    x_ft = jnp.fft.rfft2(x_bchw.astype(jnp.float32), axes=(2, 3))   # (B,Cin,H,Wh) c64
    top = x_ft[:, :, :m1, :m2]
    bot = x_ft[:, :, H - m1:, :m2]
    blk = jnp.concatenate([top, bot], axis=2).reshape(B, Cin, 2 * m1 * m2)
    or_, oi_ = spectral_complex_mix(jnp.real(blk), jnp.imag(blk), wr_t, wi_t)
    o = jax.lax.complex(or_, oi_).reshape(B, Cout, 2 * m1, m2)
    # Assemble the truncated spectrum with one concat + one pad (no scatter).
    mid = jnp.zeros((B, Cout, H - 2 * m1, m2), jnp.complex64)
    col = jnp.concatenate([o[:, :, :m1], mid, o[:, :, m1:]], axis=2)   # (B,Cout,H,m2)
    out_ft = jnp.pad(col, ((0, 0), (0, 0), (0, 0), (0, Wh - m2)))
    out = jnp.fft.irfft2(out_ft, s=(H, W), axes=(2, 3))
    return out.astype(jnp.float32).reshape(B, Cout, H * W)


# -----------------------------------------------------------------------------
# parameter init (deterministic, synthetic)
# -----------------------------------------------------------------------------
def init_conv(key, ksize, cin, cout):
    fan_in = ksize * ksize * cin
    w = jax.random.normal(key, (cout, ksize * ksize * cin), jnp.float32)
    w = (w * jnp.sqrt(2.0 / fan_in)).astype(jnp.bfloat16)
    b = jnp.zeros((cout,), jnp.float32)
    return {"w": w, "b": b}


def init_fno2d(key, in_ch, out_ch, dim, kernel_list, kernel_size_list,
               padding_list, hidden_list, mode_list, H, W):
    n_blocks = len(kernel_list)
    n_keys = 1 + 3 * n_blocks + len(hidden_list) + 1
    keys = iter(jax.random.split(key, n_keys))

    params = {"stem": init_conv(next(keys), 1, in_ch, dim)}

    blocks = []
    cin = dim
    eps = 1e-5
    for cout, ksz, pad, (m1, m2) in zip(kernel_list, kernel_size_list,
                                        padding_list, mode_list):
        m1 = min(m1, H // 2)
        m2 = min(m2, W // 2 + 1)
        mm = 2 * m1 * m2
        wscale = 1.0 / (cin * cout)
        wr = wscale * jax.random.uniform(next(keys), (mm, cin, cout), jnp.float32)
        wi = wscale * jax.random.uniform(next(keys), (mm, cin, cout), jnp.float32)
        # Pre-transpose (static weights) so modes land on the lane axis in-kernel.
        wr_t = jnp.transpose(wr, (1, 2, 0))
        wi_t = jnp.transpose(wi, (1, 2, 0))
        conv = init_conv(next(keys), ksz, cin, cout)
        # BatchNorm2d (eval mode, default params) folded into scale/shift.
        gamma = jnp.ones((cout,), jnp.float32)
        beta = jnp.zeros((cout,), jnp.float32)
        rmean = jnp.zeros((cout,), jnp.float32)
        rvar = jnp.ones((cout,), jnp.float32)
        bn_scale = gamma / jnp.sqrt(rvar + eps)
        bn_shift = beta - rmean * bn_scale
        blocks.append({"wr_t": wr_t, "wi_t": wi_t, "m1": m1, "m2": m2,
                       "ksz": ksz, "pad": pad, "conv": conv,
                       "bn_scale": bn_scale, "bn_shift": bn_shift})
        cin = cout
    params["blocks"] = blocks

    head = []
    hchans = [kernel_list[-1]] + list(hidden_list)
    for a_c, b_c in zip(hchans[:-1], hchans[1:]):
        head.append(init_conv(next(keys), 1, a_c, b_c))
    head.append(init_conv(next(keys), 1, hchans[-1], out_ch))
    params["head"] = head
    return params


# -----------------------------------------------------------------------------
# FNO2D forward (NCHW end-to-end)
# -----------------------------------------------------------------------------
def fno2d_forward(x_nchw, params):
    B, Cin, H, W = x_nchw.shape
    S = H * W
    h = x_nchw.reshape(B, Cin, S)             # NCHW throughout; no transposes

    # stem (1x1 conv, no activation); bf16 intermediates from here on
    h = conv2d_nchw(h, params["stem"]["w"], params["stem"]["b"], H=H, W=W)

    # FNO2dBlock: GELU(BN(conv(x) + f_conv(x)))
    # conv + spectral add + folded BN + GELU fuse into one GEMM epilogue.
    for blk in params["blocks"]:
        c = h.shape[1]
        spec = spectral_conv2d_nchw(h.reshape(B, c, H, W), blk["wr_t"],
                                    blk["wi_t"], blk["m1"], blk["m2"])
        h = conv2d_nchw(h, blk["conv"]["w"], blk["conv"]["b"], H=H, W=W,
                        ksize=blk["ksz"], pad=blk["pad"], extra=spec,
                        scale=blk["bn_scale"], shift=blk["bn_shift"], act="gelu")

    # head: ConvBlock(GELU) x len(hidden_list), then a final ConvBlock (no act)
    for layer in params["head"][:-1]:
        h = conv2d_nchw(h, layer["w"], layer["b"], H=H, W=W, act="gelu")
    h = conv2d_nchw(h, params["head"][-1]["w"], params["head"][-1]["b"],
                    H=H, W=W, act=None, out_dtype=jnp.float32)

    return h.reshape(B, -1, H, W)


# -----------------------------------------------------------------------------
# main
# -----------------------------------------------------------------------------
if __name__ == "__main__":
    B, in_channels, H, W = 2, 1, 16, 16
    out_channels = 4
    dim = 16
    kernel_list = [16, 16, 16, 16]
    kernel_size_list = [1, 1, 1, 1]
    padding_list = [0, 0, 0, 0]
    hidden_list = [128]
    mode_list = [(8, 8)] * 4          # default (20, 20) cannot fit H=W=16

    key = jax.random.PRNGKey(0)
    kx, kp = jax.random.split(key)
    x = jax.random.normal(kx, (B, in_channels, H, W), jnp.float32)

    params = init_fno2d(kp, in_channels, out_channels, dim, kernel_list,
                        kernel_size_list, padding_list, hidden_list,
                        mode_list, H, W)

    fwd = jax.jit(functools.partial(fno2d_forward, params=params))
    out = fwd(x)
    jax.block_until_ready(out)

    assert out.shape == (B, out_channels, H, W), out.shape
    assert out.dtype == jnp.float32
    assert bool(jnp.all(jnp.isfinite(out)))
    print("KERNEL_OK")
</pallas_src>

<mosaic_0001>
module attributes {stable_mosaic.version = 11 : i64} {
  func.func @kernel(%arg0: i32, %arg1: i32, %arg2: memref<1x1x256xf32, #tpu.memory_space<vmem>>, %arg3: memref<16x1xbf16, #tpu.memory_space<vmem>>, %arg4: memref<16x1xf32, #tpu.memory_space<vmem>>, %arg5: memref<1x16x256xbf16, #tpu.memory_space<vmem>>) attributes {dimension_semantics = [#tpu.dimension_semantics<parallel>, #tpu.dimension_semantics<parallel>], iteration_bounds = array<i64: 2, 1>, scalar_prefetch = 0 : i64, scratch_operands = 0 : i64, tpu.core_type = #tpu.core_type<tc>, window_params = [{transform_indices = @transform_0, window_bounds = array<i64: 1, 1, 256>}, {pipeline_mode = #tpu.pipeline_mode<synchronous>, transform_indices = @transform_1, window_bounds = array<i64: 16, 1>}, {pipeline_mode = #tpu.pipeline_mode<synchronous>, transform_indices = @transform_2, window_bounds = array<i64: 16, 1>}, {transform_indices = @transform_3, window_bounds = array<i64: 1, 16, 256>}]} {
    %c0 = arith.constant 0 : index
    %c0_0 = arith.constant 0 : index
    %c0_1 = arith.constant 0 : index
    %0 = vector.load %arg2[%c0, %c0_0, %c0_1] : memref<1x1x256xf32, #tpu.memory_space<vmem>>, vector<1x1x256xf32>
    %1 = vector.shape_cast %0 : vector<1x1x256xf32> to vector<1x256xf32>
    %c0_2 = arith.constant 0 : index
    %c0_3 = arith.constant 0 : index
    %2 = vector.load %arg3[%c0_2, %c0_3] : memref<16x1xbf16, #tpu.memory_space<vmem>>, vector<16x1xbf16>
    %cst = arith.constant 0.000000e+00 : f32
    %3 = vector.broadcast %cst : f32 to vector<16x256xf32>
    %4 = arith.extf %2 : vector<16x1xbf16> to vector<16x1xf32>
    %5 = vector.broadcast %4 : vector<16x1xf32> to vector<16x256xf32>
    %6 = vector.broadcast %1 : vector<1x256xf32> to vector<16x256xf32>
    %7 = arith.mulf %5, %6 : vector<16x256xf32>
    %8 = arith.addf %3, %7 : vector<16x256xf32>
    %c0_4 = arith.constant 0 : index
    %c0_5 = arith.constant 0 : index
    %9 = vector.load %arg4[%c0_4, %c0_5] : memref<16x1xf32, #tpu.memory_space<vmem>>, vector<16x1xf32>
    %10 = vector.broadcast %9 : vector<16x1xf32> to vector<16x256xf32>
    %11 = arith.addf %8, %10 : vector<16x256xf32>
    %12 = arith.truncf %11 : vector<16x256xf32> to vector<16x256xbf16>
    %c0_6 = arith.constant 0 : index
    %c0_7 = arith.constant 0 : index
    %c0_8 = arith.constant 0 : index
    %13 = vector.load %arg5[%c0_6, %c0_7, %c0_8] : memref<1x16x256xbf16, #tpu.memory_space<vmem>>, vector<1x16x256xbf16>
    %14 = vector.shape_cast %13 : vector<1x16x256xbf16> to vector<16x256xbf16>
    %15 = vector.shape_cast %12 : vector<16x256xbf16> to vector<1x16x256xbf16>
    tpu.vector_store %arg5[%c0_6, %c0_7, %c0_8], %15 {strides = array<i32>} : memref<1x16x256xbf16, #tpu.memory_space<vmem>>, vector<1x16x256xbf16>,
    return
  }
  func.func @transform_0(%arg0: i32, %arg1: i32) -> (i32, i32, i32) {
    %c0_i32 = arith.constant 0 : i32
    %c0_i32_0 = arith.constant 0 : i32
    return %arg0, %c0_i32, %arg1 : i32, i32, i32
  }
  func.func @transform_1(%arg0: i32, %arg1: i32) -> (i32, i32) {
    %c0_i32 = arith.constant 0 : i32
    %c0_i32_0 = arith.constant 0 : i32
    %c0_i32_1 = arith.constant 0 : i32
    return %c0_i32, %c0_i32_0 : i32, i32
  }
  func.func @transform_2(%arg0: i32, %arg1: i32) -> (i32, i32) {
    %c0_i32 = arith.constant 0 : i32
    %c0_i32_0 = arith.constant 0 : i32
    %c0_i32_1 = arith.constant 0 : i32
    return %c0_i32, %c0_i32_0 : i32, i32
  }
  func.func @transform_3(%arg0: i32, %arg1: i32) -> (i32, i32, i32) {
    %c0_i32 = arith.constant 0 : i32
    %c0_i32_0 = arith.constant 0 : i32
    return %arg0, %c0_i32, %arg1 : i32, i32, i32
  }
}

module attributes {stable_mosaic.version = 11 : i64} {
  func.func @kernel(%arg0: i32, %arg1: i32, %arg2: memref<1x16x128xf32, #tpu.memory_space<vmem>>, %arg3: memref<1x16x128xf32, #tpu.memory_space<vmem>>, %arg4: memref<16x16x128xf32, #tpu.memory_space<vmem>>, %arg5: memref<16x16x128xf32, #tpu.memory_space<vmem>>, %arg6: memref<1x16x128xf32, #tpu.memory_space<vmem>>, %arg7: memref<1x16x128xf32, #tpu.memory_space<vmem>>) attributes {dimension_semantics = [#tpu.dimension_semantics<parallel>, #tpu.dimension_semantics<parallel>], iteration_bounds = array<i64: 2, 1>, scalar_prefetch = 0 : i64, scratch_operands = 0 : i64, tpu.core_type = #tpu.core_type<tc>, window_params = [{transform_indices = @transform_0, window_bounds = array<i64: 1, 16, 128>}, {transform_indices = @transform_1, window_bounds = array<i64: 1, 16, 128>}, {transform_indices = @transform_2, window_bounds = array<i64: 16, 16, 128>}, {transform_indices = @transform_3, window_bounds = array<i64: 16, 16, 128>}, {transform_indices = @transform_4, window_bounds = array<i64: 1, 16, 128>}, {transform_indices = @transform_5, window_bounds = array<i64: 1, 16, 128>}]} {
    %c0 = arith.constant 0 : index
    %c0_0 = arith.constant 0 : index
    %c0_1 = arith.constant 0 : index
    %0 = vector.load %arg2[%c0, %c0_0, %c0_1] : memref<1x16x128xf32, #tpu.memory_space<vmem>>, vector<1x16x128xf32>
    %1 = vector.shape_cast %0 : vector<1x16x128xf32> to vector<16x128xf32>
    %c0_2 = arith.constant 0 : index
    %c0_3 = arith.constant 0 : index
    %c0_4 = arith.constant 0 : index
    %2 = vector.load %arg3[%c0_2, %c0_3, %c0_4] : memref<1x16x128xf32, #tpu.memory_space<vmem>>, vector<1x16x128xf32>
    %3 = vector.shape_cast %2 : vector<1x16x128xf32> to vector<16x128xf32>
    %cst = arith.constant 0.000000e+00 : f32
    %4 = vector.broadcast %cst : f32 to vector<16x128xf32>
    %cst_5 = arith.constant 0.000000e+00 : f32
    %5 = vector.broadcast %cst_5 : f32 to vector<16x128xf32>
    %6 = vector.extract_strided_slice %1 {offsets = [0, 0], sizes = [1, 128], strides = [1, 1]} : vector<16x128xf32> to vector<1x128xf32>
    %7 = vector.extract_strided_slice %3 {offsets = [0, 0], sizes = [1, 128], strides = [1, 1]} : vector<16x128xf32> to vector<1x128xf32>
    %c0_6 = arith.constant 0 : index
    %c0_7 = arith.constant 0 : index
    %c0_8 = arith.constant 0 : index
    %8 = vector.load %arg4[%c0_6, %c0_7, %c0_8] : memref<16x16x128xf32, #tpu.memory_space<vmem>>, vector<1x16x128xf32>
    %9 = vector.shape_cast %8 : vector<1x16x128xf32> to vector<16x128xf32>
    %c0_9 = arith.constant 0 : index
    %c0_10 = arith.constant 0 : index
    %c0_11 = arith.constant 0 : index
    %10 = vector.load %arg5[%c0_9, %c0_10, %c0_11] : memref<16x16x128xf32, #tpu.memory_space<vmem>>, vector<1x16x128xf32>
    %11 = vector.shape_cast %10 : vector<1x16x128xf32> to vector<16x128xf32>
    %12 = vector.broadcast %6 : vector<1x128xf32> to vector<16x128xf32>
    %13 = arith.mulf %12, %9 : vector<16x128xf32>
    %14 = arith.addf %4, %13 : vector<16x128xf32>
    %15 = vector.broadcast %7 : vector<1x128xf32> to vector<16x128xf32>
    %16 = arith.mulf %15, %11 : vector<16x128xf32>
    %17 = arith.subf %14, %16 : vector<16x128xf32>
    %18 = vector.broadcast %6 : vector<1x128xf32> to vector<16x128xf32>
    %19 = arith.mulf %18, %11 : vector<16x128xf32>
    %20 = arith.addf %5, %19 : vector<16x128xf32>
    %21 = vector.broadcast %7 : vector<1x128xf32> to vector<16x128xf32>
    %22 = arith.mulf %21, %9 : vector<16x128xf32>
    %23 = arith.addf %20, %22 : vector<16x128xf32>
    %24 = vector.extract_strided_slice %1 {offsets = [1, 0], sizes = [1, 128], strides = [1, 1]} : vector<16x128xf32> to vector<1x128xf32>
    %25 = vector.extract_strided_slice %3 {offsets = [1, 0], sizes = [1, 128], strides = [1, 1]} : vector<16x128xf32> to vector<1x128xf32>
    %c1 = arith.constant 1 : index
    %c0_12 = arith.constant 0 : index
    %c0_13 = arith.constant 0 : index
    %26 = vector.load %arg4[%c1, %c0_12, %c0_13] : memref<16x16x128xf32, #tpu.memory_space<vmem>>, vector<1x16x128xf32>
    %27 = vector.shape_cast %26 : vector<1x16x128xf32> to vector<16x128xf32>
    %c1_14 = arith.constant 1 : index
    %c0_15 = arith.constant 0 : index
    %c0_16 = arith.constant 0 : index
    %28 = vector.load %arg5[%c1_14, %c0_15, %c0_16] : memref<16x16x128xf32, #tpu.memory_space<vmem>>, vector<1x16x128xf32>
    %29 = vector.shape_cast %28 : vector<1x16x128xf32> to vector<16x128xf32>
    %30 = vector.broadcast %24 : vector<1x128xf32> to vector<16x128xf32>
    %31 = arith.mulf %30, %27 : vector<16x128xf32>
    %32 = arith.addf %17, %31 : vector<16x128xf32>
    %33 = vector.broadcast %25 : vector<1x128xf32> to vector<16x128xf32>
    %34 = arith.mulf %33, %29 : vector<16x128xf32>
    %35 = arith.subf %32, %34 : vector<16x128xf32>
    %36 = vector.broadcast %24 : vector<1x128xf32> to vector<16x128xf32>
    %37 = arith.mulf %36, %29 : vector<16x128xf32>
    %38 = arith.addf %23, %37 : vector<16x128xf32>
    %39 = vector.broadcast %25 : vector<1x128xf32> to vector<16x128xf32>
    %40 = arith.mulf %39, %27 : vector<16x128xf32>
    %41 = arith.addf %38, %40 : vector<16x128xf32>
    %42 = vector.extract_strided_slice %1 {offsets = [2, 0], sizes = [1, 128], strides = [1, 1]} : vector<16x128xf32> to vector<1x128xf32>
    %43 = vector.extract_strided_slice %3 {offsets = [2, 0], sizes = [1, 128], strides = [1, 1]} : vector<16x128xf32> to vector<1x128xf32>
    %c2 = arith.constant 2 : index
    %c0_17 = arith.constant 0 : index
    %c0_18 = arith.constant 0 : index
    %44 = vector.load %arg4[%c2, %c0_17, %c0_18] : memref<16x16x128xf32, #tpu.memory_space<vmem>>, vector<1x16x128xf32>
    %45 = vector.shape_cast %44 : vector<1x16x128xf32> to vector<16x128xf32>
    %c2_19 = arith.constant 2 : index
    %c0_20 = arith.constant 0 : index
    %c0_21 = arith.constant 0 : index
    %46 = vector.load %arg5[%c2_19, %c0_20, %c0_21] : memref<16x16x128xf32, #tpu.memory_space<vmem>>, vector<1x16x128xf32>
    %47 = vector.shape_cast %46 : vector<1x16x128xf32> to vector<16x128xf32>
    %48 = vector.broadcast %42 : vector<1x128xf32> to vector<16x128xf32>
    %49 = arith.mulf %48, %45 : vector<16x128xf32>
    %50 = arith.addf %35, %49 : vector<16x128xf32>
    %51 = vector.broadcast %43 : vector<1x128xf32> to vector<16x128xf32>
    %52 = arith.mulf %51, %47 : vector<16x128xf32>
    %53 = arith.subf %50, %52 : vector<16x128xf32>
    %54 = vector.broadcast %42 : vector<1x128xf32> to vector<16x128xf32>
    %55 = arith.mulf %54, %47 : vector<16x128xf32>
    %56 = arith.addf %41, %55 : vector<16x128xf32>
    %57 = vector.broadcast %43 : vector<1x128xf32> to vector<16x128xf32>
    %58 = arith.mulf %57, %45 : vector<16x128xf32>
    %59 = arith.addf %56, %58 : vector<16x128xf32>
    %60 = vector.extract_strided_slice %1 {offsets = [3, 0], sizes = [1, 128], strides = [1, 1]} : vector<16x128xf32> to vector<1x128xf32>
    %61 = vector.extract_strided_slice %3 {offsets = [3, 0], sizes = [1, 128], strides = [1, 1]} : vector<16x128xf32> to vector<1x128xf32>
    %c3 = arith.constant 3 : index
    %c0_22 = arith.constant 0 : index
    %c0_23 = arith.constant 0 : index
    %62 = vector.load %arg4[%c3, %c0_22, %c0_23] : memref<16x16x128xf32, #tpu.memory_space<vmem>>, vector<1x16x128xf32>
    %63 = vector.shape_cast %62 : vector<1x16x128xf32> to vector<16x128xf32>
    %c3_24 = arith.constant 3 : index
    %c0_25 = arith.constant 0 : index
    %c0_26 = arith.constant 0 : index
    %64 = vector.load %arg5[%c3_24, %c0_25, %c0_26] : memref<16x16x128xf32, #tpu.memory_space<vmem>>, vector<1x16x128xf32>
    %65 = vector.shape_cast %64 : vector<1x16x128xf32> to vector<16x128xf32>
    %66 = vector.broadcast %60 : vector<1x128xf32> to vector<16x128xf32>
    %67 = arith.mulf %66, %63 : vector<16x128xf32>
    %68 = arith.addf %53, %67 : vector<16x128xf32>
    %69 = vector.broadcast %61 : vector<1x128xf32> to vector<16x128xf32>
    %70 = arith.mulf %69, %65 : vector<16x128xf32>
    %71 = arith.subf %68, %70 : vector<16x128xf32>
    %72 = vector.broadcast %60 : vector<1x128xf32> to vector<16x128xf32>
    %73 = arith.mulf %72, %65 : vector<16x128xf32>
    %74 = arith.addf %59, %73 : vector<16x128xf32>
    %75 = vector.broadcast %61 : vector<1x128xf32> to vector<16x128xf32>
    %76 = arith.mulf %75, %63 : vector<16x128xf32>
    %77 = arith.addf %74, %76 : vector<16x128xf32>
    %78 = vector.extract_strided_slice %1 {offsets = [4, 0], sizes = [1, 128], strides = [1, 1]} : vector<16x128xf32> to vector<1x128xf32>
    %79 = vector.extract_strided_slice %3 {offsets = [4, 0], sizes = [1, 128], strides = [1, 1]} : vector<16x128xf32> to vector<1x128xf32>
    %c4 = arith.constant 4 : index
    %c0_27 = arith.constant 0 : index
    %c0_28 = arith.constant 0 : index
    %80 = vector.load %arg4[%c4, %c0_27, %c0_28] : memref<16x16x128xf32, #tpu.memory_space<vmem>>, vector<1x16x128xf32>
    %81 = vector.shape_cast %80 : vector<1x16x128xf32> to vector<16x128xf32>
    %c4_29 = arith.constant 4 : index
    %c0_30 = arith.constant 0 : index
    %c0_31 = arith.constant 0 : index
    %82 = vector.load %arg5[%c4_29, %c0_30, %c0_31] : memref<16x16x128xf32, #tpu.memory_space<vmem>>, vector<1x16x128xf32>
    %83 = vector.shape_cast %82 : vector<1x16x128xf32> to vector<16x128xf32>
    %84 = vector.broadcast %78 : vector<1x128xf32> to vector<16x128xf32>
    %85 = arith.mulf %84, %81 : vector<16x128xf32>
    %86 = arith.addf %71, %85 : vector<16x128xf32>
    %87 = vector.broadcast %79 : vector<1x128xf32> to vector<16x128xf32>
    %88 = arith.mulf %87, %83 : vector<16x128xf32>
    %89 = arith.subf %86, %88 : vector<16x128xf32>
    %90 = vector.broadcast %78 : vector<1x128xf32> to vector<16x128xf32>
    %91 = arith.mulf %90, %83 : vector<16x128xf32>
    %92 = arith.addf %77, %91 : vector<16x128xf32>
    %93 = vector.broadcast %79 : vector<1x128xf32> to vector<16x128xf32>
    %94 = arith.mulf %93, %81 : vector<16x128xf32>
    %95 = arith.addf %92, %94 : vector<16x128xf32>
    %96 = vector.extract_strided_slice %1 {offsets = [5, 0], sizes = [1, 128], strides = [1, 1]} : vector<16x128xf32> to vector<1x128xf32>
    %97 = vector.extract_strided_slice %3 {offsets = [5, 0], sizes = [1, 128], strides = [1, 1]} : vector<16x128xf32> to vector<1x128xf32>
    %c5 = arith.constant 5 : index
    %c0_32 = arith.constant 0 : index
    %c0_33 = arith.constant 0 : index
    %98 = vector.load %arg4[%c5, %c0_32, %c0_33] : memref<16x16x128xf32, #tpu.memory_space<vmem>>, vector<1x16x128xf32>
    %99 = vector.shape_cast %98 : vector<1x16x128xf32> to vector<16x128xf32>
    %c5_34 = arith.constant 5 : index
    %c0_35 = arith.constant 0 : index
    %c0_36 = arith.constant 0 : index
    %100 = vector.load %arg5[%c5_34, %c0_35, %c0_36] : memref<16x16x128xf32, #tpu.memory_space<vmem>>, vector<1x16x128xf32>
    %101 = vector.shape_cast %100 : vector<1x16x128xf32> to vector<16x128xf32>
    %102 = vector.broadcast %96 : vector<1x128xf32> to vector<16x128xf32>
    %103 = arith.mulf %102, %99 : vector<16x128xf32>
    %104 = arith.addf %89, %103 : vector<16x128xf32>
    %105 = vector.broadcast %97 : vector<1x128xf32> to vector<16x128xf32>
    %106 = arith.mulf %105, %101 : vector<16x128xf32>
    %107 = arith.subf %104, %106 : vector<16x128xf32>
    %108 = vector.broadcast %96 : vector<1x128xf32> to vector<16x128xf32>
    %109 = arith.mulf %108, %101 : vector<16x128xf32>
    %110 = arith.addf %95, %109 : vector<16x128xf32>
    %111 = vector.broadcast %97 : vector<1x128xf32> to vector<16x128xf32>
    %112 = arith.mulf %111, %99 : vector<16x128xf32>
    %113 = arith.addf %110, %112 : vector<16x128xf32>
    %114 = vector.extract_strided_slice %1 {offsets = [6, 0], sizes = [1, 128], strides = [1, 1]} : vector<16x128xf32> to vector<1x128xf32>
    %115 = vector.extract_strided_slice %3 {offsets = [6, 0], sizes = [1, 128], strides = [1, 1]} : vector<16x128xf32> to vector<1x128xf32>
    %c6 = arith.constant 6 : index
    %c0_37 = arith.constant 0 : index
    %c0_38 = arith.constant 0 : index
    %116 = vector.load %arg4[%c6, %c0_37, %c0_38] : memref<16x16x128xf32, #tpu.memory_space<vmem>>, vector<1x16x128xf32>
    %117 = vector.shape_cast %116 : vector<1x16x128xf32> to vector<16x128xf32>
    %c6_39 = arith.constant 6 : index
    %c0_40 = arith.constant 0 : index
    %c0_41 = arith.constant 0 : index
    %118 = vector.load %arg5[%c6_39, %c0_40, %c0_41] : memref<16x16x128xf32, #tpu.memory_space<vmem>>, vector<1x16x128xf32>
    %119 = vector.shape_cast %118 : vector<1x16x128xf32> to vector<16x128xf32>
    %120 = vector.broadcast %114 : vector<1x128xf32> to vector<16x128xf32>
    %121 = arith.mulf %120, %117 : vector<16x128xf32>
    %122 = arith.addf %107, %121 : vector<16x128xf32>
    %123 = vector.broadcast %115 : vector<1x128xf32> to vector<16x128xf32>
    %124 = arith.mulf %123, %119 : vector<16x128xf32>
    %125 = arith.subf %122, %124 : vector<16x128xf32>
    %126 = vector.broadcast %114 : vector<1x128xf32> to vector<16x128xf32>
    %127 = arith.mulf %126, %119 : vector<16x128xf32>
    %128 = arith.addf %113, %127 : vector<16x128xf32>
    %129 = vector.broadcast %115 : vector<1x128xf32> to vector<16x128xf32>
    %130 = arith.mulf %129, %117 : vector<16x128xf32>
    %131 = arith.addf %128, %130 : vector<16x128xf32>
    %132 = vector.extract_strided_slice %1 {offsets = [7, 0], sizes = [1, 128], strides = [1, 1]} : vector<16x128xf32> to vector<1x128xf32>
    %133 = vector.extract_strided_slice %3 {offsets = [7, 0], sizes = [1, 128], strides = [1, 1]} : vector<16x128xf32> to vector<1x128xf32>
    %c7 = arith.constant 7 : index
    %c0_42 = arith.constant 0 : index
    %c0_43 = arith.constant 0 : index
    %134 = vector.load %arg4[%c7, %c0_42, %c0_43] : memref<16x16x128xf32, #tpu.memory_space<vmem>>, vector<1x16x128xf32>
    %135 = vector.shape_cast %134 : vector<1x16x128xf32> to vector<16x128xf32>
    %c7_44 = arith.constant 7 : index
    %c0_45 = arith.constant 0 : index
    %c0_46 = arith.constant 0 : index
    %136 = vector.load %arg5[%c7_44, %c0_45, %c0_46] : memref<16x16x128xf32, #tpu.memory_space<vmem>>, vector<1x16x128xf32>
    %137 = vector.shape_cast %136 : vector<1x16x128xf32> to vector<16x128xf32>
    %138 = vector.broadcast %132 : vector<1x128xf32> to vector<16x128xf32>
    %139 = arith.mulf %138, %135 : vector<16x128xf32>
    %140 = arith.addf %125, %139 : vector<16x128xf32>
    %141 = vector.broadcast %133 : vector<1x128xf32> to vector<16x128xf32>
    %142 = arith.mulf %141, %137 : vector<16x128xf32>
    %143 = arith.subf %140, %142 : vector<16x128xf32>
    %144 = vector.broadcast %132 : vector<1x128xf32> to vector<16x128xf32>
    %145 = arith.mulf %144, %137 : vector<16x128xf32>
    %146 = arith.addf %131, %145 : vector<16x128xf32>
    %147 = vector.broadcast %133 : vector<1x128xf32> to vector<16x128xf32>
    %148 = arith.mulf %147, %135 : vector<16x128xf32>
    %149 = arith.addf %146, %148 : vector<16x128xf32>
    %150 = vector.extract_strided_slice %1 {offsets = [8, 0], sizes = [1, 128], strides = [1, 1]} : vector<16x128xf32> to vector<1x128xf32>
    %151 = vector.extract_strided_slice %3 {offsets = [8, 0], sizes = [1, 128], strides = [1, 1]} : vector<16x128xf32> to vector<1x128xf32>
    %c8 = arith.constant 8 : index
    %c0_47 = arith.constant 0 : index
    %c0_48 = arith.constant 0 : index
    %152 = vector.load %arg4[%c8, %c0_47, %c0_48] : memref<16x16x128xf32, #tpu.memory_space<vmem>>, vector<1x16x128xf32>
    %153 = vector.shape_cast %152 : vector<1x16x128xf32> to vector<16x128xf32>
    %c8_49 = arith.constant 8 : index
    %c0_50 = arith.constant 0 : index
    %c0_51 = arith.constant 0 : index
    %154 = vector.load %arg5[%c8_49, %c0_50, %c0_51] : memref<16x16x128xf32, #tpu.memory_space<vmem>>, vector<1x16x128xf32>
    %155 = vector.shape_cast %154 : vector<1x16x128xf32> to vector<16x128xf32>
    %156 = vector.broadcast %150 : vector<1x128xf32> to vector<16x128xf32>
    %157 = arith.mulf %156, %153 : vector<16x128xf32>
    %158 = arith.addf %143, %157 : vector<16x128xf32>
    %159 = vector.broadcast %151 : vector<1x128xf32> to vector<16x128xf32>
    %160 = arith.mulf %159, %155 : vector<16x128xf32>
    %161 = arith.subf %158, %160 : vector<16x128xf32>
    %162 = vector.broadcast %150 : vector<1x128xf32> to vector<16x128xf32>
    %163 = arith.mulf %162, %155 : vector<16x128xf32>
    %164 = arith.addf %149, %163 : vector<16x128xf32>
    %165 = vector.broadcast %151 : vector<1x128xf32> to vector<16x128xf32>
    %166 = arith.mulf %165, %153 : vector<16x128xf32>
    %167 = arith.addf %164, %166 : vector<16x128xf32>
    %168 = vector.extract_strided_slice %1 {offsets = [9, 0], sizes = [1, 128], strides = [1, 1]} : vector<16x128xf32> to vector<1x128xf32>
    %169 = vector.extract_strided_slice %3 {offsets = [9, 0], sizes = [1, 128], strides = [1, 1]} : vector<16x128xf32> to vector<1x128xf32>
    %c9 = arith.constant 9 : index
    %c0_52 = arith.constant 0 : index
    %c0_53 = arith.constant 0 : index
    %170 = vector.load %arg4[%c9, %c0_52, %c0_53] : memref<16x16x128xf32, #tpu.memory_space<vmem>>, vector<1x16x128xf32>
    %171 = vector.shape_cast %170 : vector<1x16x128xf32> to vector<16x128xf32>
    %c9_54 = arith.constant 9 : index
    %c0_55 = arith.constant 0 : index
    %c0_56 = arith.constant 0 : index
    %172 = vector.load %arg5[%c9_54, %c0_55, %c0_56] : memref<16x16x128xf32, #tpu.memory_space<vmem>>, vector<1x16x128xf32>
    %173 = vector.shape_cast %172 : vector<1x16x128xf32> to vector<16x128xf32>
    %174 = vector.broadcast %168 : vector<1x128xf32> to vector<16x128xf32>
    %175 = arith.mulf %174, %171 : vector<16x128xf32>
    %176 = arith.addf %161, %175 : vector<16x128xf32>
    %177 = vector.broadcast %169 : vector<1x128xf32> to vector<16x128xf32>
    %178 = arith.mulf %177, %173 : vector<16x128xf32>
    %179 = arith.subf %176, %178 : vector<16x128xf32>
    %180 = vector.broadcast %168 : vector<1x128xf32> to vector<16x128xf32>
    %181 = arith.mulf %180, %173 : vector<16x128xf32>
    %182 = arith.addf %167, %181 : vector<16x128xf32>
    %183 = vector.broadcast %169 : vector<1x128xf32> to vector<16x128xf32>
    %184 = arith.mulf %183, %171 : vector<16x128xf32>
    %185 = arith.addf %182, %184 : vector<16x128xf32>
    %186 = vector.extract_strided_slice %1 {offsets = [10, 0], sizes = [1, 128], strides = [1, 1]} : vector<16x128xf32> to vector<1x128xf32>
    %187 = vector.extract_strided_slice %3 {offsets = [10, 0], sizes = [1, 128], strides = [1, 1]} : vector<16x128xf32> to vector<1x128xf32>
    %c10 = arith.constant 10 : index
    %c0_57 = arith.constant 0 : index
    %c0_58 = arith.constant 0 : index
    %188 = vector.load %arg4[%c10, %c0_57, %c0_58] : memref<16x16x128xf32, #tpu.memory_space<vmem>>, vector<1x16x128xf32>
    %189 = vector.shape_cast %188 : vector<1x16x128xf32> to vector<16x128xf32>
    %c10_59 = arith.constant 10 : index
    %c0_60 = arith.constant 0 : index
    %c0_61 = arith.constant 0 : index
    %190 = vector.load %arg5[%c10_59, %c0_60, %c0_61] : memref<16x16x128xf32, #tpu.memory_space<vmem>>, vector<1x16x128xf32>
    %191 = vector.shape_cast %190 : vector<1x16x128xf32> to vector<16x128xf32>
    %192 = vector.broadcast %186 : vector<1x128xf32> to vector<16x128xf32>
    %193 = arith.mulf %192, %189 : vector<16x128xf32>
    %194 = arith.addf %179, %193 : vector<16x128xf32>
    %195 = vector.broadcast %187 : vector<1x128xf32> to vector<16x128xf32>
    %196 = arith.mulf %195, %191 : vector<16x128xf32>
    %197 = arith.subf %194, %196 : vector<16x128xf32>
    %198 = vector.broadcast %186 : vector<1x128xf32> to vector<16x128xf32>
    %199 = arith.mulf %198, %191 : vector<16x128xf32>
    %200 = arith.addf %185, %199 : vector<16x128xf32>
    %201 = vector.broadcast %187 : vector<1x128xf32> to vector<16x128xf32>
    %202 = arith.mulf %201, %189 : vector<16x128xf32>
    %203 = arith.addf %200, %202 : vector<16x128xf32>
    %204 = vector.extract_strided_slice %1 {offsets = [11, 0], sizes = [1, 128], strides = [1, 1]} : vector<16x128xf32> to vector<1x128xf32>
    %205 = vector.extract_strided_slice %3 {offsets = [11, 0], sizes = [1, 128], strides = [1, 1]} : vector<16x128xf32> to vector<1x128xf32>
    %c11 = arith.constant 11 : index
    %c0_62 = arith.constant 0 : index
    %c0_63 = arith.constant 0 : index
    %206 = vector.load %arg4[%c11, %c0_62, %c0_63] : memref<16x16x128xf32, #tpu.memory_space<vmem>>, vector<1x16x128xf32>
    %207 = vector.shape_cast %206 : vector<1x16x128xf32> to vector<16x128xf32>
    %c11_64 = arith.constant 11 : index
    %c0_65 = arith.constant 0 : index
    %c0_66 = arith.constant 0 : index
    %208 = vector.load %arg5[%c11_64, %c0_65, %c0_66] : memref<16x16x128xf32, #tpu.memory_space<vmem>>, vector<1x16x128xf32>
    %209 = vector.shape_cast %208 : vector<1x16x128xf32> to vector<16x128xf32>
    %210 = vector.broadcast %204 : vector<1x128xf32> to vector<16x128xf32>
    %211 = arith.mulf %210, %207 : vector<16x128xf32>
    %212 = arith.addf %197, %211 : vector<16x128xf32>
    %213 = vector.broadcast %205 : vector<1x128xf32> to vector<16x128xf32>
    %214 = arith.mulf %213, %209 : vector<16x128xf32>
    %215 = arith.subf %212, %214 : vector<16x128xf32>
    %216 = vector.broadcast %204 : vector<1x128xf32> to vector<16x128xf32>
    %217 = arith.mulf %216, %209 : vector<16x128xf32>
    %218 = arith.addf %203, %217 : vector<16x128xf32>
    %219 = vector.broadcast %205 : vector<1x128xf32> to vector<16x128xf32>
    %220 = arith.mulf %219, %207 : vector<16x128xf32>
    %221 = arith.addf %218, %220 : vector<16x128xf32>
    %222 = vector.extract_strided_slice %1 {offsets = [12, 0], sizes = [1, 128], strides = [1, 1]} : vector<16x128xf32> to vector<1x128xf32>
    %223 = vector.extract_strided_slice %3 {offsets = [12, 0], sizes = [1, 128], strides = [1, 1]} : vector<16x128xf32> to vector<1x128xf32>
    %c12 = arith.constant 12 : index
    %c0_67 = arith.constant 0 : index
    %c0_68 = arith.constant 0 : index
    %224 = vector.load %arg4[%c12, %c0_67, %c0_68] : memref<16x16x128xf32, #tpu.memory_space<vmem>>, vector<1x16x128xf32>
    %225 = vector.shape_cast %224 : vector<1x16x128xf32> to vector<16x128xf32>
    %c12_69 = arith.constant 12 : index
    %c0_70 = arith.constant 0 : index
    %c0_71 = arith.constant 0 : index
    %226 = vector.load %arg5[%c12_69, %c0_70, %c0_71] : memref<16x16x128xf32, #tpu.memory_space<vmem>>, vector<1x16x128xf32>
    %227 = vector.shape_cast %226 : vector<1x16x128xf32> to vector<16x128xf32>
    %228 = vector.broadcast %222 : vector<1x128xf32> to vector<16x128xf32>
    %229 = arith.mulf %228, %225 : vector<16x128xf32>
    %230 = arith.addf %215, %229 : vector<16x128xf32>
    %231 = vector.broadcast %223 : vector<1x128xf32> to vector<16x128xf32>
    %232 = arith.mulf %231, %227 : vector<16x128xf32>
    %233 = arith.subf %230, %232 : vector<16x128xf32>
    %234 = vector.broadcast %222 : vector<1x128xf32> to vector<16x128xf32>
    %235 = arith.mulf %234, %227 : vector<16x128xf32>
    %236 = arith.addf %221, %235 : vector<16x128xf32>
    %237 = vector.broadcast %223 : vector<1x128xf32> to vector<16x128xf32>
    %238 = arith.mulf %237, %225 : vector<16x128xf32>
    %239 = arith.addf %236, %238 : vector<16x128xf32>
    %240 = vector.extract_strided_slice %1 {offsets = [13, 0], sizes = [1, 128], strides = [1, 1]} : vector<16x128xf32> to vector<1x128xf32>
    %241 = vector.extract_strided_slice %3 {offsets = [13, 0], sizes = [1, 128], strides = [1, 1]} : vector<16x128xf32> to vector<1x128xf32>
    %c13 = arith.constant 13 : index
    %c0_72 = arith.constant 0 : index
    %c0_73 = arith.constant 0 : index
    %242 = vector.load %arg4[%c13, %c0_72, %c0_73] : memref<16x16x128xf32, #tpu.memory_space<vmem>>, vector<1x16x128xf32>
    %243 = vector.shape_cast %242 : vector<1x16x128xf32> to vector<16x128xf32>
    %c13_74 = arith.constant 13 : index
    %c0_75 = arith.constant 0 : index
    %c0_76 = arith.constant 0 : index
    %244 = vector.load %arg5[%c13_74, %c0_75, %c0_76] : memref<16x16x128xf32, #tpu.memory_space<vmem>>, vector<1x16x128xf32>
    %245 = vector.shape_cast %244 : vector<1x16x128xf32> to vector<16x128xf32>
    %246 = vector.broadcast %240 : vector<1x128xf32> to vector<16x128xf32>
    %247 = arith.mulf %246, %243 : vector<16x128xf32>
    %248 = arith.addf %233, %247 : vector<16x128xf32>
    %249 = vector.broadcast %241 : vector<1x128xf32> to vector<16x128xf32>
    %250 = arith.mulf %249, %245 : vector<16x128xf32>
    %251 = arith.subf %248, %250 : vector<16x128xf32>
    %252 = vector.broadcast %240 : vector<1x128xf32> to vector<16x128xf32>
    %253 = arith.mulf %252, %245 : vector<16x128xf32>
    %254 = arith.addf %239, %253 : vector<16x128xf32>
    %255 = vector.broadcast %241 : vector<1x128xf32> to vector<16x128xf32>
    %256 = arith.mulf %255, %243 : vector<16x128xf32>
    %257 = arith.addf %254, %256 : vector<16x128xf32>
    %258 = vector.extract_strided_slice %1 {offsets = [14, 0], sizes = [1, 128], strides = [1, 1]} : vector<16x128xf32> to vector<1x128xf32>
    %259 = vector.extract_strided_slice %3 {offsets = [14, 0], sizes = [1, 128], strides = [1, 1]} : vector<16x128xf32> to vector<1x128xf32>
    %c14 = arith.constant 14 : index
    %c0_77 = arith.constant 0 : index
    %c0_78 = arith.constant 0 : index
    %260 = vector.load %arg4[%c14, %c0_77, %c0_78] : memref<16x16x128xf32, #tpu.memory_space<vmem>>, vector<1x16x128xf32>
    %261 = vector.shape_cast %260 : vector<1x16x128xf32> to vector<16x128xf32>
    %c14_79 = arith.constant 14 : index
    %c0_80 = arith.constant 0 : index
    %c0_81 = arith.constant 0 : index
    %262 = vector.load %arg5[%c14_79, %c0_80, %c0_81] : memref<16x16x128xf32, #tpu.memory_space<vmem>>, vector<1x16x128xf32>
    %263 = vector.shape_cast %262 : vector<1x16x128xf32> to vector<16x128xf32>
    %264 = vector.broadcast %258 : vector<1x128xf32> to vector<16x128xf32>
    %265 = arith.mulf %264, %261 : vector<16x128xf32>
    %266 = arith.addf %251, %265 : vector<16x128xf32>
    %267 = vector.broadcast %259 : vector<1x128xf32> to vector<16x128xf32>
    %268 = arith.mulf %267, %263 : vector<16x128xf32>
    %269 = arith.subf %266, %268 : vector<16x128xf32>
    %270 = vector.broadcast %258 : vector<1x128xf32> to vector<16x128xf32>
    %271 = arith.mulf %270, %263 : vector<16x128xf32>
    %272 = arith.addf %257, %271 : vector<16x128xf32>
    %273 = vector.broadcast %259 : vector<1x128xf32> to vector<16x128xf32>
    %274 = arith.mulf %273, %261 : vector<16x128xf32>
    %275 = arith.addf %272, %274 : vector<16x128xf32>
    %276 = vector.extract_strided_slice %1 {offsets = [15, 0], sizes = [1, 128], strides = [1, 1]} : vector<16x128xf32> to vector<1x128xf32>
    %277 = vector.extract_strided_slice %3 {offsets = [15, 0], sizes = [1, 128], strides = [1, 1]} : vector<16x128xf32> to vector<1x128xf32>
    %c15 = arith.constant 15 : index
    %c0_82 = arith.constant 0 : index
    %c0_83 = arith.constant 0 : index
    %278 = vector.load %arg4[%c15, %c0_82, %c0_83] : memref<16x16x128xf32, #tpu.memory_space<vmem>>, vector<1x16x128xf32>
    %279 = vector.shape_cast %278 : vector<1x16x128xf32> to vector<16x128xf32>
    %c15_84 = arith.constant 15 : index
    %c0_85 = arith.constant 0 : index
    %c0_86 = arith.constant 0 : index
    %280 = vector.load %arg5[%c15_84, %c0_85, %c0_86] : memref<16x16x128xf32, #tpu.memory_space<vmem>>, vector<1x16x128xf32>
    %281 = vector.shape_cast %280 : vector<1x16x128xf32> to vector<16x128xf32>
    %282 = vector.broadcast %276 : vector<1x128xf32> to vector<16x128xf32>
    %283 = arith.mulf %282, %279 : vector<16x128xf32>
    %284 = arith.addf %269, %283 : vector<16x128xf32>
    %285 = vector.broadcast %277 : vector<1x128xf32> to vector<16x128xf32>
    %286 = arith.mulf %285, %281 : vector<16x128xf32>
    %287 = arith.subf %284, %286 : vector<16x128xf32>
    %288 = vector.broadcast %276 : vector<1x128xf32> to vector<16x128xf32>
    %289 = arith.mulf %288, %281 : vector<16x128xf32>
    %290 = arith.addf %275, %289 : vector<16x128xf32>
    %291 = vector.broadcast %277 : vector<1x128xf32> to vector<16x128xf32>
    %292 = arith.mulf %291, %279 : vector<16x128xf32>
    %293 = arith.addf %290, %292 : vector<16x128xf32>
    %c0_87 = arith.constant 0 : index
    %c0_88 = arith.constant 0 : index
    %c0_89 = arith.constant 0 : index
    %294 = vector.load %arg6[%c0_87, %c0_88, %c0_89] : memref<1x16x128xf32, #tpu.memory_space<vmem>>, vector<1x16x128xf32>
    %295 = vector.shape_cast %294 : vector<1x16x128xf32> to vector<16x128xf32>
    %296 = vector.shape_cast %287 : vector<16x128xf32> to vector<1x16x128xf32>
    tpu.vector_store %arg6[%c0_87, %c0_88, %c0_89], %296 {strides = array<i32>} : memref<1x16x128xf32, #tpu.memory_space<vmem>>, vector<1x16x128xf32>,
    %c0_90 = arith.constant 0 : index
    %c0_91 = arith.constant 0 : index
    %c0_92 = arith.constant 0 : index
    %297 = vector.load %arg7[%c0_90, %c0_91, %c0_92] : memref<1x16x128xf32, #tpu.memory_space<vmem>>, vector<1x16x128xf32>
    %298 = vector.shape_cast %297 : vector<1x16x128xf32> to vector<16x128xf32>
    %299 = vector.shape_cast %293 : vector<16x128xf32> to vector<1x16x128xf32>
    tpu.vector_store %arg7[%c0_90, %c0_91, %c0_92], %299 {strides = array<i32>} : memref<1x16x128xf32, #tpu.memory_space<vmem>>, vector<1x16x128xf32>,
    return
  }
  func.func @transform_0(%arg0: i32, %arg1: i32) -> (i32, i32, i32) {
    %c0_i32 = arith.constant 0 : i32
    %c0_i32_0 = arith.constant 0 : i32
    return %arg0, %c0_i32, %arg1 : i32, i32, i32
  }
  func.func @transform_1(%arg0: i32, %arg1: i32) -> (i32, i32, i32) {
    %c0_i32 = arith.constant 0 : i32
    %c0_i32_0 = arith.constant 0 : i32
    return %arg0, %c0_i32, %arg1 : i32, i32, i32
  }
  func.func @transform_2(%arg0: i32, %arg1: i32) -> (i32, i32, i32) {
    %c0_i32 = arith.constant 0 : i32
    %c0_i32_0 = arith.constant 0 : i32
    %c0_i32_1 = arith.constant 0 : i32
    return %c0_i32, %c0_i32_0, %arg1 : i32, i32, i32
  }
  func.func @transform_3(%arg0: i32, %arg1: i32) -> (i32, i32, i32) {
    %c0_i32 = arith.constant 0 : i32
    %c0_i32_0 = arith.constant 0 : i32
    %c0_i32_1 = arith.constant 0 : i32
    return %c0_i32, %c0_i32_0, %arg1 : i32, i32, i32
  }
  func.func @transform_4(%arg0: i32, %arg1: i32) -> (i32, i32, i32) {
    %c0_i32 = arith.constant 0 : i32
    %c0_i32_0 = arith.constant 0 : i32
    return %arg0, %c0_i32, %arg1 : i32, i32, i32
  }
  func.func @transform_5(%arg0: i32, %arg1: i32) -> (i32, i32, i32) {
    %c0_i32 = arith.constant 0 : i32
    %c0_i32_0 = arith.constant 0 : i32
    return %arg0, %c0_i32, %arg1 : i32, i32, i32
  }
}

module attributes {stable_mosaic.version = 11 : i64} {
  func.func @kernel(%arg0: i32, %arg1: i32, %arg2: memref<1x16x256xbf16, #tpu.memory_space<vmem>>, %arg3: memref<16x16xbf16, #tpu.memory_space<vmem>>, %arg4: memref<16x1xf32, #tpu.memory_space<vmem>>, %arg5: memref<16x1xf32, #tpu.memory_space<vmem>>, %arg6: memref<16x1xf32, #tpu.memory_space<vmem>>, %arg7: memref<1x16x256xf32, #tpu.memory_space<vmem>>, %arg8: memref<1x16x256xbf16, #tpu.memory_space<vmem>>) attributes {dimension_semantics = [#tpu.dimension_semantics<parallel>, #tpu.dimension_semantics<parallel>], iteration_bounds = array<i64: 2, 1>, scalar_prefetch = 0 : i64, scratch_operands = 0 : i64, tpu.core_type = #tpu.core_type<tc>, window_params = [{transform_indices = @transform_0, window_bounds = array<i64: 1, 16, 256>}, {pipeline_mode = #tpu.pipeline_mode<synchronous>, transform_indices = @transform_1, window_bounds = array<i64: 16, 16>}, {pipeline_mode = #tpu.pipeline_mode<synchronous>, transform_indices = @transform_2, window_bounds = array<i64: 16, 1>}, {pipeline_mode = #tpu.pipeline_mode<synchronous>, transform_indices = @transform_3, window_bounds = array<i64: 16, 1>}, {pipeline_mode = #tpu.pipeline_mode<synchronous>, transform_indices = @transform_4, window_bounds = array<i64: 16, 1>}, {transform_indices = @transform_5, window_bounds = array<i64: 1, 16, 256>}, {transform_indices = @transform_6, window_bounds = array<i64: 1, 16, 256>}]} {
    %c0 = arith.constant 0 : index
    %c0_0 = arith.constant 0 : index
    %c0_1 = arith.constant 0 : index
    %0 = vector.load %arg2[%c0, %c0_0, %c0_1] : memref<1x16x256xbf16, #tpu.memory_space<vmem>>, vector<1x16x256xbf16>
    %1 = vector.shape_cast %0 : vector<1x16x256xbf16> to vector<16x256xbf16>
    %c0_2 = arith.constant 0 : index
    %c0_3 = arith.constant 0 : index
    %2 = vector.load %arg3[%c0_2, %c0_3] : memref<16x16xbf16, #tpu.memory_space<vmem>>, vector<16x16xbf16>
    %cst = arith.constant dense<0.000000e+00> : vector<16x256xf32>
    %3 = tpu.matmul %2, %1, %cst {dimension_numbers = #tpu.dot_dimension_numbers<[1], [0], [0], [1], [0, 0, 1, 1], [], []>} : vector<16x16xbf16>, vector<16x256xbf16>, vector<16x256xf32> -> vector<16x256xf32>
    %c0_4 = arith.constant 0 : index
    %c0_5 = arith.constant 0 : index
    %4 = vector.load %arg4[%c0_4, %c0_5] : memref<16x1xf32, #tpu.memory_space<vmem>>, vector<16x1xf32>
    %5 = vector.broadcast %4 : vector<16x1xf32> to vector<16x256xf32>
    %6 = arith.addf %3, %5 : vector<16x256xf32>
    %c0_6 = arith.constant 0 : index
    %c0_7 = arith.constant 0 : index
    %c0_8 = arith.constant 0 : index
    %7 = vector.load %arg7[%c0_6, %c0_7, %c0_8] : memref<1x16x256xf32, #tpu.memory_space<vmem>>, vector<1x16x256xf32>
    %8 = vector.shape_cast %7 : vector<1x16x256xf32> to vector<16x256xf32>
    %9 = arith.addf %6, %8 : vector<16x256xf32>
    %c0_9 = arith.constant 0 : index
    %c0_10 = arith.constant 0 : index
    %10 = vector.load %arg5[%c0_9, %c0_10] : memref<16x1xf32, #tpu.memory_space<vmem>>, vector<16x1xf32>
    %11 = vector.broadcast %10 : vector<16x1xf32> to vector<16x256xf32>
    %12 = arith.mulf %9, %11 : vector<16x256xf32>
    %c0_11 = arith.constant 0 : index
    %c0_12 = arith.constant 0 : index
    %13 = vector.load %arg6[%c0_11, %c0_12] : memref<16x1xf32, #tpu.memory_space<vmem>>, vector<16x1xf32>
    %14 = vector.broadcast %13 : vector<16x1xf32> to vector<16x256xf32>
    %15 = arith.addf %12, %14 : vector<16x256xf32>
    %cst_13 = arith.constant 5.000000e-01 : f32
    %16 = vector.broadcast %cst_13 : f32 to vector<16x256xf32>
    %17 = arith.mulf %16, %15 : vector<16x256xf32>
    %cst_14 = arith.constant 4.471500e-02 : f32
    %18 = vector.broadcast %cst_14 : f32 to vector<16x256xf32>
    %19 = arith.mulf %18, %15 : vector<16x256xf32>
    %20 = arith.mulf %19, %15 : vector<16x256xf32>
    %21 = arith.mulf %20, %15 : vector<16x256xf32>
    %22 = arith.addf %15, %21 : vector<16x256xf32>
    %cst_15 = arith.constant 0.797884583 : f32
    %23 = vector.broadcast %cst_15 : f32 to vector<16x256xf32>
    %24 = arith.mulf %23, %22 : vector<16x256xf32>
    %25 = math.tanh %24 : vector<16x256xf32>
    %cst_16 = arith.constant 1.000000e+00 : f32
    %26 = vector.broadcast %cst_16 : f32 to vector<16x256xf32>
    %27 = arith.addf %26, %25 : vector<16x256xf32>
    %28 = arith.mulf %17, %27 : vector<16x256xf32>
    %29 = arith.truncf %28 : vector<16x256xf32> to vector<16x256xbf16>
    %c0_17 = arith.constant 0 : index
    %c0_18 = arith.constant 0 : index
    %c0_19 = arith.constant 0 : index
    %30 = vector.load %arg8[%c0_17, %c0_18, %c0_19] : memref<1x16x256xbf16, #tpu.memory_space<vmem>>, vector<1x16x256xbf16>
    %31 = vector.shape_cast %30 : vector<1x16x256xbf16> to vector<16x256xbf16>
    %32 = vector.shape_cast %29 : vector<16x256xbf16> to vector<1x16x256xbf16>
    tpu.vector_store %arg8[%c0_17, %c0_18, %c0_19], %32 {strides = array<i32>} : memref<1x16x256xbf16, #tpu.memory_space<vmem>>, vector<1x16x256xbf16>,
    return
  }
  func.func @transform_0(%arg0: i32, %arg1: i32) -> (i32, i32, i32) {
    %c0_i32 = arith.constant 0 : i32
    %c0_i32_0 = arith.constant 0 : i32
    return %arg0, %c0_i32, %arg1 : i32, i32, i32
  }
  func.func @transform_1(%arg0: i32, %arg1: i32) -> (i32, i32) {
    %c0_i32 = arith.constant 0 : i32
    %c0_i32_0 = arith.constant 0 : i32
    %c0_i32_1 = arith.constant 0 : i32
    return %c0_i32, %c0_i32_0 : i32, i32
  }
  func.func @transform_2(%arg0: i32, %arg1: i32) -> (i32, i32) {
    %c0_i32 = arith.constant 0 : i32
    %c0_i32_0 = arith.constant 0 : i32
    %c0_i32_1 = arith.constant 0 : i32
    return %c0_i32, %c0_i32_0 : i32, i32
  }
  func.func @transform_3(%arg0: i32, %arg1: i32) -> (i32, i32) {
    %c0_i32 = arith.constant 0 : i32
    %c0_i32_0 = arith.constant 0 : i32
    %c0_i32_1 = arith.constant 0 : i32
    return %c0_i32, %c0_i32_0 : i32, i32
  }
  func.func @transform_4(%arg0: i32, %arg1: i32) -> (i32, i32) {
    %c0_i32 = arith.constant 0 : i32
    %c0_i32_0 = arith.constant 0 : i32
    %c0_i32_1 = arith.constant 0 : i32
    return %c0_i32, %c0_i32_0 : i32, i32
  }
  func.func @transform_5(%arg0: i32, %arg1: i32) -> (i32, i32, i32) {
    %c0_i32 = arith.constant 0 : i32
    %c0_i32_0 = arith.constant 0 : i32
    return %arg0, %c0_i32, %arg1 : i32, i32, i32
  }
  func.func @transform_6(%arg0: i32, %arg1: i32) -> (i32, i32, i32) {
    %c0_i32 = arith.constant 0 : i32
    %c0_i32_0 = arith.constant 0 : i32
    return %arg0, %c0_i32, %arg1 : i32, i32, i32
  }
}

module attributes {stable_mosaic.version = 11 : i64} {
  func.func @kernel(%arg0: i32, %arg1: i32, %arg2: memref<1x16x256xbf16, #tpu.memory_space<vmem>>, %arg3: memref<128x16xbf16, #tpu.memory_space<vmem>>, %arg4: memref<128x1xf32, #tpu.memory_space<vmem>>, %arg5: memref<1x128x256xbf16, #tpu.memory_space<vmem>>) attributes {dimension_semantics = [#tpu.dimension_semantics<parallel>, #tpu.dimension_semantics<parallel>], iteration_bounds = array<i64: 2, 1>, scalar_prefetch = 0 : i64, scratch_operands = 0 : i64, tpu.core_type = #tpu.core_type<tc>, window_params = [{transform_indices = @transform_0, window_bounds = array<i64: 1, 16, 256>}, {pipeline_mode = #tpu.pipeline_mode<synchronous>, transform_indices = @transform_1, window_bounds = array<i64: 128, 16>}, {pipeline_mode = #tpu.pipeline_mode<synchronous>, transform_indices = @transform_2, window_bounds = array<i64: 128, 1>}, {transform_indices = @transform_3, window_bounds = array<i64: 1, 128, 256>}]} {
    %c0 = arith.constant 0 : index
    %c0_0 = arith.constant 0 : index
    %c0_1 = arith.constant 0 : index
    %0 = vector.load %arg2[%c0, %c0_0, %c0_1] : memref<1x16x256xbf16, #tpu.memory_space<vmem>>, vector<1x16x256xbf16>
    %1 = vector.shape_cast %0 : vector<1x16x256xbf16> to vector<16x256xbf16>
    %c0_2 = arith.constant 0 : index
    %c0_3 = arith.constant 0 : index
    %2 = vector.load %arg3[%c0_2, %c0_3] : memref<128x16xbf16, #tpu.memory_space<vmem>>, vector<128x16xbf16>
    %cst = arith.constant dense<0.000000e+00> : vector<128x256xf32>
    %3 = tpu.matmul %2, %1, %cst {dimension_numbers = #tpu.dot_dimension_numbers<[1], [0], [0], [1], [0, 0, 1, 1], [], []>} : vector<128x16xbf16>, vector<16x256xbf16>, vector<128x256xf32> -> vector<128x256xf32>
    %c0_4 = arith.constant 0 : index
    %c0_5 = arith.constant 0 : index
    %4 = vector.load %arg4[%c0_4, %c0_5] : memref<128x1xf32, #tpu.memory_space<vmem>>, vector<128x1xf32>
    %5 = vector.broadcast %4 : vector<128x1xf32> to vector<128x256xf32>
    %6 = arith.addf %3, %5 : vector<128x256xf32>
    %cst_6 = arith.constant 5.000000e-01 : f32
    %7 = vector.broadcast %cst_6 : f32 to vector<128x256xf32>
    %8 = arith.mulf %7, %6 : vector<128x256xf32>
    %cst_7 = arith.constant 4.471500e-02 : f32
    %9 = vector.broadcast %cst_7 : f32 to vector<128x256xf32>
    %10 = arith.mulf %9, %6 : vector<128x256xf32>
    %11 = arith.mulf %10, %6 : vector<128x256xf32>
    %12 = arith.mulf %11, %6 : vector<128x256xf32>
    %13 = arith.addf %6, %12 : vector<128x256xf32>
    %cst_8 = arith.constant 0.797884583 : f32
    %14 = vector.broadcast %cst_8 : f32 to vector<128x256xf32>
    %15 = arith.mulf %14, %13 : vector<128x256xf32>
    %16 = math.tanh %15 : vector<128x256xf32>
    %cst_9 = arith.constant 1.000000e+00 : f32
    %17 = vector.broadcast %cst_9 : f32 to vector<128x256xf32>
    %18 = arith.addf %17, %16 : vector<128x256xf32>
    %19 = arith.mulf %8, %18 : vector<128x256xf32>
    %20 = arith.truncf %19 : vector<128x256xf32> to vector<128x256xbf16>
    %c0_10 = arith.constant 0 : index
    %c0_11 = arith.constant 0 : index
    %c0_12 = arith.constant 0 : index
    %21 = vector.load %arg5[%c0_10, %c0_11, %c0_12] : memref<1x128x256xbf16, #tpu.memory_space<vmem>>, vector<1x128x256xbf16>
    %22 = vector.shape_cast %21 : vector<1x128x256xbf16> to vector<128x256xbf16>
    %23 = vector.shape_cast %20 : vector<128x256xbf16> to vector<1x128x256xbf16>
    tpu.vector_store %arg5[%c0_10, %c0_11, %c0_12], %23 {strides = array<i32>} : memref<1x128x256xbf16, #tpu.memory_space<vmem>>, vector<1x128x256xbf16>,
    return
  }
  func.func @transform_0(%arg0: i32, %arg1: i32) -> (i32, i32, i32) {
    %c0_i32 = arith.constant 0 : i32
    %c0_i32_0 = arith.constant 0 : i32
    return %arg0, %c0_i32, %arg1 : i32, i32, i32
  }
  func.func @transform_1(%arg0: i32, %arg1: i32) -> (i32, i32) {
    %c0_i32 = arith.constant 0 : i32
    %c0_i32_0 = arith.constant 0 : i32
    %c0_i32_1 = arith.constant 0 : i32
    return %c0_i32, %c0_i32_0 : i32, i32
  }
  func.func @transform_2(%arg0: i32, %arg1: i32) -> (i32, i32) {
    %c0_i32 = arith.constant 0 : i32
    %c0_i32_0 = arith.constant 0 : i32
    %c0_i32_1 = arith.constant 0 : i32
    return %c0_i32, %c0_i32_0 : i32, i32
  }
  func.func @transform_3(%arg0: i32, %arg1: i32) -> (i32, i32, i32) {
    %c0_i32 = arith.constant 0 : i32
    %c0_i32_0 = arith.constant 0 : i32
    return %arg0, %c0_i32, %arg1 : i32, i32, i32
  }
}

module attributes {stable_mosaic.version = 11 : i64} {
  func.func @kernel(%arg0: i32, %arg1: i32, %arg2: memref<1x128x256xbf16, #tpu.memory_space<vmem>>, %arg3: memref<4x128xbf16, #tpu.memory_space<vmem>>, %arg4: memref<4x1xf32, #tpu.memory_space<vmem>>, %arg5: memref<1x4x256xf32, #tpu.memory_space<vmem>>) attributes {dimension_semantics = [#tpu.dimension_semantics<parallel>, #tpu.dimension_semantics<parallel>], iteration_bounds = array<i64: 2, 1>, scalar_prefetch = 0 : i64, scratch_operands = 0 : i64, tpu.core_type = #tpu.core_type<tc>, window_params = [{transform_indices = @transform_0, window_bounds = array<i64: 1, 128, 256>}, {pipeline_mode = #tpu.pipeline_mode<synchronous>, transform_indices = @transform_1, window_bounds = array<i64: 4, 128>}, {pipeline_mode = #tpu.pipeline_mode<synchronous>, transform_indices = @transform_2, window_bounds = array<i64: 4, 1>}, {transform_indices = @transform_3, window_bounds = array<i64: 1, 4, 256>}]} {
    %c0 = arith.constant 0 : index
    %c0_0 = arith.constant 0 : index
    %c0_1 = arith.constant 0 : index
    %0 = vector.load %arg2[%c0, %c0_0, %c0_1] : memref<1x128x256xbf16, #tpu.memory_space<vmem>>, vector<1x128x256xbf16>
    %1 = vector.shape_cast %0 : vector<1x128x256xbf16> to vector<128x256xbf16>
    %c0_2 = arith.constant 0 : index
    %c0_3 = arith.constant 0 : index
    %2 = vector.load %arg3[%c0_2, %c0_3] : memref<4x128xbf16, #tpu.memory_space<vmem>>, vector<4x128xbf16>
    %cst = arith.constant dense<0.000000e+00> : vector<4x256xf32>
    %3 = tpu.matmul %2, %1, %cst {dimension_numbers = #tpu.dot_dimension_numbers<[1], [0], [0], [1], [0, 0, 1, 1], [], []>} : vector<4x128xbf16>, vector<128x256xbf16>, vector<4x256xf32> -> vector<4x256xf32>
    %c0_4 = arith.constant 0 : index
    %c0_5 = arith.constant 0 : index
    %4 = vector.load %arg4[%c0_4, %c0_5] : memref<4x1xf32, #tpu.memory_space<vmem>>, vector<4x1xf32>
    %5 = vector.broadcast %4 : vector<4x1xf32> to vector<4x256xf32>
    %6 = arith.addf %3, %5 : vector<4x256xf32>
    %c0_6 = arith.constant 0 : index
    %c0_7 = arith.constant 0 : index
    %c0_8 = arith.constant 0 : index
    %7 = vector.load %arg5[%c0_6, %c0_7, %c0_8] : memref<1x4x256xf32, #tpu.memory_space<vmem>>, vector<1x4x256xf32>
    %8 = vector.shape_cast %7 : vector<1x4x256xf32> to vector<4x256xf32>
    %9 = vector.shape_cast %6 : vector<4x256xf32> to vector<1x4x256xf32>
    tpu.vector_store %arg5[%c0_6, %c0_7, %c0_8], %9 {strides = array<i32>} : memref<1x4x256xf32, #tpu.memory_space<vmem>>, vector<1x4x256xf32>,
    return
  }
  func.func @transform_0(%arg0: i32, %arg1: i32) -> (i32, i32, i32) {
    %c0_i32 = arith.constant 0 : i32
    %c0_i32_0 = arith.constant 0 : i32
    return %arg0, %c0_i32, %arg1 : i32, i32, i32
  }
  func.func @transform_1(%arg0: i32, %arg1: i32) -> (i32, i32) {
    %c0_i32 = arith.constant 0 : i32
    %c0_i32_0 = arith.constant 0 : i32
    %c0_i32_1 = arith.constant 0 : i32
    return %c0_i32, %c0_i32_0 : i32, i32
  }
  func.func @transform_2(%arg0: i32, %arg1: i32) -> (i32, i32) {
    %c0_i32 = arith.constant 0 : i32
    %c0_i32_0 = arith.constant 0 : i32
    %c0_i32_1 = arith.constant 0 : i32
    return %c0_i32, %c0_i32_0 : i32, i32
  }
  func.func @transform_3(%arg0: i32, %arg1: i32) -> (i32, i32, i32) {
    %c0_i32 = arith.constant 0 : i32
    %c0_i32_0 = arith.constant 0 : i32
    return %arg0, %c0_i32, %arg1 : i32, i32, i32
  }
}

</mosaic_0001>

<llo_original>
// kernel: fno2d_forward.11
$region0: #{fno2d_forward.11}
  #allocation0 [shape = 'u32[]', space=smem, size = 0x4, offset = 0x4, fixed_abs, tag = 'smem constant byte address 0x4 - core index']
  #allocation1 [shape = 'u32[72,128]{1,0:T(1,128)}', space=vmem, size = 0x9000, scoped, tag = 'internal scratch']
  %s0 = inlined_call_operand.vmem [shape: f32[2,1,256], index: 0, kind: input, shape index: {}]
  %s1 = inlined_call_operand.vmem [shape: bf16[16,1], index: 1, kind: input, shape index: {}]
  %s2 = inlined_call_operand.vmem [shape: f32[16,1], index: 2, kind: input, shape index: {}]
  %s3 = inlined_call_operand.vmem [shape: bf16[2,16,256], index: 3, kind: output, shape index: {}]
  %s4 = sld [smem:[#allocation0]]
  $region45: #{fno2d_forward.11} parent=0
    _
  %s6 = ssub.s32 1, %s4
  %s7 = scalar_select 0, %s6, %s4
  loop: start=0, step=1, limit=4
  $region2: #{fno2d_forward.11} parent=0 // loop_pre_header
    _
  $region3: #{fno2d_forward.11} parent=0 // loop_header
    %s9 = sphi 0, %s13
    %p10 = scmp.ge.s32.totalorder %s9, 4
    %s16 = sphi 0, %s28
    %s17 = sphi 0, %s24
    %s18 = sphi 0, %s16
    %s19 = sphi 0, %s17
    %s20 = sphi 0, %s18
    %s21 = sphi 0, %s19
    %s33 = sphi 0, %s35
    %s36 = sphi 0, %s33
    %s37 = sphi 0, %s36
    %s53 = sphi 0, %s37
    %s57 = sphi 0, %s57
    %s59 = sphi 0, %s57
    %s60 = sphi 0, %s59
    %s74 = sphi 0, %s60
    %s78 = sphi 0, %s78
    %s80 = sphi 0, %s78
    %s81 = sphi 0, %s80
    %s95 = sphi 0, %s81
    %s103 = sphi 0, %s105
    %s106 = sphi 0, %s103
    %s107 = sphi 0, %s106
    %s123 = sphi 0, %s107
  $region4: #{fno2d_forward.11} parent=0 // loop_header_branch
    %12 = sbr.rel (%p10) target = $region8
  $region5: #{fno2d_forward.11} parent=0 // loop_body
    %s14 = ssub.s32 %s9, 1
    %s15 = ssub.s32 %s9, 2
    %s22 = sadd.s32 1, %s17
    %p23 = scmp.ge.s32.totalorder %s22, 1
    %s24 = scalar_select %p23, 0, %s22
    %s25 = sadd.s32 1, %s16
    %s26 = scalar_select %p23, %s25, %s16
    %p27 = scmp.ge.s32.totalorder %s26, 2
    %s28 = scalar_select %p27, 0, %s26
    %s29 = ssub.s32 %s16, %s28
    %s30 = ssub.s32 %s17, %s24
    %s31 = sor.u32 %s29, %s30
    %p32 = scmp.eq.s32.totalorder %s31, 0
    %s34 = sadd.s32 %s33, 1
    %s35 = scalar_select %p32, %s33, %s34
    %p38 = pneg %p32
    %p39 = scmp.eq.s32.totalorder %s9, 1
    %p40 = por %p38, %p39
    %p41 = scmp.ne.s32.totalorder %s33, %s36
    %p42 = scmp.eq.s32.totalorder %s9, 0
    %p43 = por %p41, %p42
    %p44 = scmp.ne.s32.totalorder %s33, %s36
    %p45 = scmp.eq.s32.totalorder %s14, 1
    %p46 = por %p44, %p45
    %p47 = scmp.ne.s32.totalorder %s36, %s37
    %p48 = scmp.eq.s32.totalorder %s14, 0
    %p49 = por %p47, %p48
    %p50 = scmp.ne.s32.totalorder %s36, %s37
    %p51 = scmp.eq.s32.totalorder %s15, 1
    %p52 = por %p50, %p51
    %p54 = scmp.ne.s32.totalorder %s37, %s53
    %p55 = scmp.eq.s32.totalorder %s15, 0
    %p56 = por %p54, %p55
    %s58 = sadd.s32 %s57, 1
    %p61 = scmp.eq.s32.totalorder %s9, 1
    %p62 = scmp.ne.s32.totalorder %s57, %s59
    %p63 = scmp.eq.s32.totalorder %s9, 0
    %p64 = por %p62, %p63
    %p65 = scmp.ne.s32.totalorder %s57, %s59
    %p66 = scmp.eq.s32.totalorder %s14, 1
    %p67 = por %p65, %p66
    %p68 = scmp.ne.s32.totalorder %s59, %s60
    %p69 = scmp.eq.s32.totalorder %s14, 0
    %p70 = por %p68, %p69
    %p71 = scmp.ne.s32.totalorder %s59, %s60
    %p72 = scmp.eq.s32.totalorder %s15, 1
    %p73 = por %p71, %p72
    %p75 = scmp.ne.s32.totalorder %s60, %s74
    %p76 = scmp.eq.s32.totalorder %s15, 0
    %p77 = por %p75, %p76
    %s79 = sadd.s32 %s78, 1
    %p82 = scmp.eq.s32.totalorder %s9, 1
    %p83 = scmp.ne.s32.totalorder %s78, %s80
    %p84 = scmp.eq.s32.totalorder %s9, 0
    %p85 = por %p83, %p84
    %p86 = scmp.ne.s32.totalorder %s78, %s80
    %p87 = scmp.eq.s32.totalorder %s14, 1
    %p88 = por %p86, %p87
    %p89 = scmp.ne.s32.totalorder %s80, %s81
    %p90 = scmp.eq.s32.totalorder %s14, 0
    %p91 = por %p89, %p90
    %p92 = scmp.ne.s32.totalorder %s80, %s81
    %p93 = scmp.eq.s32.totalorder %s15, 1
    %p94 = por %p92, %p93
    %p96 = scmp.ne.s32.totalorder %s81, %s95
    %p97 = scmp.eq.s32.totalorder %s15, 0
    %p98 = por %p96, %p97
    %s99 = ssub.s32 %s16, %s28
    %s100 = ssub.s32 %s17, %s24
    %s101 = sor.u32 %s99, %s100
    %p102 = scmp.eq.s32.totalorder %s101, 0
    %s104 = sadd.s32 %s103, 1
    %s105 = scalar_select %p102, %s103, %s104
    %p108 = pneg %p102
    %p109 = scmp.eq.s32.totalorder %s9, 1
    %p110 = por %p108, %p109
    %p111 = scmp.ne.s32.totalorder %s103, %s106
    %p112 = scmp.eq.s32.totalorder %s9, 0
    %p113 = por %p111, %p112
    %p114 = scmp.ne.s32.totalorder %s103, %s106
    %p115 = scmp.eq.s32.totalorder %s14, 1
    %p116 = por %p114, %p115
    %p117 = scmp.ne.s32.totalorder %s106, %s107
    %p118 = scmp.eq.s32.totalorder %s14, 0
    %p119 = por %p117, %p118
    %p120 = scmp.ne.s32.totalorder %s106, %s107
    %p121 = scmp.eq.s32.totalorder %s15, 1
    %p122 = por %p120, %p121
    %p124 = scmp.ne.s32.totalorder %s107, %s123
    %p125 = scmp.eq.s32.totalorder %s15, 0
    %p126 = por %p124, %p125
    %p127 = scmp.le.s32.totalorder 1, %s9
    %p128 = scmp.lt.s32.totalorder %s9, 3
    %p129 = pnand %p127, %p128
    %p130 = pneg %p129
    // Predicated region
    $region9: #{fno2d_forward.11} parent=5 // pred_check
      _
    $region10: #{fno2d_forward.11} parent=5 // pred_check_branch
      %132 = sbr.rel (%p129) target = $region12
    $region11: #{fno2d_forward.11} parent=5 // pred_region
      %s133 = ssub.s32 %s9, 1
      // Predicated region
      $region13: #{fno2d_forward.11} parent=11 // pred_check
        %p134 = pneg %p70
      $region14: #{fno2d_forward.11} parent=11 // pred_check_branch
        %136 = sbr.rel (%p134) target = $region16
      $region15: #{fno2d_forward.11} parent=11 // pred_region
        _
      $region16: #{fno2d_forward.11} parent=11 // pred_fallthru
        _
      // Predicated region
      $region17: #{fno2d_forward.11} parent=11 // pred_check
        %p137 = pneg %p91
      $region18: #{fno2d_forward.11} parent=11 // pred_check_branch
        %139 = sbr.rel (%p137) target = $region20
      $region19: #{fno2d_forward.11} parent=11 // pred_region
        _
      $region20: #{fno2d_forward.11} parent=11 // pred_fallthru
        _
    $region12: #{fno2d_forward.11} parent=5 // pred_fallthru
      _
    %p140 = scmp.lt.s32.totalorder %s9, 2
    // Predicated region
    $region21: #{fno2d_forward.11} parent=5 // pred_check
      %p141 = pneg %p140
    $region22: #{fno2d_forward.11} parent=5 // pred_check_branch
      %143 = sbr.rel (%p141) target = $region24
    $region23: #{fno2d_forward.11} parent=5 // pred_region
      // Predicated region
      $region25: #{fno2d_forward.11} parent=23 // pred_check
        %p144 = pneg %p43
      $region26: #{fno2d_forward.11} parent=23 // pred_check_branch
        %146 = sbr.rel (%p144) target = $region28
      $region27: #{fno2d_forward.11} parent=23 // pred_region
        %s147 = smul.u32 2, %s17
        %p148 = scmp.lt.s32.totalorder %s16, 1
        %s149 = scalar_select %p148, %s16, 1
        %p150 = scmp.lt.s32.totalorder %s147, 1
        %s151 = scalar_select %p150, %s147, 1
        %s152 = smul.addr %s149, 2
        %s153 = sadd.s32 %s151, %s152
        %s154 = scalar_lea.vmem %s0, %s153
        %s155 = smul.u32 2, %s17
      $region28: #{fno2d_forward.11} parent=23 // pred_fallthru
        _
    $region24: #{fno2d_forward.11} parent=5 // pred_fallthru
      _
    %p156 = scmp.le.s32.totalorder 1, %s9
    %p157 = scmp.lt.s32.totalorder %s9, 3
    %p158 = pnand %p156, %p157
    %p159 = pneg %p158
    // Predicated region
    $region29: #{fno2d_forward.11} parent=5 // pred_check
      _
    $region30: #{fno2d_forward.11} parent=5 // pred_check_branch
      %161 = sbr.rel (%p158) target = $region32
    $region31: #{fno2d_forward.11} parent=5 // pred_region
      %s162 = ssub.s32 %s9, 1
      %s163 = smul.u32 2, %s19
      %p164 = scmp.lt.s32.totalorder %s18, 1
      %s165 = scalar_select %p164, %s18, 1
      %p166 = scmp.lt.s32.totalorder %s163, 1
      %s167 = scalar_select %p166, %s163, 1
      %s168 = smul.addr %s165, 2
      %s169 = sadd.s32 %s167, %s168
      %s170 = scalar_lea.vmem %s0, %s169
      %p171 = pneg %p49
      %p172 = pneg %p46
      %p173 = pneg %p70
      %p174 = pneg %p67
      %p175 = pneg %p91
      %p176 = pneg %p88
      %p177 = pneg %p119
      %p178 = pneg %p116
      %s179 = smul.u32 2, %s19
      %p180 = scmp.lt.s32.totalorder %s18, 1
      %s181 = scalar_select %p180, %s18, 1
      %p182 = scmp.lt.s32.totalorder %s179, 1
      %s183 = scalar_select %p182, %s179, 1
      %s184 = smul.addr %s181, 4
      %s185 = sadd.s32 %s183, %s184
      %s186 = smul.addr %s185, 4
      %s187 = scalar_lea.vmem %s3, %s186
      %s188 = smul.u32 2, %s19
      %p189 = scmp.lt.s32.totalorder %s18, 1
      %s190 = scalar_select %p189, %s18, 1
      %p191 = scmp.lt.s32.totalorder %s188, 1
      %s192 = scalar_select %p191, %s188, 1
      %s193 = smul.addr %s190, 2
      %s194 = sadd.s32 %s192, %s193
      %s195 = scalar_lea.vmem %s0, %s194
      %s196 = smul.u32 2, %s19
      %s197 = smul.u32 2, %s19
      %p198 = scmp.lt.s32.totalorder %s18, 1
      %s199 = scalar_select %p198, %s18, 1
      %p200 = scmp.lt.s32.totalorder %s197, 1
      %s201 = scalar_select %p200, %s197, 1
      %s202 = smul.addr %s199, 4
      %s203 = sadd.s32 %s201, %s202
      %s204 = smul.addr %s203, 4
      %s205 = scalar_lea.vmem %s3, %s204
      %s206 = smul.u32 2, %s19
      %v207 = vld [vmem:[%s195] sm:$0x3]
      %v208 = vld [vmem:[%s1] sm:$0xf]
      %v209 = vld [vmem:[%s1 + $0x4] sm:$0xf]
      %v210 = vunpack.c.l.bf16 %v208
      %v211 = vunpack.c.l.bf16 %v209
      %213 = vset.pattern.permute.xlu0 0
      %214 = vperm.xlu0 %213, %v210
      %v215 = vpop.permute.xlu0 %214
      %218 = vset.pattern.permute.xlu0 0
      %219 = vperm.xlu0 %218, %v211
      %v220 = vpop.permute.xlu0 %219
      %v223 = vperm.slane %v207, 0
      %v224 = vperm.slane %v207, 1
      %v227 = vmul.f32 %v215, %v223
      %v228 = vmul.f32 %v215, %v224
      %v229 = vmul.f32 %v220, %v223
      %v230 = vmul.f32 %v220, %v224
      %v231 = vadd.f32 %v227, 0.0
      %v232 = vadd.f32 %v228, 0.0
      %v233 = vadd.f32 %v229, 0.0
      %v234 = vadd.f32 %v230, 0.0
      %v235 = vld [vmem:[%s2] sm:$0xff]
      %v236 = vld [vmem:[%s2 + $0x8] sm:$0xff]
      %238 = vset.pattern.permute.xlu0 0
      %239 = vperm.xlu0 %238, %v235
      %v240 = vpop.permute.xlu0 %239
      %243 = vset.pattern.permute.xlu0 0
      %244 = vperm.xlu0 %243, %v236
      %v245 = vpop.permute.xlu0 %244
      %v247 = vadd.f32 %v231, %v240
      %v248 = vadd.f32 %v232, %v240
      %v249 = vadd.f32 %v233, %v245
      %v250 = vadd.f32 %v234, %v245
      %v251 = vpack.c.bf16 %v248, %v247
      %v252 = vpack.c.bf16 %v250, %v249
      %253 = vst [vmem:[%s205] sm:$0xff] %v251
      %254 = vst [vmem:[%s205 + $0x8] sm:$0xff] %v252
      %s255 = smul.u32 2, %s19
      %p256 = scmp.lt.s32.totalorder %s18, 1
      %s257 = scalar_select %p256, %s18, 1
      %p258 = scmp.lt.s32.totalorder %s255, 1
      %s259 = scalar_select %p258, %s255, 1
      %s260 = smul.addr %s257, 4
      %s261 = sadd.s32 %s259, %s260
      %s262 = smul.addr %s261, 4
      %s263 = scalar_lea.vmem %s3, %s262
      // Predicated region
      $region33: #{fno2d_forward.11} parent=31 // pred_check
        %p264 = pneg %p116
      $region34: #{fno2d_forward.11} parent=31 // pred_check_branch
        %266 = sbr.rel (%p264) target = $region36
      $region35: #{fno2d_forward.11} parent=31 // pred_region
        %s267 = smul.u32 2, %s19
      $region36: #{fno2d_forward.11} parent=31 // pred_fallthru
        _
    $region32: #{fno2d_forward.11} parent=5 // pred_fallthru
      _
    %p268 = scmp.le.s32.totalorder 2, %s9
    // Predicated region
    $region37: #{fno2d_forward.11} parent=5 // pred_check
      %p269 = pneg %p268
    $region38: #{fno2d_forward.11} parent=5 // pred_check_branch
      %271 = sbr.rel (%p269) target = $region40
    $region39: #{fno2d_forward.11} parent=5 // pred_region
      %s272 = ssub.s32 %s9, 2
      // Predicated region
      $region41: #{fno2d_forward.11} parent=39 // pred_check
        %p273 = pneg %p122
      $region42: #{fno2d_forward.11} parent=39 // pred_check_branch
        %275 = sbr.rel (%p273) target = $region44
      $region43: #{fno2d_forward.11} parent=39 // pred_region
        %s276 = smul.u32 2, %s21
        %p277 = scmp.lt.s32.totalorder %s20, 1
        %s278 = scalar_select %p277, %s20, 1
        %p279 = scmp.lt.s32.totalorder %s276, 1
        %s280 = scalar_select %p279, %s276, 1
        %s281 = smul.addr %s278, 4
        %s282 = sadd.s32 %s280, %s281
        %s283 = smul.addr %s282, 4
        %s284 = scalar_lea.vmem %s3, %s283
      $region44: #{fno2d_forward.11} parent=39 // pred_fallthru
        _
    $region40: #{fno2d_forward.11} parent=5 // pred_fallthru
      _
  $region6: #{fno2d_forward.11} parent=0 // loop_footer
    %s13 = sadd.s32 1, %s9
  $region7: #{fno2d_forward.11} parent=0 // loop_footer_branch
    %8 = sbr.rel target = $region3
  $region8: #{fno2d_forward.11} parent=0 // loop_exit
    _

// kernel: fno2d_forward.12
$region0: #{fno2d_forward.12}
  #allocation0 [shape = 'u32[]', space=smem, size = 0x4, offset = 0x4, fixed_abs, tag = 'smem constant byte address 0x4 - core index']
  #allocation1 [shape = 'u32[72,128]{1,0:T(1,128)}', space=vmem, size = 0x9000, scoped, tag = 'internal scratch']
  %s0 = inlined_call_operand.vmem [shape: f32[2,16,128], index: 0, kind: input, shape index: {}]
  %s1 = inlined_call_operand.vmem [shape: f32[2,16,128], index: 1, kind: input, shape index: {}]
  %s2 = inlined_call_operand.vmem [shape: f32[16,16,128], index: 2, kind: input, shape index: {}]
  %s3 = inlined_call_operand.vmem [shape: f32[16,16,128], index: 3, kind: input, shape index: {}]
  %s4 = inlined_call_operand.vmem [shape: f32[2,16,128], index: 4, kind: output, shape index: {0}]
  %s5 = inlined_call_operand.vmem [shape: f32[2,16,128], index: 5, kind: output, shape index: {1}]
  %6 = xla_tuple %s4, %s5
  %s7 = sld [smem:[#allocation0]]
  $region57: #{fno2d_forward.12} parent=0
    _
  %s9 = ssub.s32 1, %s7
  %s10 = scalar_select 0, %s9, %s7
  loop: start=0, step=1, limit=4
  $region2: #{fno2d_forward.12} parent=0 // loop_pre_header
    _
  $region3: #{fno2d_forward.12} parent=0 // loop_header
    %s12 = sphi 0, %s16
    %p13 = scmp.ge.s32.totalorder %s12, 4
    %s19 = sphi 0, %s31
    %s20 = sphi 0, %s27
    %s21 = sphi 0, %s19
    %s22 = sphi 0, %s20
    %s23 = sphi 0, %s21
    %s24 = sphi 0, %s22
    %s36 = sphi 0, %s38
    %s39 = sphi 0, %s36
    %s40 = sphi 0, %s39
    %s56 = sphi 0, %s40
    %s64 = sphi 0, %s66
    %s67 = sphi 0, %s64
    %s68 = sphi 0, %s67
    %s84 = sphi 0, %s68
    %s90 = sphi 0, %s92
    %s93 = sphi 0, %s90
    %s94 = sphi 0, %s93
    %s110 = sphi 0, %s94
    %s116 = sphi 0, %s118
    %s119 = sphi 0, %s116
    %s120 = sphi 0, %s119
    %s136 = sphi 0, %s120
    %s144 = sphi 0, %s146
    %s147 = sphi 0, %s144
    %s148 = sphi 0, %s147
    %s164 = sphi 0, %s148
    %s172 = sphi 0, %s174
    %s175 = sphi 0, %s172
    %s176 = sphi 0, %s175
    %s192 = sphi 0, %s176
  $region4: #{fno2d_forward.12} parent=0 // loop_header_branch
    %15 = sbr.rel (%p13) target = $region8
  $region5: #{fno2d_forward.12} parent=0 // loop_body
    %s17 = ssub.s32 %s12, 1
    %s18 = ssub.s32 %s12, 2
    %s25 = sadd.s32 1, %s20
    %p26 = scmp.ge.s32.totalorder %s25, 1
    %s27 = scalar_select %p26, 0, %s25
    %s28 = sadd.s32 1, %s19
    %s29 = scalar_select %p26, %s28, %s19
    %p30 = scmp.ge.s32.totalorder %s29, 2
    %s31 = scalar_select %p30, 0, %s29
    %s32 = ssub.s32 %s19, %s31
    %s33 = ssub.s32 %s20, %s27
    %s34 = sor.u32 %s32, %s33
    %p35 = scmp.eq.s32.totalorder %s34, 0
    %s37 = sadd.s32 %s36, 1
    %s38 = scalar_select %p35, %s36, %s37
    %p41 = pneg %p35
    %p42 = scmp.eq.s32.totalorder %s12, 1
    %p43 = por %p41, %p42
    %p44 = scmp.ne.s32.totalorder %s36, %s39
    %p45 = scmp.eq.s32.totalorder %s12, 0
    %p46 = por %p44, %p45
    %p47 = scmp.ne.s32.totalorder %s36, %s39
    %p48 = scmp.eq.s32.totalorder %s17, 1
    %p49 = por %p47, %p48
    %p50 = scmp.ne.s32.totalorder %s39, %s40
    %p51 = scmp.eq.s32.totalorder %s17, 0
    %p52 = por %p50, %p51
    %p53 = scmp.ne.s32.totalorder %s39, %s40
    %p54 = scmp.eq.s32.totalorder %s18, 1
    %p55 = por %p53, %p54
    %p57 = scmp.ne.s32.totalorder %s40, %s56
    %p58 = scmp.eq.s32.totalorder %s18, 0
    %p59 = por %p57, %p58
    %s60 = ssub.s32 %s19, %s31
    %s61 = ssub.s32 %s20, %s27
    %s62 = sor.u32 %s60, %s61
    %p63 = scmp.eq.s32.totalorder %s62, 0
    %s65 = sadd.s32 %s64, 1
    %s66 = scalar_select %p63, %s64, %s65
    %p69 = pneg %p63
    %p70 = scmp.eq.s32.totalorder %s12, 1
    %p71 = por %p69, %p70
    %p72 = scmp.ne.s32.totalorder %s64, %s67
    %p73 = scmp.eq.s32.totalorder %s12, 0
    %p74 = por %p72, %p73
    %p75 = scmp.ne.s32.totalorder %s64, %s67
    %p76 = scmp.eq.s32.totalorder %s17, 1
    %p77 = por %p75, %p76
    %p78 = scmp.ne.s32.totalorder %s67, %s68
    %p79 = scmp.eq.s32.totalorder %s17, 0
    %p80 = por %p78, %p79
    %p81 = scmp.ne.s32.totalorder %s67, %s68
    %p82 = scmp.eq.s32.totalorder %s18, 1
    %p83 = por %p81, %p82
    %p85 = scmp.ne.s32.totalorder %s68, %s84
    %p86 = scmp.eq.s32.totalorder %s18, 0
    %p87 = por %p85, %p86
    %s88 = ssub.s32 %s20, %s27
    %p89 = scmp.eq.s32.totalorder %s88, 0
    %s91 = sadd.s32 %s90, 1
    %s92 = scalar_select %p89, %s90, %s91
    %p95 = pneg %p89
    %p96 = scmp.eq.s32.totalorder %s12, 1
    %p97 = por %p95, %p96
    %p98 = scmp.ne.s32.totalorder %s90, %s93
    %p99 = scmp.eq.s32.totalorder %s12, 0
    %p100 = por %p98, %p99
    %p101 = scmp.ne.s32.totalorder %s90, %s93
    %p102 = scmp.eq.s32.totalorder %s17, 1
    %p103 = por %p101, %p102
    %p104 = scmp.ne.s32.totalorder %s93, %s94
    %p105 = scmp.eq.s32.totalorder %s17, 0
    %p106 = por %p104, %p105
    %p107 = scmp.ne.s32.totalorder %s93, %s94
    %p108 = scmp.eq.s32.totalorder %s18, 1
    %p109 = por %p107, %p108
    %p111 = scmp.ne.s32.totalorder %s94, %s110
    %p112 = scmp.eq.s32.totalorder %s18, 0
    %p113 = por %p111, %p112
    %s114 = ssub.s32 %s20, %s27
    %p115 = scmp.eq.s32.totalorder %s114, 0
    %s117 = sadd.s32 %s116, 1
    %s118 = scalar_select %p115, %s116, %s117
    %p121 = pneg %p115
    %p122 = scmp.eq.s32.totalorder %s12, 1
    %p123 = por %p121, %p122
    %p124 = scmp.ne.s32.totalorder %s116, %s119
    %p125 = scmp.eq.s32.totalorder %s12, 0
    %p126 = por %p124, %p125
    %p127 = scmp.ne.s32.totalorder %s116, %s119
    %p128 = scmp.eq.s32.totalorder %s17, 1
    %p129 = por %p127, %p128
    %p130 = scmp.ne.s32.totalorder %s119, %s120
    %p131 = scmp.eq.s32.totalorder %s17, 0
    %p132 = por %p130, %p131
    %p133 = scmp.ne.s32.totalorder %s119, %s120
    %p134 = scmp.eq.s32.totalorder %s18, 1
    %p135 = por %p133, %p134
    %p137 = scmp.ne.s32.totalorder %s120, %s136
    %p138 = scmp.eq.s32.totalorder %s18, 0
    %p139 = por %p137, %p138
    %s140 = ssub.s32 %s19, %s31
    %s141 = ssub.s32 %s20, %s27
    %s142 = sor.u32 %s140, %s141
    %p143 = scmp.eq.s32.totalorder %s142, 0
    %s145 = sadd.s32 %s144, 1
    %s146 = scalar_select %p143, %s144, %s145
    %p149 = pneg %p143
    %p150 = scmp.eq.s32.totalorder %s12, 1
    %p151 = por %p149, %p150
    %p152 = scmp.ne.s32.totalorder %s144, %s147
    %p153 = scmp.eq.s32.totalorder %s12, 0
    %p154 = por %p152, %p153
    %p155 = scmp.ne.s32.totalorder %s144, %s147
    %p156 = scmp.eq.s32.totalorder %s17, 1
    %p157 = por %p155, %p156
    %p158 = scmp.ne.s32.totalorder %s147, %s148
    %p159 = scmp.eq.s32.totalorder %s17, 0
    %p160 = por %p158, %p159
    %p161 = scmp.ne.s32.totalorder %s147, %s148
    %p162 = scmp.eq.s32.totalorder %s18, 1
    %p163 = por %p161, %p162
    %p165 = scmp.ne.s32.totalorder %s148, %s164
    %p166 = scmp.eq.s32.totalorder %s18, 0
    %p167 = por %p165, %p166
    %s168 = ssub.s32 %s19, %s31
    %s169 = ssub.s32 %s20, %s27
    %s170 = sor.u32 %s168, %s169
    %p171 = scmp.eq.s32.totalorder %s170, 0
    %s173 = sadd.s32 %s172, 1
    %s174 = scalar_select %p171, %s172, %s173
    %p177 = pneg %p171
    %p178 = scmp.eq.s32.totalorder %s12, 1
    %p179 = por %p177, %p178
    %p180 = scmp.ne.s32.totalorder %s172, %s175
    %p181 = scmp.eq.s32.totalorder %s12, 0
    %p182 = por %p180, %p181
    %p183 = scmp.ne.s32.totalorder %s172, %s175
    %p184 = scmp.eq.s32.totalorder %s17, 1
    %p185 = por %p183, %p184
    %p186 = scmp.ne.s32.totalorder %s175, %s176
    %p187 = scmp.eq.s32.totalorder %s17, 0
    %p188 = por %p186, %p187
    %p189 = scmp.ne.s32.totalorder %s175, %s176
    %p190 = scmp.eq.s32.totalorder %s18, 1
    %p191 = por %p189, %p190
    %p193 = scmp.ne.s32.totalorder %s176, %s192
    %p194 = scmp.eq.s32.totalorder %s18, 0
    %p195 = por %p193, %p194
    %p196 = scmp.le.s32.totalorder 1, %s12
    %p197 = scmp.lt.s32.totalorder %s12, 3
    %p198 = pnand %p196, %p197
    %p199 = pneg %p198
    // Predicated region
    $region9: #{fno2d_forward.12} parent=5 // pred_check
      _
    $region10: #{fno2d_forward.12} parent=5 // pred_check_branch
      %201 = sbr.rel (%p198) target = $region12
    $region11: #{fno2d_forward.12} parent=5 // pred_region
      %s202 = ssub.s32 %s12, 1
      // Predicated region
      $region13: #{fno2d_forward.12} parent=11 // pred_check
        %p203 = pneg %p106
      $region14: #{fno2d_forward.12} parent=11 // pred_check_branch
        %205 = sbr.rel (%p203) target = $region16
      $region15: #{fno2d_forward.12} parent=11 // pred_region
        %p206 = scmp.lt.s32.totalorder %s22, 0
        %s207 = scalar_select %p206, %s22, 0
        %s208 = smul.addr %s207, 8
        %s209 = scalar_lea.vmem %s2, %s208
      $region16: #{fno2d_forward.12} parent=11 // pred_fallthru
        _
      // Predicated region
      $region17: #{fno2d_forward.12} parent=11 // pred_check
        %p210 = pneg %p132
      $region18: #{fno2d_forward.12} parent=11 // pred_check_branch
        %212 = sbr.rel (%p210) target = $region20
      $region19: #{fno2d_forward.12} parent=11 // pred_region
        %p213 = scmp.lt.s32.totalorder %s22, 0
        %s214 = scalar_select %p213, %s22, 0
        %s215 = smul.addr %s214, 8
        %s216 = scalar_lea.vmem %s3, %s215
      $region20: #{fno2d_forward.12} parent=11 // pred_fallthru
        _
    $region12: #{fno2d_forward.12} parent=5 // pred_fallthru
      _
    %p217 = scmp.lt.s32.totalorder %s12, 2
    // Predicated region
    $region21: #{fno2d_forward.12} parent=5 // pred_check
      %p218 = pneg %p217
    $region22: #{fno2d_forward.12} parent=5 // pred_check_branch
      %220 = sbr.rel (%p218) target = $region24
    $region23: #{fno2d_forward.12} parent=5 // pred_region
      // Predicated region
      $region25: #{fno2d_forward.12} parent=23 // pred_check
        %p221 = pneg %p46
      $region26: #{fno2d_forward.12} parent=23 // pred_check_branch
        %223 = sbr.rel (%p221) target = $region28
      $region27: #{fno2d_forward.12} parent=23 // pred_region
        %p224 = scmp.lt.s32.totalorder %s19, 1
        %s225 = scalar_select %p224, %s19, 1
        %p226 = scmp.lt.s32.totalorder %s20, 0
        %s227 = scalar_select %p226, %s20, 0
        %s228 = smul.addr %s225, 2
        %s229 = sadd.s32 %s227, %s228
        %s230 = smul.addr %s229, 8
        %s231 = scalar_lea.vmem %s0, %s230
      $region28: #{fno2d_forward.12} parent=23 // pred_fallthru
        _
      // Predicated region
      $region29: #{fno2d_forward.12} parent=23 // pred_check
        %p232 = pneg %p74
      $region30: #{fno2d_forward.12} parent=23 // pred_check_branch
        %234 = sbr.rel (%p232) target = $region32
      $region31: #{fno2d_forward.12} parent=23 // pred_region
        %p235 = scmp.lt.s32.totalorder %s19, 1
        %s236 = scalar_select %p235, %s19, 1
        %p237 = scmp.lt.s32.totalorder %s20, 0
        %s238 = scalar_select %p237, %s20, 0
        %s239 = smul.addr %s236, 2
        %s240 = sadd.s32 %s238, %s239
        %s241 = smul.addr %s240, 8
        %s242 = scalar_lea.vmem %s1, %s241
      $region32: #{fno2d_forward.12} parent=23 // pred_fallthru
        _
    $region24: #{fno2d_forward.12} parent=5 // pred_fallthru
      _
    %p243 = scmp.le.s32.totalorder 1, %s12
    %p244 = scmp.lt.s32.totalorder %s12, 3
    %p245 = pnand %p243, %p244
    %p246 = pneg %p245
    // Predicated region
    $region33: #{fno2d_forward.12} parent=5 // pred_check
      _
    $region34: #{fno2d_forward.12} parent=5 // pred_check_branch
      %248 = sbr.rel (%p245) target = $region36
    $region35: #{fno2d_forward.12} parent=5 // pred_region
      %s249 = ssub.s32 %s12, 1
      %p250 = scmp.lt.s32.totalorder %s21, 1
      %s251 = scalar_select %p250, %s21, 1
      %p252 = scmp.lt.s32.totalorder %s22, 0
      %s253 = scalar_select %p252, %s22, 0
      %s254 = smul.addr %s251, 2
      %s255 = sadd.s32 %s253, %s254
      %s256 = smul.addr %s255, 8
      %s257 = scalar_lea.vmem %s0, %s256
      %p258 = pneg %p52
      %p259 = pneg %p49
      %p260 = scmp.lt.s32.totalorder %s21, 1
      %s261 = scalar_select %p260, %s21, 1
      %p262 = scmp.lt.s32.totalorder %s22, 0
      %s263 = scalar_select %p262, %s22, 0
      %s264 = smul.addr %s261, 2
      %s265 = sadd.s32 %s263, %s264
      %s266 = smul.addr %s265, 8
      %s267 = scalar_lea.vmem %s1, %s266
      %p268 = pneg %p80
      %p269 = pneg %p77
      %p270 = scmp.lt.s32.totalorder %s22, 0
      %s271 = scalar_select %p270, %s22, 0
      %s272 = smul.addr %s271, 8
      %s273 = scalar_lea.vmem %s2, %s272
      %p274 = pneg %p106
      %p275 = pneg %p103
      %p276 = scmp.lt.s32.totalorder %s22, 0
      %s277 = scalar_select %p276, %s22, 0
      %s278 = smul.addr %s277, 8
      %s279 = scalar_lea.vmem %s3, %s278
      %p280 = pneg %p132
      %p281 = pneg %p129
      %p282 = pneg %p160
      %p283 = pneg %p157
      %p284 = scmp.lt.s32.totalorder %s21, 1
      %s285 = scalar_select %p284, %s21, 1
      %p286 = scmp.lt.s32.totalorder %s22, 0
      %s287 = scalar_select %p286, %s22, 0
      %s288 = smul.addr %s285, 2
      %s289 = sadd.s32 %s287, %s288
      %s290 = smul.addr %s289, 8
      %s291 = scalar_lea.vmem %s4, %s290
      %p292 = pneg %p188
      %p293 = pneg %p185
      %p294 = scmp.lt.s32.totalorder %s21, 1
      %s295 = scalar_select %p294, %s21, 1
      %p296 = scmp.lt.s32.totalorder %s22, 0
      %s297 = scalar_select %p296, %s22, 0
      %s298 = smul.addr %s295, 2
      %s299 = sadd.s32 %s297, %s298
      %s300 = smul.addr %s299, 8
      %s301 = scalar_lea.vmem %s5, %s300
      %p302 = scmp.lt.s32.totalorder %s21, 1
      %s303 = scalar_select %p302, %s21, 1
      %p304 = scmp.lt.s32.totalorder %s22, 0
      %s305 = scalar_select %p304, %s22, 0
      %s306 = smul.addr %s303, 2
      %s307 = sadd.s32 %s305, %s306
      %s308 = smul.addr %s307, 8
      %s309 = scalar_lea.vmem %s0, %s308
      %p310 = scmp.lt.s32.totalorder %s21, 1
      %s311 = scalar_select %p310, %s21, 1
      %p312 = scmp.lt.s32.totalorder %s22, 0
      %s313 = scalar_select %p312, %s22, 0
      %s314 = smul.addr %s311, 2
      %s315 = sadd.s32 %s313, %s314
      %s316 = smul.addr %s315, 8
      %s317 = scalar_lea.vmem %s1, %s316
      %p318 = scmp.lt.s32.totalorder %s22, 0
      %s319 = scalar_select %p318, %s22, 0
      %s320 = smul.addr %s319, 8
      %s321 = scalar_lea.vmem %s2, %s320
      %p322 = scmp.lt.s32.totalorder %s22, 0
      %s323 = scalar_select %p322, %s22, 0
      %s324 = smul.addr %s323, 8
      %s325 = scalar_lea.vmem %s3, %s324
      %p326 = scmp.lt.s32.totalorder %s21, 1
      %s327 = scalar_select %p326, %s21, 1
      %p328 = scmp.lt.s32.totalorder %s22, 0
      %s329 = scalar_select %p328, %s22, 0
      %s330 = smul.addr %s327, 2
      %s331 = sadd.s32 %s329, %s330
      %s332 = smul.addr %s331, 8
      %s333 = scalar_lea.vmem %s4, %s332
      %p334 = scmp.lt.s32.totalorder %s21, 1
      %s335 = scalar_select %p334, %s21, 1
      %p336 = scmp.lt.s32.totalorder %s22, 0
      %s337 = scalar_select %p336, %s22, 0
      %s338 = smul.addr %s335, 2
      %s339 = sadd.s32 %s337, %s338
      %s340 = smul.addr %s339, 8
      %s341 = scalar_lea.vmem %s5, %s340
      %v342 = vld [vmem:[%s309] sm:$0xff]
      %v343 = vld [vmem:[%s309 + $0x8] sm:$0xff]
      %v344 = vld [vmem:[%s317] sm:$0xff]
      %v345 = vld [vmem:[%s317 + $0x8] sm:$0xff]
      %v346 = vld [vmem:[%s321] sm:$0xff]
      %v347 = vld [vmem:[%s321 + $0x8] sm:$0xff]
      %v348 = vld [vmem:[%s325] sm:$0xff]
      %v349 = vld [vmem:[%s325 + $0x8] sm:$0xff]
      %v350 = vperm.slane %v342, 0
      %v351 = vmul.f32 %v350, %v346
      %v352 = vmul.f32 %v350, %v347
      %v353 = vadd.f32 %v351, 0.0
      %v354 = vadd.f32 %v352, 0.0
      %v355 = vperm.slane %v344, 0
      %v356 = vmul.f32 %v355, %v348
      %v357 = vmul.f32 %v355, %v349
      %v358 = vsub.f32 %v353, %v356
      %v359 = vsub.f32 %v354, %v357
      %v360 = vmul.f32 %v350, %v348
      %v361 = vmul.f32 %v350, %v349
      %v362 = vadd.f32 %v360, 0.0
      %v363 = vadd.f32 %v361, 0.0
      %v364 = vmul.f32 %v355, %v346
      %v365 = vmul.f32 %v355, %v347
      %v366 = vadd.f32 %v362, %v364
      %v367 = vadd.f32 %v363, %v365
      %s368 = scalar_lea.vmem %s321, 16
      %v369 = vld [vmem:[%s368] sm:$0xff]
      %v370 = vld [vmem:[%s368 + $0x8] sm:$0xff]
      %s371 = scalar_lea.vmem %s325, 16
      %v372 = vld [vmem:[%s371] sm:$0xff]
      %v373 = vld [vmem:[%s371 + $0x8] sm:$0xff]
      %v374 = vperm.slane %v342, 1
      %v375 = vmul.f32 %v374, %v369
      %v376 = vmul.f32 %v374, %v370
      %v377 = vadd.f32 %v358, %v375
      %v378 = vadd.f32 %v359, %v376
      %v379 = vperm.slane %v344, 1
      %v380 = vmul.f32 %v379, %v372
      %v381 = vmul.f32 %v379, %v373
      %v382 = vsub.f32 %v377, %v380
      %v383 = vsub.f32 %v378, %v381
      %v384 = vmul.f32 %v374, %v372
      %v385 = vmul.f32 %v374, %v373
      %v386 = vadd.f32 %v366, %v384
      %v387 = vadd.f32 %v367, %v385
      %v388 = vmul.f32 %v379, %v369
      %v389 = vmul.f32 %v379, %v370
      %v390 = vadd.f32 %v386, %v388
      %v391 = vadd.f32 %v387, %v389
      %s392 = scalar_lea.vmem %s321, 32
      %v393 = vld [vmem:[%s392] sm:$0xff]
      %v394 = vld [vmem:[%s392 + $0x8] sm:$0xff]
      %s395 = scalar_lea.vmem %s325, 32
      %v396 = vld [vmem:[%s395] sm:$0xff]
      %v397 = vld [vmem:[%s395 + $0x8] sm:$0xff]
      %v398 = vperm.slane %v342, 2
      %v399 = vmul.f32 %v398, %v393
      %v400 = vmul.f32 %v398, %v394
      %v401 = vadd.f32 %v382, %v399
      %v402 = vadd.f32 %v383, %v400
      %v403 = vperm.slane %v344, 2
      %v404 = vmul.f32 %v403, %v396
      %v405 = vmul.f32 %v403, %v397
      %v406 = vsub.f32 %v401, %v404
      %v407 = vsub.f32 %v402, %v405
      %v408 = vmul.f32 %v398, %v396
      %v409 = vmul.f32 %v398, %v397
      %v410 = vadd.f32 %v390, %v408
      %v411 = vadd.f32 %v391, %v409
      %v412 = vmul.f32 %v403, %v393
      %v413 = vmul.f32 %v403, %v394
      %v414 = vadd.f32 %v410, %v412
      %v415 = vadd.f32 %v411, %v413
      %s416 = scalar_lea.vmem %s321, 48
      %v417 = vld [vmem:[%s416] sm:$0xff]
      %v418 = vld [vmem:[%s416 + $0x8] sm:$0xff]
      %s419 = scalar_lea.vmem %s325, 48
      %v420 = vld [vmem:[%s419] sm:$0xff]
      %v421 = vld [vmem:[%s419 + $0x8] sm:$0xff]
      %v422 = vperm.slane %v342, 3
      %v423 = vmul.f32 %v422, %v417
      %v424 = vmul.f32 %v422, %v418
      %v425 = vadd.f32 %v406, %v423
      %v426 = vadd.f32 %v407, %v424
      %v427 = vperm.slane %v344, 3
      %v428 = vmul.f32 %v427, %v420
      %v429 = vmul.f32 %v427, %v421
      %v430 = vsub.f32 %v425, %v428
      %v431 = vsub.f32 %v426, %v429
      %v432 = vmul.f32 %v422, %v420
      %v433 = vmul.f32 %v422, %v421
      %v434 = vadd.f32 %v414, %v432
      %v435 = vadd.f32 %v415, %v433
      %v436 = vmul.f32 %v427, %v417
      %v437 = vmul.f32 %v427, %v418
      %v438 = vadd.f32 %v434, %v436
      %v439 = vadd.f32 %v435, %v437
      %s440 = scalar_lea.vmem %s321, 64
      %v441 = vld [vmem:[%s440] sm:$0xff]
      %v442 = vld [vmem:[%s440 + $0x8] sm:$0xff]
      %s443 = scalar_lea.vmem %s325, 64
      %v444 = vld [vmem:[%s443] sm:$0xff]
      %v445 = vld [vmem:[%s443 + $0x8] sm:$0xff]
      %v446 = vperm.slane %v342, 4
      %v447 = vmul.f32 %v446, %v441
      %v448 = vmul.f32 %v446, %v442
      %v449 = vadd.f32 %v430, %v447
      %v450 = vadd.f32 %v431, %v448
      %v451 = vperm.slane %v344, 4
      %v452 = vmul.f32 %v451, %v444
      %v453 = vmul.f32 %v451, %v445
      %v454 = vsub.f32 %v449, %v452
      %v455 = vsub.f32 %v450, %v453
      %v456 = vmul.f32 %v446, %v444
      %v457 = vmul.f32 %v446, %v445
      %v458 = vadd.f32 %v438, %v456
      %v459 = vadd.f32 %v439, %v457
      %v460 = vmul.f32 %v451, %v441
      %v461 = vmul.f32 %v451, %v442
      %v462 = vadd.f32 %v458, %v460
      %v463 = vadd.f32 %v459, %v461
      %s464 = scalar_lea.vmem %s321, 80
      %v465 = vld [vmem:[%s464] sm:$0xff]
      %v466 = vld [vmem:[%s464 + $0x8] sm:$0xff]
      %s467 = scalar_lea.vmem %s325, 80
      %v468 = vld [vmem:[%s467] sm:$0xff]
      %v469 = vld [vmem:[%s467 + $0x8] sm:$0xff]
      %v470 = vperm.slane %v342, 5
      %v471 = vmul.f32 %v470, %v465
      %v472 = vmul.f32 %v470, %v466
      %v473 = vadd.f32 %v454, %v471
      %v474 = vadd.f32 %v455, %v472
      %v475 = vperm.slane %v344, 5
      %v476 = vmul.f32 %v475, %v468
      %v477 = vmul.f32 %v475, %v469
      %v478 = vsub.f32 %v473, %v476
      %v479 = vsub.f32 %v474, %v477
      %v480 = vmul.f32 %v470, %v468
      %v481 = vmul.f32 %v470, %v469
      %v482 = vadd.f32 %v462, %v480
      %v483 = vadd.f32 %v463, %v481
      %v484 = vmul.f32 %v475, %v465
      %v485 = vmul.f32 %v475, %v466
      %v486 = vadd.f32 %v482, %v484
      %v487 = vadd.f32 %v483, %v485
      %s488 = scalar_lea.vmem %s321, 96
      %v489 = vld [vmem:[%s488] sm:$0xff]
      %v490 = vld [vmem:[%s488 + $0x8] sm:$0xff]
      %s491 = scalar_lea.vmem %s325, 96
      %v492 = vld [vmem:[%s491] sm:$0xff]
      %v493 = vld [vmem:[%s491 + $0x8] sm:$0xff]
      %v494 = vperm.slane %v342, 6
      %v495 = vmul.f32 %v494, %v489
      %v496 = vmul.f32 %v494, %v490
      %v497 = vadd.f32 %v478, %v495
      %v498 = vadd.f32 %v479, %v496
      %v499 = vperm.slane %v344, 6
      %v500 = vmul.f32 %v499, %v492
      %v501 = vmul.f32 %v499, %v493
      %v502 = vsub.f32 %v497, %v500
      %v503 = vsub.f32 %v498, %v501
      %v504 = vmul.f32 %v494, %v492
      %v505 = vmul.f32 %v494, %v493
      %v506 = vadd.f32 %v486, %v504
      %v507 = vadd.f32 %v487, %v505
      %v508 = vmul.f32 %v499, %v489
      %v509 = vmul.f32 %v499, %v490
      %v510 = vadd.f32 %v506, %v508
      %v511 = vadd.f32 %v507, %v509
      %s512 = scalar_lea.vmem %s321, 112
      %v513 = vld [vmem:[%s512] sm:$0xff]
      %v514 = vld [vmem:[%s512 + $0x8] sm:$0xff]
      %s515 = scalar_lea.vmem %s325, 112
      %v516 = vld [vmem:[%s515] sm:$0xff]
      %v517 = vld [vmem:[%s515 + $0x8] sm:$0xff]
      %v518 = vperm.slane %v342, 7
      %v519 = vmul.f32 %v518, %v513
      %v520 = vmul.f32 %v518, %v514
      %v521 = vadd.f32 %v502, %v519
      %v522 = vadd.f32 %v503, %v520
      %v523 = vperm.slane %v344, 7
      %v524 = vmul.f32 %v523, %v516
      %v525 = vmul.f32 %v523, %v517
      %v526 = vsub.f32 %v521, %v524
      %v527 = vsub.f32 %v522, %v525
      %v528 = vmul.f32 %v518, %v516
      %v529 = vmul.f32 %v518, %v517
      %v530 = vadd.f32 %v510, %v528
      %v531 = vadd.f32 %v511, %v529
      %v532 = vmul.f32 %v523, %v513
      %v533 = vmul.f32 %v523, %v514
      %v534 = vadd.f32 %v530, %v532
      %v535 = vadd.f32 %v531, %v533
      %s536 = scalar_lea.vmem %s321, 128
      %v537 = vld [vmem:[%s536] sm:$0xff]
      %v538 = vld [vmem:[%s536 + $0x8] sm:$0xff]
      %s539 = scalar_lea.vmem %s325, 128
      %v540 = vld [vmem:[%s539] sm:$0xff]
      %v541 = vld [vmem:[%s539 + $0x8] sm:$0xff]
      %v542 = vperm.slane %v343, 0
      %v543 = vmul.f32 %v542, %v537
      %v544 = vmul.f32 %v542, %v538
      %v545 = vadd.f32 %v526, %v543
      %v546 = vadd.f32 %v527, %v544
      %v547 = vperm.slane %v345, 0
      %v548 = vmul.f32 %v547, %v540
      %v549 = vmul.f32 %v547, %v541
      %v550 = vsub.f32 %v545, %v548
      %v551 = vsub.f32 %v546, %v549
      %v552 = vmul.f32 %v542, %v540
      %v553 = vmul.f32 %v542, %v541
      %v554 = vadd.f32 %v534, %v552
      %v555 = vadd.f32 %v535, %v553
      %v556 = vmul.f32 %v547, %v537
      %v557 = vmul.f32 %v547, %v538
      %v558 = vadd.f32 %v554, %v556
      %v559 = vadd.f32 %v555, %v557
      %s560 = scalar_lea.vmem %s321, 144
      %v561 = vld [vmem:[%s560] sm:$0xff]
      %v562 = vld [vmem:[%s560 + $0x8] sm:$0xff]
      %s563 = scalar_lea.vmem %s325, 144
      %v564 = vld [vmem:[%s563] sm:$0xff]
      %v565 = vld [vmem:[%s563 + $0x8] sm:$0xff]
      %v566 = vperm.slane %v343, 1
      %v567 = vmul.f32 %v566, %v561
      %v568 = vmul.f32 %v566, %v562
      %v569 = vadd.f32 %v550, %v567
      %v570 = vadd.f32 %v551, %v568
      %v571 = vperm.slane %v345, 1
      %v572 = vmul.f32 %v571, %v564
      %v573 = vmul.f32 %v571, %v565
      %v574 = vsub.f32 %v569, %v572
      %v575 = vsub.f32 %v570, %v573
      %v576 = vmul.f32 %v566, %v564
      %v577 = vmul.f32 %v566, %v565
      %v578 = vadd.f32 %v558, %v576
      %v579 = vadd.f32 %v559, %v577
      %v580 = vmul.f32 %v571, %v561
      %v581 = vmul.f32 %v571, %v562
      %v582 = vadd.f32 %v578, %v580
      %v583 = vadd.f32 %v579, %v581
      %s584 = scalar_lea.vmem %s321, 160
      %v585 = vld [vmem:[%s584] sm:$0xff]
      %v586 = vld [vmem:[%s584 + $0x8] sm:$0xff]
      %s587 = scalar_lea.vmem %s325, 160
      %v588 = vld [vmem:[%s587] sm:$0xff]
      %v589 = vld [vmem:[%s587 + $0x8] sm:$0xff]
      %v590 = vperm.slane %v343, 2
      %v591 = vmul.f32 %v590, %v585
      %v592 = vmul.f32 %v590, %v586
      %v593 = vadd.f32 %v574, %v591
      %v594 = vadd.f32 %v575, %v592
      %v595 = vperm.slane %v345, 2
      %v596 = vmul.f32 %v595, %v588
      %v597 = vmul.f32 %v595, %v589
      %v598 = vsub.f32 %v593, %v596
      %v599 = vsub.f32 %v594, %v597
      %v600 = vmul.f32 %v590, %v588
      %v601 = vmul.f32 %v590, %v589
      %v602 = vadd.f32 %v582, %v600
      %v603 = vadd.f32 %v583, %v601
      %v604 = vmul.f32 %v595, %v585
      %v605 = vmul.f32 %v595, %v586
      %v606 = vadd.f32 %v602, %v604
      %v607 = vadd.f32 %v603, %v605
      %s608 = scalar_lea.vmem %s321, 176
      %v609 = vld [vmem:[%s608] sm:$0xff]
      %v610 = vld [vmem:[%s608 + $0x8] sm:$0xff]
      %s611 = scalar_lea.vmem %s325, 176
      %v612 = vld [vmem:[%s611] sm:$0xff]
      %v613 = vld [vmem:[%s611 + $0x8] sm:$0xff]
      %v614 = vperm.slane %v343, 3
      %v615 = vmul.f32 %v614, %v609
      %v616 = vmul.f32 %v614, %v610
      %v617 = vadd.f32 %v598, %v615
      %v618 = vadd.f32 %v599, %v616
      %v619 = vperm.slane %v345, 3
      %v620 = vmul.f32 %v619, %v612
      %v621 = vmul.f32 %v619, %v613
      %v622 = vsub.f32 %v617, %v620
      %v623 = vsub.f32 %v618, %v621
      %v624 = vmul.f32 %v614, %v612
      %v625 = vmul.f32 %v614, %v613
      %v626 = vadd.f32 %v606, %v624
      %v627 = vadd.f32 %v607, %v625
      %v628 = vmul.f32 %v619, %v609
      %v629 = vmul.f32 %v619, %v610
      %v630 = vadd.f32 %v626, %v628
      %v631 = vadd.f32 %v627, %v629
      %s632 = scalar_lea.vmem %s321, 192
      %v633 = vld [vmem:[%s632] sm:$0xff]
      %v634 = vld [vmem:[%s632 + $0x8] sm:$0xff]
      %s635 = scalar_lea.vmem %s325, 192
      %v636 = vld [vmem:[%s635] sm:$0xff]
      %v637 = vld [vmem:[%s635 + $0x8] sm:$0xff]
      %v638 = vperm.slane %v343, 4
      %v639 = vmul.f32 %v638, %v633
      %v640 = vmul.f32 %v638, %v634
      %v641 = vadd.f32 %v622, %v639
      %v642 = vadd.f32 %v623, %v640
      %v643 = vperm.slane %v345, 4
      %v644 = vmul.f32 %v643, %v636
      %v645 = vmul.f32 %v643, %v637
      %v646 = vsub.f32 %v641, %v644
      %v647 = vsub.f32 %v642, %v645
      %v648 = vmul.f32 %v638, %v636
      %v649 = vmul.f32 %v638, %v637
      %v650 = vadd.f32 %v630, %v648
      %v651 = vadd.f32 %v631, %v649
      %v652 = vmul.f32 %v643, %v633
      %v653 = vmul.f32 %v643, %v634
      %v654 = vadd.f32 %v650, %v652
      %v655 = vadd.f32 %v651, %v653
      %s656 = scalar_lea.vmem %s321, 208
      %v657 = vld [vmem:[%s656] sm:$0xff]
      %v658 = vld [vmem:[%s656 + $0x8] sm:$0xff]
      %s659 = scalar_lea.vmem %s325, 208
      %v660 = vld [vmem:[%s659] sm:$0xff]
      %v661 = vld [vmem:[%s659 + $0x8] sm:$0xff]
      %v662 = vperm.slane %v343, 5
      %v663 = vmul.f32 %v662, %v657
      %v664 = vmul.f32 %v662, %v658
      %v665 = vadd.f32 %v646, %v663
      %v666 = vadd.f32 %v647, %v664
      %v667 = vperm.slane %v345, 5
      %v668 = vmul.f32 %v667, %v660
      %v669 = vmul.f32 %v667, %v661
      %v670 = vsub.f32 %v665, %v668
      %v671 = vsub.f32 %v666, %v669
      %v672 = vmul.f32 %v662, %v660
      %v673 = vmul.f32 %v662, %v661
      %v674 = vadd.f32 %v654, %v672
      %v675 = vadd.f32 %v655, %v673
      %v676 = vmul.f32 %v667, %v657
      %v677 = vmul.f32 %v667, %v658
      %v678 = vadd.f32 %v674, %v676
      %v679 = vadd.f32 %v675, %v677
      %s680 = scalar_lea.vmem %s321, 224
      %v681 = vld [vmem:[%s680] sm:$0xff]
      %v682 = vld [vmem:[%s680 + $0x8] sm:$0xff]
      %s683 = scalar_lea.vmem %s325, 224
      %v684 = vld [vmem:[%s683] sm:$0xff]
      %v685 = vld [vmem:[%s683 + $0x8] sm:$0xff]
      %v686 = vperm.slane %v343, 6
      %v687 = vmul.f32 %v686, %v681
      %v688 = vmul.f32 %v686, %v682
      %v689 = vadd.f32 %v670, %v687
      %v690 = vadd.f32 %v671, %v688
      %v691 = vperm.slane %v345, 6
      %v692 = vmul.f32 %v691, %v684
      %v693 = vmul.f32 %v691, %v685
      %v694 = vsub.f32 %v689, %v692
      %v695 = vsub.f32 %v690, %v693
      %v696 = vmul.f32 %v686, %v684
      %v697 = vmul.f32 %v686, %v685
      %v698 = vadd.f32 %v678, %v696
      %v699 = vadd.f32 %v679, %v697
      %v700 = vmul.f32 %v691, %v681
      %v701 = vmul.f32 %v691, %v682
      %v702 = vadd.f32 %v698, %v700
      %v703 = vadd.f32 %v699, %v701
      %s704 = scalar_lea.vmem %s321, 240
      %v705 = vld [vmem:[%s704] sm:$0xff]
      %v706 = vld [vmem:[%s704 + $0x8] sm:$0xff]
      %s707 = scalar_lea.vmem %s325, 240
      %v708 = vld [vmem:[%s707] sm:$0xff]
      %v709 = vld [vmem:[%s707 + $0x8] sm:$0xff]
      %v710 = vperm.slane %v343, 7
      %v711 = vmul.f32 %v710, %v705
      %v712 = vmul.f32 %v710, %v706
      %v713 = vadd.f32 %v694, %v711
      %v714 = vadd.f32 %v695, %v712
      %v715 = vperm.slane %v345, 7
      %v716 = vmul.f32 %v715, %v708
      %v717 = vmul.f32 %v715, %v709
      %v718 = vsub.f32 %v713, %v716
      %v719 = vsub.f32 %v714, %v717
      %v720 = vmul.f32 %v710, %v708
      %v721 = vmul.f32 %v710, %v709
      %v722 = vadd.f32 %v702, %v720
      %v723 = vadd.f32 %v703, %v721
      %v724 = vmul.f32 %v715, %v705
      %v725 = vmul.f32 %v715, %v706
      %v726 = vadd.f32 %v722, %v724
      %v727 = vadd.f32 %v723, %v725
      %728 = vst [vmem:[%s333] sm:$0xff] %v718
      %729 = vst [vmem:[%s333 + $0x8] sm:$0xff] %v719
      %730 = vst [vmem:[%s341] sm:$0xff] %v726
      %731 = vst [vmem:[%s341 + $0x8] sm:$0xff] %v727
      %p732 = scmp.lt.s32.totalorder %s21, 1
      %s733 = scalar_select %p732, %s21, 1
      %p734 = scmp.lt.s32.totalorder %s22, 0
      %s735 = scalar_select %p734, %s22, 0
      %s736 = smul.addr %s733, 2
      %s737 = sadd.s32 %s735, %s736
      %s738 = smul.addr %s737, 8
      %s739 = scalar_lea.vmem %s4, %s738
      %p740 = scmp.lt.s32.totalorder %s21, 1
      %s741 = scalar_select %p740, %s21, 1
      %p742 = scmp.lt.s32.totalorder %s22, 0
      %s743 = scalar_select %p742, %s22, 0
      %s744 = smul.addr %s741, 2
      %s745 = sadd.s32 %s743, %s744
      %s746 = smul.addr %s745, 8
      %s747 = scalar_lea.vmem %s5, %s746
      // Predicated region
      $region37: #{fno2d_forward.12} parent=35 // pred_check
        %p748 = pneg %p157
      $region38: #{fno2d_forward.12} parent=35 // pred_check_branch
        %750 = sbr.rel (%p748) target = $region40
      $region39: #{fno2d_forward.12} parent=35 // pred_region
        _
      $region40: #{fno2d_forward.12} parent=35 // pred_fallthru
        _
      // Predicated region
      $region41: #{fno2d_forward.12} parent=35 // pred_check
        %p751 = pneg %p185
      $region42: #{fno2d_forward.12} parent=35 // pred_check_branch
        %753 = sbr.rel (%p751) target = $region44
      $region43: #{fno2d_forward.12} parent=35 // pred_region
        _
      $region44: #{fno2d_forward.12} parent=35 // pred_fallthru
        _
    $region36: #{fno2d_forward.12} parent=5 // pred_fallthru
      _
    %p754 = scmp.le.s32.totalorder 2, %s12
    // Predicated region
    $region45: #{fno2d_forward.12} parent=5 // pred_check
      %p755 = pneg %p754
    $region46: #{fno2d_forward.12} parent=5 // pred_check_branch
      %757 = sbr.rel (%p755) target = $region48
    $region47: #{fno2d_forward.12} parent=5 // pred_region
      %s758 = ssub.s32 %s12, 2
      // Predicated region
      $region49: #{fno2d_forward.12} parent=47 // pred_check
        %p759 = pneg %p163
      $region50: #{fno2d_forward.12} parent=47 // pred_check_branch
        %761 = sbr.rel (%p759) target = $region52
      $region51: #{fno2d_forward.12} parent=47 // pred_region
        %p762 = scmp.lt.s32.totalorder %s23, 1
        %s763 = scalar_select %p762, %s23, 1
        %p764 = scmp.lt.s32.totalorder %s24, 0
        %s765 = scalar_select %p764, %s24, 0
        %s766 = smul.addr %s763, 2
        %s767 = sadd.s32 %s765, %s766
        %s768 = smul.addr %s767, 8
        %s769 = scalar_lea.vmem %s4, %s768
      $region52: #{fno2d_forward.12} parent=47 // pred_fallthru
        _
      // Predicated region
      $region53: #{fno2d_forward.12} parent=47 // pred_check
        %p770 = pneg %p191
      $region54: #{fno2d_forward.12} parent=47 // pred_check_branch
        %772 = sbr.rel (%p770) target = $region56
      $region55: #{fno2d_forward.12} parent=47 // pred_region
        %p773 = scmp.lt.s32.totalorder %s23, 1
        %s774 = scalar_select %p773, %s23, 1
        %p775 = scmp.lt.s32.totalorder %s24, 0
        %s776 = scalar_select %p775, %s24, 0
        %s777 = smul.addr %s774, 2
        %s778 = sadd.s32 %s776, %s777
        %s779 = smul.addr %s778, 8
        %s780 = scalar_lea.vmem %s5, %s779
      $region56: #{fno2d_forward.12} parent=47 // pred_fallthru
        _
    $region48: #{fno2d_forward.12} parent=5 // pred_fallthru
      _
  $region6: #{fno2d_forward.12} parent=0 // loop_footer
    %s16 = sadd.s32 1, %s12
  $region7: #{fno2d_forward.12} parent=0 // loop_footer_branch
    %11 = sbr.rel target = $region3
  $region8: #{fno2d_forward.12} parent=0 // loop_exit
    _

// kernel: reverse.8
$region0: #{reverse.8}
  #allocation0 [shape = 's32[1]{0}', space=sflag, size = 0x4, scoped, tag = 'scoped memory for reverse.8']
  %s0 = inlined_call_operand.vmem [shape: f32[2,16,16,7], index: 0, kind: input, shape index: {}]
  %s1 = inlined_call_operand.vmem [shape: f32[2,16,16,7], index: 1, kind: output, shape index: {}]
  %s2 = scalar_lea.vmem %s0, 96
  %v3 = vld [vmem:[%s2] sm:$0xff]
  %4 = vst [vmem:[%s1] sm:$0xff] %v3
  %s5 = scalar_lea.vmem %s0, 208
  %v6 = vld [vmem:[%s5] sm:$0xff]
  %s7 = scalar_lea.vmem %s1, 112
  %8 = vst [vmem:[%s7] sm:$0xff] %v6
  %s9 = scalar_lea.vmem %s0, 80
  %v10 = vld [vmem:[%s9] sm:$0xff]
  %s11 = scalar_lea.vmem %s1, 16
  %12 = vst [vmem:[%s11] sm:$0xff] %v10
  %s13 = scalar_lea.vmem %s0, 192
  %v14 = vld [vmem:[%s13] sm:$0xff]
  %s15 = scalar_lea.vmem %s1, 128
  %16 = vst [vmem:[%s15] sm:$0xff] %v14
  %s17 = scalar_lea.vmem %s0, 64
  %v18 = vld [vmem:[%s17] sm:$0xff]
  %s19 = scalar_lea.vmem %s1, 32
  %20 = vst [vmem:[%s19] sm:$0xff] %v18
  %s21 = scalar_lea.vmem %s0, 176
  %v22 = vld [vmem:[%s21] sm:$0xff]
  %s23 = scalar_lea.vmem %s1, 144
  %24 = vst [vmem:[%s23] sm:$0xff] %v22
  %s25 = scalar_lea.vmem %s0, 48
  %v26 = vld [vmem:[%s25] sm:$0xff]
  %s27 = scalar_lea.vmem %s1, 48
  %28 = vst [vmem:[%s27] sm:$0xff] %v26
  %s29 = scalar_lea.vmem %s0, 160
  %v30 = vld [vmem:[%s29] sm:$0xff]
  %s31 = scalar_lea.vmem %s1, 160
  %32 = vst [vmem:[%s31] sm:$0xff] %v30
  %s33 = scalar_lea.vmem %s0, 32
  %v34 = vld [vmem:[%s33] sm:$0xff]
  %s35 = scalar_lea.vmem %s1, 64
  %36 = vst [vmem:[%s35] sm:$0xff] %v34
  %s37 = scalar_lea.vmem %s0, 144
  %v38 = vld [vmem:[%s37] sm:$0xff]
  %s39 = scalar_lea.vmem %s1, 176
  %40 = vst [vmem:[%s39] sm:$0xff] %v38
  %s41 = scalar_lea.vmem %s0, 16
  %v42 = vld [vmem:[%s41] sm:$0xff]
  %s43 = scalar_lea.vmem %s1, 80
  %44 = vst [vmem:[%s43] sm:$0xff] %v42
  %s45 = scalar_lea.vmem %s0, 128
  %v46 = vld [vmem:[%s45] sm:$0xff]
  %s47 = scalar_lea.vmem %s1, 192
  %48 = vst [vmem:[%s47] sm:$0xff] %v46
  %v49 = vld [vmem:[%s0] sm:$0xff]
  %s50 = scalar_lea.vmem %s1, 96
  %51 = vst [vmem:[%s50] sm:$0xff] %v49
  %s52 = scalar_lea.vmem %s0, 112
  %v53 = vld [vmem:[%s52] sm:$0xff]
  %s54 = scalar_lea.vmem %s1, 208
  %55 = vst [vmem:[%s54] sm:$0xff] %v53
  %s56 = scalar_lea.vmem %s0, 104
  %v57 = vld [vmem:[%s56] sm:$0xff]
  %s58 = scalar_lea.vmem %s1, 8
  %59 = vst [vmem:[%s58] sm:$0xff] %v57
  %s60 = scalar_lea.vmem %s0, 216
  %v61 = vld [vmem:[%s60] sm:$0xff]
  %s62 = scalar_lea.vmem %s1, 120
  %63 = vst [vmem:[%s62] sm:$0xff] %v61
  %s64 = scalar_lea.vmem %s0, 88
  %v65 = vld [vmem:[%s64] sm:$0xff]
  %s66 = scalar_lea.vmem %s1, 24
  %67 = vst [vmem:[%s66] sm:$0xff] %v65
  %s68 = scalar_lea.vmem %s0, 200
  %v69 = vld [vmem:[%s68] sm:$0xff]
  %s70 = scalar_lea.vmem %s1, 136
  %71 = vst [vmem:[%s70] sm:$0xff] %v69
  %s72 = scalar_lea.vmem %s0, 72
  %v73 = vld [vmem:[%s72] sm:$0xff]
  %s74 = scalar_lea.vmem %s1, 40
  %75 = vst [vmem:[%s74] sm:$0xff] %v73
  %s76 = scalar_lea.vmem %s0, 184
  %v77 = vld [vmem:[%s76] sm:$0xff]
  %s78 = scalar_lea.vmem %s1, 152
  %79 = vst [vmem:[%s78] sm:$0xff] %v77
  %s80 = scalar_lea.vmem %s0, 56
  %v81 = vld [vmem:[%s80] sm:$0xff]
  %s82 = scalar_lea.vmem %s1, 56
  %83 = vst [vmem:[%s82] sm:$0xff] %v81
  %s84 = scalar_lea.vmem %s0, 168
  %v85 = vld [vmem:[%s84] sm:$0xff]
  %s86 = scalar_lea.vmem %s1, 168
  %87 = vst [vmem:[%s86] sm:$0xff] %v85
  %s88 = scalar_lea.vmem %s0, 40
  %v89 = vld [vmem:[%s88] sm:$0xff]
  %s90 = scalar_lea.vmem %s1, 72
  %91 = vst [vmem:[%s90] sm:$0xff] %v89
  %s92 = scalar_lea.vmem %s0, 152
  %v93 = vld [vmem:[%s92] sm:$0xff]
  %s94 = scalar_lea.vmem %s1, 184
  %95 = vst [vmem:[%s94] sm:$0xff] %v93
  %s96 = scalar_lea.vmem %s0, 24
  %v97 = vld [vmem:[%s96] sm:$0xff]
  %s98 = scalar_lea.vmem %s1, 88
  %99 = vst [vmem:[%s98] sm:$0xff] %v97
  %s100 = scalar_lea.vmem %s0, 136
  %v101 = vld [vmem:[%s100] sm:$0xff]
  %s102 = scalar_lea.vmem %s1, 200
  %103 = vst [vmem:[%s102] sm:$0xff] %v101
  %s104 = scalar_lea.vmem %s0, 8
  %v105 = vld [vmem:[%s104] sm:$0xff]
  %s106 = scalar_lea.vmem %s1, 104
  %107 = vst [vmem:[%s106] sm:$0xff] %v105
  %s108 = scalar_lea.vmem %s0, 120
  %v109 = vld [vmem:[%s108] sm:$0xff]
  %s110 = scalar_lea.vmem %s1, 216
  %111 = vst [vmem:[%s110] sm:$0xff] %v109

// kernel: fno2d_forward.13
$region0: #{fno2d_forward.13}
  #allocation0 [shape = 'u32[]', space=smem, size = 0x4, offset = 0x4, fixed_abs, tag = 'smem constant byte address 0x4 - core index']
  #allocation1 [shape = 'u32[72,128]{1,0:T(1,128)}', space=vmem, size = 0x9000, scoped, tag = 'internal scratch']
  %s0 = inlined_call_operand.vmem [shape: bf16[2,16,256], index: 0, kind: input, shape index: {}]
  %s1 = inlined_call_operand.vmem [shape: bf16[16,16], index: 1, kind: input, shape index: {}]
  %s2 = inlined_call_operand.vmem [shape: f32[16,1], index: 2, kind: input, shape index: {}, may-alias: {2,4}]
  %s3 = inlined_call_operand.vmem [shape: f32[16,1], index: 3, kind: input, shape index: {}]
  %s4 = inlined_call_operand.vmem [shape: f32[16,1], index: 4, kind: input, shape index: {}, may-alias: {2,4}]
  %s5 = inlined_call_operand.vmem [shape: f32[2,16,256], index: 5, kind: input, shape index: {}]
  %s6 = inlined_call_operand.vmem [shape: bf16[2,16,256], index: 6, kind: output, shape index: {}]
  %s7 = sld [smem:[#allocation0]]
  $region57: #{fno2d_forward.13} parent=0
    _
  %s9 = ssub.s32 1, %s7
  %s10 = scalar_select 0, %s9, %s7
  loop: start=0, step=1, limit=4
  $region2: #{fno2d_forward.13} parent=0 // loop_pre_header
    _
  $region3: #{fno2d_forward.13} parent=0 // loop_header
    %s12 = sphi 0, %s16
    %p13 = scmp.ge.s32.totalorder %s12, 4
    %s19 = sphi 0, %s31
    %s20 = sphi 0, %s27
    %s21 = sphi 0, %s19
    %s22 = sphi 0, %s20
    %s23 = sphi 0, %s21
    %s24 = sphi 0, %s22
    %s36 = sphi 0, %s38
    %s39 = sphi 0, %s36
    %s40 = sphi 0, %s39
    %s56 = sphi 0, %s40
    %s60 = sphi 0, %s60
    %s62 = sphi 0, %s60
    %s63 = sphi 0, %s62
    %s77 = sphi 0, %s63
    %s81 = sphi 0, %s81
    %s83 = sphi 0, %s81
    %s84 = sphi 0, %s83
    %s98 = sphi 0, %s84
    %s102 = sphi 0, %s102
    %s104 = sphi 0, %s102
    %s105 = sphi 0, %s104
    %s119 = sphi 0, %s105
    %s123 = sphi 0, %s123
    %s125 = sphi 0, %s123
    %s126 = sphi 0, %s125
    %s140 = sphi 0, %s126
    %s148 = sphi 0, %s150
    %s151 = sphi 0, %s148
    %s152 = sphi 0, %s151
    %s168 = sphi 0, %s152
    %s176 = sphi 0, %s178
    %s179 = sphi 0, %s176
    %s180 = sphi 0, %s179
    %s196 = sphi 0, %s180
  $region4: #{fno2d_forward.13} parent=0 // loop_header_branch
    %15 = sbr.rel (%p13) target = $region8
  $region5: #{fno2d_forward.13} parent=0 // loop_body
    %s17 = ssub.s32 %s12, 1
    %s18 = ssub.s32 %s12, 2
    %s25 = sadd.s32 1, %s20
    %p26 = scmp.ge.s32.totalorder %s25, 1
    %s27 = scalar_select %p26, 0, %s25
    %s28 = sadd.s32 1, %s19
    %s29 = scalar_select %p26, %s28, %s19
    %p30 = scmp.ge.s32.totalorder %s29, 2
    %s31 = scalar_select %p30, 0, %s29
    %s32 = ssub.s32 %s19, %s31
    %s33 = ssub.s32 %s20, %s27
    %s34 = sor.u32 %s32, %s33
    %p35 = scmp.eq.s32.totalorder %s34, 0
    %s37 = sadd.s32 %s36, 1
    %s38 = scalar_select %p35, %s36, %s37
    %p41 = pneg %p35
    %p42 = scmp.eq.s32.totalorder %s12, 1
    %p43 = por %p41, %p42
    %p44 = scmp.ne.s32.totalorder %s36, %s39
    %p45 = scmp.eq.s32.totalorder %s12, 0
    %p46 = por %p44, %p45
    %p47 = scmp.ne.s32.totalorder %s36, %s39
    %p48 = scmp.eq.s32.totalorder %s17, 1
    %p49 = por %p47, %p48
    %p50 = scmp.ne.s32.totalorder %s39, %s40
    %p51 = scmp.eq.s32.totalorder %s17, 0
    %p52 = por %p50, %p51
    %p53 = scmp.ne.s32.totalorder %s39, %s40
    %p54 = scmp.eq.s32.totalorder %s18, 1
    %p55 = por %p53, %p54
    %p57 = scmp.ne.s32.totalorder %s40, %s56
    %p58 = scmp.eq.s32.totalorder %s18, 0
    %p59 = por %p57, %p58
    %s61 = sadd.s32 %s60, 1
    %p64 = scmp.eq.s32.totalorder %s12, 1
    %p65 = scmp.ne.s32.totalorder %s60, %s62
    %p66 = scmp.eq.s32.totalorder %s12, 0
    %p67 = por %p65, %p66
    %p68 = scmp.ne.s32.totalorder %s60, %s62
    %p69 = scmp.eq.s32.totalorder %s17, 1
    %p70 = por %p68, %p69
    %p71 = scmp.ne.s32.totalorder %s62, %s63
    %p72 = scmp.eq.s32.totalorder %s17, 0
    %p73 = por %p71, %p72
    %p74 = scmp.ne.s32.totalorder %s62, %s63
    %p75 = scmp.eq.s32.totalorder %s18, 1
    %p76 = por %p74, %p75
    %p78 = scmp.ne.s32.totalorder %s63, %s77
    %p79 = scmp.eq.s32.totalorder %s18, 0
    %p80 = por %p78, %p79
    %s82 = sadd.s32 %s81, 1
    %p85 = scmp.eq.s32.totalorder %s12, 1
    %p86 = scmp.ne.s32.totalorder %s81, %s83
    %p87 = scmp.eq.s32.totalorder %s12, 0
    %p88 = por %p86, %p87
    %p89 = scmp.ne.s32.totalorder %s81, %s83
    %p90 = scmp.eq.s32.totalorder %s17, 1
    %p91 = por %p89, %p90
    %p92 = scmp.ne.s32.totalorder %s83, %s84
    %p93 = scmp.eq.s32.totalorder %s17, 0
    %p94 = por %p92, %p93
    %p95 = scmp.ne.s32.totalorder %s83, %s84
    %p96 = scmp.eq.s32.totalorder %s18, 1
    %p97 = por %p95, %p96
    %p99 = scmp.ne.s32.totalorder %s84, %s98
    %p100 = scmp.eq.s32.totalorder %s18, 0
    %p101 = por %p99, %p100
    %s103 = sadd.s32 %s102, 1
    %p106 = scmp.eq.s32.totalorder %s12, 1
    %p107 = scmp.ne.s32.totalorder %s102, %s104
    %p108 = scmp.eq.s32.totalorder %s12, 0
    %p109 = por %p107, %p108
    %p110 = scmp.ne.s32.totalorder %s102, %s104
    %p111 = scmp.eq.s32.totalorder %s17, 1
    %p112 = por %p110, %p111
    %p113 = scmp.ne.s32.totalorder %s104, %s105
    %p114 = scmp.eq.s32.totalorder %s17, 0
    %p115 = por %p113, %p114
    %p116 = scmp.ne.s32.totalorder %s104, %s105
    %p117 = scmp.eq.s32.totalorder %s18, 1
    %p118 = por %p116, %p117
    %p120 = scmp.ne.s32.totalorder %s105, %s119
    %p121 = scmp.eq.s32.totalorder %s18, 0
    %p122 = por %p120, %p121
    %s124 = sadd.s32 %s123, 1
    %p127 = scmp.eq.s32.totalorder %s12, 1
    %p128 = scmp.ne.s32.totalorder %s123, %s125
    %p129 = scmp.eq.s32.totalorder %s12, 0
    %p130 = por %p128, %p129
    %p131 = scmp.ne.s32.totalorder %s123, %s125
    %p132 = scmp.eq.s32.totalorder %s17, 1
    %p133 = por %p131, %p132
    %p134 = scmp.ne.s32.totalorder %s125, %s126
    %p135 = scmp.eq.s32.totalorder %s17, 0
    %p136 = por %p134, %p135
    %p137 = scmp.ne.s32.totalorder %s125, %s126
    %p138 = scmp.eq.s32.totalorder %s18, 1
    %p139 = por %p137, %p138
    %p141 = scmp.ne.s32.totalorder %s126, %s140
    %p142 = scmp.eq.s32.totalorder %s18, 0
    %p143 = por %p141, %p142
    %s144 = ssub.s32 %s19, %s31
    %s145 = ssub.s32 %s20, %s27
    %s146 = sor.u32 %s144, %s145
    %p147 = scmp.eq.s32.totalorder %s146, 0
    %s149 = sadd.s32 %s148, 1
    %s150 = scalar_select %p147, %s148, %s149
    %p153 = pneg %p147
    %p154 = scmp.eq.s32.totalorder %s12, 1
    %p155 = por %p153, %p154
    %p156 = scmp.ne.s32.totalorder %s148, %s151
    %p157 = scmp.eq.s32.totalorder %s12, 0
    %p158 = por %p156, %p157
    %p159 = scmp.ne.s32.totalorder %s148, %s151
    %p160 = scmp.eq.s32.totalorder %s17, 1
    %p161 = por %p159, %p160
    %p162 = scmp.ne.s32.totalorder %s151, %s152
    %p163 = scmp.eq.s32.totalorder %s17, 0
    %p164 = por %p162, %p163
    %p165 = scmp.ne.s32.totalorder %s151, %s152
    %p166 = scmp.eq.s32.totalorder %s18, 1
    %p167 = por %p165, %p166
    %p169 = scmp.ne.s32.totalorder %s152, %s168
    %p170 = scmp.eq.s32.totalorder %s18, 0
    %p171 = por %p169, %p170
    %s172 = ssub.s32 %s19, %s31
    %s173 = ssub.s32 %s20, %s27
    %s174 = sor.u32 %s172, %s173
    %p175 = scmp.eq.s32.totalorder %s174, 0
    %s177 = sadd.s32 %s176, 1
    %s178 = scalar_select %p175, %s176, %s177
    %p181 = pneg %p175
    %p182 = scmp.eq.s32.totalorder %s12, 1
    %p183 = por %p181, %p182
    %p184 = scmp.ne.s32.totalorder %s176, %s179
    %p185 = scmp.eq.s32.totalorder %s12, 0
    %p186 = por %p184, %p185
    %p187 = scmp.ne.s32.totalorder %s176, %s179
    %p188 = scmp.eq.s32.totalorder %s17, 1
    %p189 = por %p187, %p188
    %p190 = scmp.ne.s32.totalorder %s179, %s180
    %p191 = scmp.eq.s32.totalorder %s17, 0
    %p192 = por %p190, %p191
    %p193 = scmp.ne.s32.totalorder %s179, %s180
    %p194 = scmp.eq.s32.totalorder %s18, 1
    %p195 = por %p193, %p194
    %p197 = scmp.ne.s32.totalorder %s180, %s196
    %p198 = scmp.eq.s32.totalorder %s18, 0
    %p199 = por %p197, %p198
    %p200 = scmp.le.s32.totalorder 1, %s12
    %p201 = scmp.lt.s32.totalorder %s12, 3
    %p202 = pnand %p200, %p201
    %p203 = pneg %p202
    // Predicated region
    $region9: #{fno2d_forward.13} parent=5 // pred_check
      _
    $region10: #{fno2d_forward.13} parent=5 // pred_check_branch
      %205 = sbr.rel (%p202) target = $region12
    $region11: #{fno2d_forward.13} parent=5 // pred_region
      %s206 = ssub.s32 %s12, 1
      // Predicated region
      $region13: #{fno2d_forward.13} parent=11 // pred_check
        %p207 = pneg %p73
      $region14: #{fno2d_forward.13} parent=11 // pred_check_branch
        %209 = sbr.rel (%p207) target = $region16
      $region15: #{fno2d_forward.13} parent=11 // pred_region
        _
      $region16: #{fno2d_forward.13} parent=11 // pred_fallthru
        _
      // Predicated region
      $region17: #{fno2d_forward.13} parent=11 // pred_check
        %p210 = pneg %p94
      $region18: #{fno2d_forward.13} parent=11 // pred_check_branch
        %212 = sbr.rel (%p210) target = $region20
      $region19: #{fno2d_forward.13} parent=11 // pred_region
        _
      $region20: #{fno2d_forward.13} parent=11 // pred_fallthru
        _
      // Predicated region
      $region21: #{fno2d_forward.13} parent=11 // pred_check
        %p213 = pneg %p115
      $region22: #{fno2d_forward.13} parent=11 // pred_check_branch
        %215 = sbr.rel (%p213) target = $region24
      $region23: #{fno2d_forward.13} parent=11 // pred_region
        _
      $region24: #{fno2d_forward.13} parent=11 // pred_fallthru
        _
      // Predicated region
      $region25: #{fno2d_forward.13} parent=11 // pred_check
        %p216 = pneg %p136
      $region26: #{fno2d_forward.13} parent=11 // pred_check_branch
        %218 = sbr.rel (%p216) target = $region28
      $region27: #{fno2d_forward.13} parent=11 // pred_region
        _
      $region28: #{fno2d_forward.13} parent=11 // pred_fallthru
        _
    $region12: #{fno2d_forward.13} parent=5 // pred_fallthru
      _
    %p219 = scmp.lt.s32.totalorder %s12, 2
    // Predicated region
    $region29: #{fno2d_forward.13} parent=5 // pred_check
      %p220 = pneg %p219
    $region30: #{fno2d_forward.13} parent=5 // pred_check_branch
      %222 = sbr.rel (%p220) target = $region32
    $region31: #{fno2d_forward.13} parent=5 // pred_region
      // Predicated region
      $region33: #{fno2d_forward.13} parent=31 // pred_check
        %p223 = pneg %p46
      $region34: #{fno2d_forward.13} parent=31 // pred_check_branch
        %225 = sbr.rel (%p223) target = $region36
      $region35: #{fno2d_forward.13} parent=31 // pred_region
        %s226 = smul.u32 2, %s20
        %p227 = scmp.lt.s32.totalorder %s19, 1
        %s228 = scalar_select %p227, %s19, 1
        %p229 = scmp.lt.s32.totalorder %s226, 1
        %s230 = scalar_select %p229, %s226, 1
        %s231 = smul.addr %s228, 4
        %s232 = sadd.s32 %s230, %s231
        %s233 = smul.addr %s232, 4
        %s234 = scalar_lea.vmem %s0, %s233
        %s235 = smul.u32 2, %s20
      $region36: #{fno2d_forward.13} parent=31 // pred_fallthru
        _
      // Predicated region
      $region37: #{fno2d_forward.13} parent=31 // pred_check
        %p236 = pneg %p158
      $region38: #{fno2d_forward.13} parent=31 // pred_check_branch
        %238 = sbr.rel (%p236) target = $region40
      $region39: #{fno2d_forward.13} parent=31 // pred_region
        %s239 = smul.u32 2, %s20
        %p240 = scmp.lt.s32.totalorder %s19, 1
        %s241 = scalar_select %p240, %s19, 1
        %p242 = scmp.lt.s32.totalorder %s239, 1
        %s243 = scalar_select %p242, %s239, 1
        %s244 = smul.addr %s241, 4
        %s245 = sadd.s32 %s243, %s244
        %s246 = smul.addr %s245, 8
        %s247 = scalar_lea.vmem %s5, %s246
        %s248 = smul.u32 2, %s20
      $region40: #{fno2d_forward.13} parent=31 // pred_fallthru
        _
    $region32: #{fno2d_forward.13} parent=5 // pred_fallthru
      _
    %p249 = scmp.le.s32.totalorder 1, %s12
    %p250 = scmp.lt.s32.totalorder %s12, 3
    %p251 = pnand %p249, %p250
    %p252 = pneg %p251
    // Predicated region
    $region41: #{fno2d_forward.13} parent=5 // pred_check
      _
    $region42: #{fno2d_forward.13} parent=5 // pred_check_branch
      %254 = sbr.rel (%p251) target = $region44
    $region43: #{fno2d_forward.13} parent=5 // pred_region
      %s255 = ssub.s32 %s12, 1
      %s256 = smul.u32 2, %s22
      %p257 = scmp.lt.s32.totalorder %s21, 1
      %s258 = scalar_select %p257, %s21, 1
      %p259 = scmp.lt.s32.totalorder %s256, 1
      %s260 = scalar_select %p259, %s256, 1
      %s261 = smul.addr %s258, 4
      %s262 = sadd.s32 %s260, %s261
      %s263 = smul.addr %s262, 4
      %s264 = scalar_lea.vmem %s0, %s263
      %p265 = pneg %p52
      %p266 = pneg %p49
      %p267 = pneg %p73
      %p268 = pneg %p70
      %p269 = pneg %p94
      %p270 = pneg %p91
      %p271 = pneg %p115
      %p272 = pneg %p112
      %p273 = pneg %p136
      %p274 = pneg %p133
      %s275 = smul.u32 2, %s22
      %p276 = scmp.lt.s32.totalorder %s21, 1
      %s277 = scalar_select %p276, %s21, 1
      %p278 = scmp.lt.s32.totalorder %s275, 1
      %s279 = scalar_select %p278, %s275, 1
      %s280 = smul.addr %s277, 4
      %s281 = sadd.s32 %s279, %s280
      %s282 = smul.addr %s281, 8
      %s283 = scalar_lea.vmem %s5, %s282
      %p284 = pneg %p164
      %p285 = pneg %p161
      %p286 = pneg %p192
      %p287 = pneg %p189
      %s288 = smul.u32 2, %s22
      %p289 = scmp.lt.s32.totalorder %s21, 1
      %s290 = scalar_select %p289, %s21, 1
      %p291 = scmp.lt.s32.totalorder %s288, 1
      %s292 = scalar_select %p291, %s288, 1
      %s293 = smul.addr %s290, 4
      %s294 = sadd.s32 %s292, %s293
      %s295 = smul.addr %s294, 4
      %s296 = scalar_lea.vmem %s6, %s295
      %s297 = smul.u32 2, %s22
      %p298 = scmp.lt.s32.totalorder %s21, 1
      %s299 = scalar_select %p298, %s21, 1
      %p300 = scmp.lt.s32.totalorder %s297, 1
      %s301 = scalar_select %p300, %s297, 1
      %s302 = smul.addr %s299, 4
      %s303 = sadd.s32 %s301, %s302
      %s304 = smul.addr %s303, 4
      %s305 = scalar_lea.vmem %s0, %s304
      %s306 = smul.u32 2, %s22
      %s307 = smul.u32 2, %s22
      %p308 = scmp.lt.s32.totalorder %s21, 1
      %s309 = scalar_select %p308, %s21, 1
      %p310 = scmp.lt.s32.totalorder %s307, 1
      %s311 = scalar_select %p310, %s307, 1
      %s312 = smul.addr %s309, 4
      %s313 = sadd.s32 %s311, %s312
      %s314 = smul.addr %s313, 8
      %s315 = scalar_lea.vmem %s5, %s314
      %s316 = smul.u32 2, %s22
      %s317 = smul.u32 2, %s22
      %p318 = scmp.lt.s32.totalorder %s21, 1
      %s319 = scalar_select %p318, %s21, 1
      %p320 = scmp.lt.s32.totalorder %s317, 1
      %s321 = scalar_select %p320, %s317, 1
      %s322 = smul.addr %s319, 4
      %s323 = sadd.s32 %s321, %s322
      %s324 = smul.addr %s323, 4
      %s325 = scalar_lea.vmem %s6, %s324
      %s326 = smul.u32 2, %s22
      %v328 = vld [vmem:[%s305] sm:$0xff]
      %v329 = vld [vmem:[%s305 + $0x8] sm:$0xff]
      %v330 = vld [vmem:[%s1] sm:$0xf]
      %v331 = vld [vmem:[%s1 + $0x4] sm:$0xf]
      %v332 = vld [vmem:[%s2] sm:$0xff]
      %v333 = vld [vmem:[%s2 + $0x8] sm:$0xff]
      %335 = vset.pattern.permute.xlu0 0
      %336 = vperm.xlu0 %335, %v332
      %v337 = vpop.permute.xlu0 %336
      %340 = vset.pattern.permute.xlu0 0
      %341 = vperm.xlu0 %340, %v333
      %v342 = vpop.permute.xlu0 %341
      %v346 = vunpack.c.l.b16 %v330
      %v347 = vunpack.c.l.b16 %v331
      %v348 = vpack.c.b16 %v347, %v346
      %v351 = vunpack.c.l.b16 %v328
      %v352 = vunpack.c.h.b16 %v328
      %v353 = vunpack.c.l.b16 %v329
      %v354 = vunpack.c.h.b16 %v329
      %v355 = vpack.c.b16 %v353, %v351
      %v356 = vpack.c.b16 %v354, %v352
      %vm359 = vcmask 130048
      %v361 = vsel %vm359, %v348, 0
      %363 = vmatpush.bf16.msra.mxu0 0
      %364 = vmatpush.bf16.msra.mxu0 0
      %365 = vmatpush.bf16.msra.mxu0 0
      %366 = vmatpush.bf16.msra.mxu0 0
      %367 = vmatpush.bf16.msra.mxu0 0
      %368 = vmatpush.bf16.msra.mxu0 0
      %369 = vmatpush.bf16.msra.mxu0 0
      %370 = vmatpush.bf16.msra.mxu0 %v355
      %371 = vmatmul.bf16.gmra.mxu0 %v361
      %v372 = vpop.f32.mrf.mxu0
      %v373 = vadd.f32 %v337, %v372
      %v374 = vpop.f32.mrf.mxu0
      %v375 = vadd.f32 %v342, %v374
      %376 = vdwg.mxu0
      %377 = vmatpush.bf16.msra.mxu0 0
      %378 = vmatpush.bf16.msra.mxu0 0
      %379 = vmatpush.bf16.msra.mxu0 0
      %380 = vmatpush.bf16.msra.mxu0 0
      %381 = vmatpush.bf16.msra.mxu0 0
      %382 = vmatpush.bf16.msra.mxu0 0
      %383 = vmatpush.bf16.msra.mxu0 0
      %384 = vmatpush.bf16.msra.mxu0 %v356
      %385 = vmatmul.bf16.gmra.mxu0 %v361
      %v386 = vpop.f32.mrf.mxu0
      %v387 = vadd.f32 %v337, %v386
      %v388 = vpop.f32.mrf.mxu0
      %v389 = vadd.f32 %v342, %v388
      %390 = vdwg.mxu0
      %v391 = vld [vmem:[%s315] sm:$0xff]
      %v392 = vld [vmem:[%s315 + $0x8] sm:$0xff]
      %v393 = vld [vmem:[%s315 + $0x10] sm:$0xff]
      %v394 = vld [vmem:[%s315 + $0x18] sm:$0xff]
      %v395 = vadd.f32 %v373, %v391
      %v396 = vadd.f32 %v387, %v392
      %v397 = vadd.f32 %v375, %v393
      %v398 = vadd.f32 %v389, %v394
      %v399 = vld [vmem:[%s3] sm:$0xff]
      %v400 = vld [vmem:[%s3 + $0x8] sm:$0xff]
      %402 = vset.pattern.permute.xlu0 0
      %403 = vperm.xlu0 %402, %v399
      %v404 = vpop.permute.xlu0 %403
      %407 = vset.pattern.permute.xlu0 0
      %408 = vperm.xlu0 %407, %v400
      %v409 = vpop.permute.xlu0 %408
      %v411 = vmul.f32 %v395, %v404
      %v412 = vmul.f32 %v396, %v404
      %v413 = vmul.f32 %v397, %v409
      %v414 = vmul.f32 %v398, %v409
      %v415 = vld [vmem:[%s4] sm:$0xff]
      %v416 = vld [vmem:[%s4 + $0x8] sm:$0xff]
      %418 = vset.pattern.permute.xlu0 0
      %419 = vperm.xlu0 %418, %v415
      %v420 = vpop.permute.xlu0 %419
      %423 = vset.pattern.permute.xlu0 0
      %424 = vperm.xlu0 %423, %v416
      %v425 = vpop.permute.xlu0 %424
      %v427 = vadd.f32 %v411, %v420
      %v428 = vadd.f32 %v412, %v420
      %v429 = vadd.f32 %v413, %v425
      %v430 = vadd.f32 %v414, %v425
      %v431 = vmul.f32 %v427, 0.5
      %v432 = vmul.f32 %v428, 0.5
      %v433 = vmul.f32 %v429, 0.5
      %v434 = vmul.f32 %v430, 0.5
      %v435 = vmul.f32 %v427, 0.044715
      %v436 = vmul.f32 %v428, 0.044715
      %v437 = vmul.f32 %v429, 0.044715
      %v438 = vmul.f32 %v430, 0.044715
      %v439 = vmul.f32 %v435, %v427
      %v440 = vmul.f32 %v436, %v428
      %v441 = vmul.f32 %v437, %v429
      %v442 = vmul.f32 %v438, %v430
      %v443 = vmul.f32 %v439, %v427
      %v444 = vmul.f32 %v440, %v428
      %v445 = vmul.f32 %v441, %v429
      %v446 = vmul.f32 %v442, %v430
      %v447 = vadd.f32 %v427, %v443
      %v448 = vadd.f32 %v428, %v444
      %v449 = vadd.f32 %v429, %v445
      %v450 = vadd.f32 %v430, %v446
      %v451 = vmul.f32 %v447, 0.7978846
      %v452 = vmul.f32 %v448, 0.7978846
      %v453 = vmul.f32 %v449, 0.7978846
      %v454 = vmul.f32 %v450, 0.7978846
      %v455 = vtanh.pop %v451
      %v456 = vtanh.pop %v452
      %v457 = vtanh.pop %v453
      %v458 = vtanh.pop %v454
      %v459 = vadd.f32 %v455, 1.0
      %v460 = vadd.f32 %v456, 1.0
      %v461 = vadd.f32 %v457, 1.0
      %v462 = vadd.f32 %v458, 1.0
      %v463 = vmul.f32 %v431, %v459
      %v464 = vmul.f32 %v432, %v460
      %v465 = vmul.f32 %v433, %v461
      %v466 = vmul.f32 %v434, %v462
      %v467 = vpack.c.bf16 %v464, %v463
      %v468 = vpack.c.bf16 %v466, %v465
      %469 = vst [vmem:[%s325] sm:$0xff] %v467
      %470 = vst [vmem:[%s325 + $0x8] sm:$0xff] %v468
      %s471 = smul.u32 2, %s22
      %p472 = scmp.lt.s32.totalorder %s21, 1
      %s473 = scalar_select %p472, %s21, 1
      %p474 = scmp.lt.s32.totalorder %s471, 1
      %s475 = scalar_select %p474, %s471, 1
      %s476 = smul.addr %s473, 4
      %s477 = sadd.s32 %s475, %s476
      %s478 = smul.addr %s477, 4
      %s479 = scalar_lea.vmem %s6, %s478
      // Predicated region
      $region45: #{fno2d_forward.13} parent=43 // pred_check
        %p480 = pneg %p189
      $region46: #{fno2d_forward.13} parent=43 // pred_check_branch
        %482 = sbr.rel (%p480) target = $region48
      $region47: #{fno2d_forward.13} parent=43 // pred_region
        %s483 = smul.u32 2, %s22
      $region48: #{fno2d_forward.13} parent=43 // pred_fallthru
        _
    $region44: #{fno2d_forward.13} parent=5 // pred_fallthru
      _
    %p484 = scmp.le.s32.totalorder 2, %s12
    // Predicated region
    $region49: #{fno2d_forward.13} parent=5 // pred_check
      %p485 = pneg %p484
    $region50: #{fno2d_forward.13} parent=5 // pred_check_branch
      %487 = sbr.rel (%p485) target = $region52
    $region51: #{fno2d_forward.13} parent=5 // pred_region
      %s488 = ssub.s32 %s12, 2
      // Predicated region
      $region53: #{fno2d_forward.13} parent=51 // pred_check
        %p489 = pneg %p195
      $region54: #{fno2d_forward.13} parent=51 // pred_check_branch
        %491 = sbr.rel (%p489) target = $region56
      $region55: #{fno2d_forward.13} parent=51 // pred_region
        %s492 = smul.u32 2, %s24
        %p493 = scmp.lt.s32.totalorder %s23, 1
        %s494 = scalar_select %p493, %s23, 1
        %p495 = scmp.lt.s32.totalorder %s492, 1
        %s496 = scalar_select %p495, %s492, 1
        %s497 = smul.addr %s494, 4
        %s498 = sadd.s32 %s496, %s497
        %s499 = smul.addr %s498, 4
        %s500 = scalar_lea.vmem %s6, %s499
      $region56: #{fno2d_forward.13} parent=51 // pred_fallthru
        _
    $region52: #{fno2d_forward.13} parent=5 // pred_fallthru
      _
  $region6: #{fno2d_forward.13} parent=0 // loop_footer
    %s16 = sadd.s32 1, %s12
  $region7: #{fno2d_forward.13} parent=0 // loop_footer_branch
    %11 = sbr.rel target = $region3
  $region8: #{fno2d_forward.13} parent=0 // loop_exit
    _

// kernel: fno2d_forward.20
$region0: #{fno2d_forward.20}
  #allocation0 [shape = 'u32[]', space=smem, size = 0x4, offset = 0x4, fixed_abs, tag = 'smem constant byte address 0x4 - core index']
  #allocation1 [shape = 'u32[72,128]{1,0:T(1,128)}', space=vmem, size = 0x9000, scoped, tag = 'internal scratch']
  %s0 = inlined_call_operand.vmem [shape: bf16[2,16,256], index: 0, kind: input, shape index: {}]
  %s1 = inlined_call_operand.vmem [shape: bf16[128,16], index: 1, kind: input, shape index: {}]
  %s2 = inlined_call_operand.vmem [shape: f32[128,1], index: 2, kind: input, shape index: {}]
  %s3 = inlined_call_operand.vmem [shape: bf16[2,128,256], index: 3, kind: output, shape index: {}]
  %s4 = sld [smem:[#allocation0]]
  $region45: #{fno2d_forward.20} parent=0
    _
  %s6 = ssub.s32 1, %s4
  %s7 = scalar_select 0, %s6, %s4
  loop: start=0, step=1, limit=4
  $region2: #{fno2d_forward.20} parent=0 // loop_pre_header
    _
  $region3: #{fno2d_forward.20} parent=0 // loop_header
    %s9 = sphi 0, %s13
    %p10 = scmp.ge.s32.totalorder %s9, 4
    %s16 = sphi 0, %s28
    %s17 = sphi 0, %s24
    %s18 = sphi 0, %s16
    %s19 = sphi 0, %s17
    %s20 = sphi 0, %s18
    %s21 = sphi 0, %s19
    %s33 = sphi 0, %s35
    %s36 = sphi 0, %s33
    %s37 = sphi 0, %s36
    %s53 = sphi 0, %s37
    %s57 = sphi 0, %s57
    %s59 = sphi 0, %s57
    %s60 = sphi 0, %s59
    %s74 = sphi 0, %s60
    %s78 = sphi 0, %s78
    %s80 = sphi 0, %s78
    %s81 = sphi 0, %s80
    %s95 = sphi 0, %s81
    %s103 = sphi 0, %s105
    %s106 = sphi 0, %s103
    %s107 = sphi 0, %s106
    %s123 = sphi 0, %s107
  $region4: #{fno2d_forward.20} parent=0 // loop_header_branch
    %12 = sbr.rel (%p10) target = $region8
  $region5: #{fno2d_forward.20} parent=0 // loop_body
    %s14 = ssub.s32 %s9, 1
    %s15 = ssub.s32 %s9, 2
    %s22 = sadd.s32 1, %s17
    %p23 = scmp.ge.s32.totalorder %s22, 1
    %s24 = scalar_select %p23, 0, %s22
    %s25 = sadd.s32 1, %s16
    %s26 = scalar_select %p23, %s25, %s16
    %p27 = scmp.ge.s32.totalorder %s26, 2
    %s28 = scalar_select %p27, 0, %s26
    %s29 = ssub.s32 %s16, %s28
    %s30 = ssub.s32 %s17, %s24
    %s31 = sor.u32 %s29, %s30
    %p32 = scmp.eq.s32.totalorder %s31, 0
    %s34 = sadd.s32 %s33, 1
    %s35 = scalar_select %p32, %s33, %s34
    %p38 = pneg %p32
    %p39 = scmp.eq.s32.totalorder %s9, 1
    %p40 = por %p38, %p39
    %p41 = scmp.ne.s32.totalorder %s33, %s36
    %p42 = scmp.eq.s32.totalorder %s9, 0
    %p43 = por %p41, %p42
    %p44 = scmp.ne.s32.totalorder %s33, %s36
    %p45 = scmp.eq.s32.totalorder %s14, 1
    %p46 = por %p44, %p45
    %p47 = scmp.ne.s32.totalorder %s36, %s37
    %p48 = scmp.eq.s32.totalorder %s14, 0
    %p49 = por %p47, %p48
    %p50 = scmp.ne.s32.totalorder %s36, %s37
    %p51 = scmp.eq.s32.totalorder %s15, 1
    %p52 = por %p50, %p51
    %p54 = scmp.ne.s32.totalorder %s37, %s53
    %p55 = scmp.eq.s32.totalorder %s15, 0
    %p56 = por %p54, %p55
    %s58 = sadd.s32 %s57, 1
    %p61 = scmp.eq.s32.totalorder %s9, 1
    %p62 = scmp.ne.s32.totalorder %s57, %s59
    %p63 = scmp.eq.s32.totalorder %s9, 0
    %p64 = por %p62, %p63
    %p65 = scmp.ne.s32.totalorder %s57, %s59
    %p66 = scmp.eq.s32.totalorder %s14, 1
    %p67 = por %p65, %p66
    %p68 = scmp.ne.s32.totalorder %s59, %s60
    %p69 = scmp.eq.s32.totalorder %s14, 0
    %p70 = por %p68, %p69
    %p71 = scmp.ne.s32.totalorder %s59, %s60
    %p72 = scmp.eq.s32.totalorder %s15, 1
    %p73 = por %p71, %p72
    %p75 = scmp.ne.s32.totalorder %s60, %s74
    %p76 = scmp.eq.s32.totalorder %s15, 0
    %p77 = por %p75, %p76
    %s79 = sadd.s32 %s78, 1
    %p82 = scmp.eq.s32.totalorder %s9, 1
    %p83 = scmp.ne.s32.totalorder %s78, %s80
    %p84 = scmp.eq.s32.totalorder %s9, 0
    %p85 = por %p83, %p84
    %p86 = scmp.ne.s32.totalorder %s78, %s80
    %p87 = scmp.eq.s32.totalorder %s14, 1
    %p88 = por %p86, %p87
    %p89 = scmp.ne.s32.totalorder %s80, %s81
    %p90 = scmp.eq.s32.totalorder %s14, 0
    %p91 = por %p89, %p90
    %p92 = scmp.ne.s32.totalorder %s80, %s81
    %p93 = scmp.eq.s32.totalorder %s15, 1
    %p94 = por %p92, %p93
    %p96 = scmp.ne.s32.totalorder %s81, %s95
    %p97 = scmp.eq.s32.totalorder %s15, 0
    %p98 = por %p96, %p97
    %s99 = ssub.s32 %s16, %s28
    %s100 = ssub.s32 %s17, %s24
    %s101 = sor.u32 %s99, %s100
    %p102 = scmp.eq.s32.totalorder %s101, 0
    %s104 = sadd.s32 %s103, 1
    %s105 = scalar_select %p102, %s103, %s104
    %p108 = pneg %p102
    %p109 = scmp.eq.s32.totalorder %s9, 1
    %p110 = por %p108, %p109
    %p111 = scmp.ne.s32.totalorder %s103, %s106
    %p112 = scmp.eq.s32.totalorder %s9, 0
    %p113 = por %p111, %p112
    %p114 = scmp.ne.s32.totalorder %s103, %s106
    %p115 = scmp.eq.s32.totalorder %s14, 1
    %p116 = por %p114, %p115
    %p117 = scmp.ne.s32.totalorder %s106, %s107
    %p118 = scmp.eq.s32.totalorder %s14, 0
    %p119 = por %p117, %p118
    %p120 = scmp.ne.s32.totalorder %s106, %s107
    %p121 = scmp.eq.s32.totalorder %s15, 1
    %p122 = por %p120, %p121
    %p124 = scmp.ne.s32.totalorder %s107, %s123
    %p125 = scmp.eq.s32.totalorder %s15, 0
    %p126 = por %p124, %p125
    %p127 = scmp.le.s32.totalorder 1, %s9
    %p128 = scmp.lt.s32.totalorder %s9, 3
    %p129 = pnand %p127, %p128
    %p130 = pneg %p129
    // Predicated region
    $region9: #{fno2d_forward.20} parent=5 // pred_check
      _
    $region10: #{fno2d_forward.20} parent=5 // pred_check_branch
      %132 = sbr.rel (%p129) target = $region12
    $region11: #{fno2d_forward.20} parent=5 // pred_region
      %s133 = ssub.s32 %s9, 1
      // Predicated region
      $region13: #{fno2d_forward.20} parent=11 // pred_check
        %p134 = pneg %p70
      $region14: #{fno2d_forward.20} parent=11 // pred_check_branch
        %136 = sbr.rel (%p134) target = $region16
      $region15: #{fno2d_forward.20} parent=11 // pred_region
        _
      $region16: #{fno2d_forward.20} parent=11 // pred_fallthru
        _
      // Predicated region
      $region17: #{fno2d_forward.20} parent=11 // pred_check
        %p137 = pneg %p91
      $region18: #{fno2d_forward.20} parent=11 // pred_check_branch
        %139 = sbr.rel (%p137) target = $region20
      $region19: #{fno2d_forward.20} parent=11 // pred_region
        _
      $region20: #{fno2d_forward.20} parent=11 // pred_fallthru
        _
    $region12: #{fno2d_forward.20} parent=5 // pred_fallthru
      _
    %p140 = scmp.lt.s32.totalorder %s9, 2
    // Predicated region
    $region21: #{fno2d_forward.20} parent=5 // pred_check
      %p141 = pneg %p140
    $region22: #{fno2d_forward.20} parent=5 // pred_check_branch
      %143 = sbr.rel (%p141) target = $region24
    $region23: #{fno2d_forward.20} parent=5 // pred_region
      // Predicated region
      $region25: #{fno2d_forward.20} parent=23 // pred_check
        %p144 = pneg %p43
      $region26: #{fno2d_forward.20} parent=23 // pred_check_branch
        %146 = sbr.rel (%p144) target = $region28
      $region27: #{fno2d_forward.20} parent=23 // pred_region
        %s147 = smul.u32 2, %s17
        %p148 = scmp.lt.s32.totalorder %s16, 1
        %s149 = scalar_select %p148, %s16, 1
        %p150 = scmp.lt.s32.totalorder %s147, 1
        %s151 = scalar_select %p150, %s147, 1
        %s152 = smul.addr %s149, 4
        %s153 = sadd.s32 %s151, %s152
        %s154 = smul.addr %s153, 4
        %s155 = scalar_lea.vmem %s0, %s154
        %s156 = smul.u32 2, %s17
      $region28: #{fno2d_forward.20} parent=23 // pred_fallthru
        _
    $region24: #{fno2d_forward.20} parent=5 // pred_fallthru
      _
    %p157 = scmp.le.s32.totalorder 1, %s9
    %p158 = scmp.lt.s32.totalorder %s9, 3
    %p159 = pnand %p157, %p158
    %p160 = pneg %p159
    // Predicated region
    $region29: #{fno2d_forward.20} parent=5 // pred_check
      _
    $region30: #{fno2d_forward.20} parent=5 // pred_check_branch
      %162 = sbr.rel (%p159) target = $region32
    $region31: #{fno2d_forward.20} parent=5 // pred_region
      %s163 = ssub.s32 %s9, 1
      %s164 = smul.u32 2, %s19
      %p165 = scmp.lt.s32.totalorder %s18, 1
      %s166 = scalar_select %p165, %s18, 1
      %p167 = scmp.lt.s32.totalorder %s164, 1
      %s168 = scalar_select %p167, %s164, 1
      %s169 = smul.addr %s166, 4
      %s170 = sadd.s32 %s168, %s169
      %s171 = smul.addr %s170, 4
      %s172 = scalar_lea.vmem %s0, %s171
      %p173 = pneg %p49
      %p174 = pneg %p46
      %p175 = pneg %p70
      %p176 = pneg %p67
      %p177 = pneg %p91
      %p178 = pneg %p88
      %p179 = pneg %p119
      %p180 = pneg %p116
      %s181 = smul.u32 2, %s19
      %p182 = scmp.lt.s32.totalorder %s18, 1
      %s183 = scalar_select %p182, %s18, 1
      %p184 = scmp.lt.s32.totalorder %s181, 1
      %s185 = scalar_select %p184, %s181, 1
      %s186 = smul.addr %s183, 32
      %s187 = sadd.s32 %s185, %s186
      %s188 = smul.addr %s187, 4
      %s189 = scalar_lea.vmem %s3, %s188
      %s190 = smul.u32 2, %s19
      %p191 = scmp.lt.s32.totalorder %s18, 1
      %s192 = scalar_select %p191, %s18, 1
      %p193 = scmp.lt.s32.totalorder %s190, 1
      %s194 = scalar_select %p193, %s190, 1
      %s195 = smul.addr %s192, 4
      %s196 = sadd.s32 %s194, %s195
      %s197 = smul.addr %s196, 4
      %s198 = scalar_lea.vmem %s0, %s197
      %s199 = smul.u32 2, %s19
      %s200 = smul.u32 2, %s19
      %p201 = scmp.lt.s32.totalorder %s18, 1
      %s202 = scalar_select %p201, %s18, 1
      %p203 = scmp.lt.s32.totalorder %s200, 1
      %s204 = scalar_select %p203, %s200, 1
      %s205 = smul.addr %s202, 32
      %s206 = sadd.s32 %s204, %s205
      %s207 = smul.addr %s206, 4
      %s208 = scalar_lea.vmem %s3, %s207
      %s209 = smul.u32 2, %s19
      %v211 = vld [vmem:[%s198] sm:$0xff]
      %v212 = vld [vmem:[%s198 + $0x8] sm:$0xff]
      %v213 = vld [vmem:[%s1] sm:$0xf]
      %v214 = vld [vmem:[%s1 + $0x4] sm:$0xf]
      %v215 = vld [vmem:[%s1 + $0x8] sm:$0xf]
      %v216 = vld [vmem:[%s1 + $0xc] sm:$0xf]
      %v217 = vld [vmem:[%s1 + $0x10] sm:$0xf]
      %v218 = vld [vmem:[%s1 + $0x14] sm:$0xf]
      %v219 = vld [vmem:[%s1 + $0x18] sm:$0xf]
      %v220 = vld [vmem:[%s1 + $0x1c] sm:$0xf]
      %v221 = vld [vmem:[%s1 + $0x20] sm:$0xf]
      %v222 = vld [vmem:[%s1 + $0x24] sm:$0xf]
      %v223 = vld [vmem:[%s1 + $0x28] sm:$0xf]
      %v224 = vld [vmem:[%s1 + $0x2c] sm:$0xf]
      %v225 = vld [vmem:[%s1 + $0x30] sm:$0xf]
      %v226 = vld [vmem:[%s1 + $0x34] sm:$0xf]
      %v227 = vld [vmem:[%s1 + $0x38] sm:$0xf]
      %v228 = vld [vmem:[%s1 + $0x3c] sm:$0xf]
      %v229 = vld [vmem:[%s2] sm:$0xff]
      %v230 = vld [vmem:[%s2 + $0x8] sm:$0xff]
      %v231 = vld [vmem:[%s2 + $0x10] sm:$0xff]
      %v232 = vld [vmem:[%s2 + $0x18] sm:$0xff]
      %v233 = vld [vmem:[%s2 + $0x20] sm:$0xff]
      %v234 = vld [vmem:[%s2 + $0x28] sm:$0xff]
      %v235 = vld [vmem:[%s2 + $0x30] sm:$0xff]
      %v236 = vld [vmem:[%s2 + $0x38] sm:$0xff]
      %v237 = vld [vmem:[%s2 + $0x40] sm:$0xff]
      %v238 = vld [vmem:[%s2 + $0x48] sm:$0xff]
      %v239 = vld [vmem:[%s2 + $0x50] sm:$0xff]
      %v240 = vld [vmem:[%s2 + $0x58] sm:$0xff]
      %v241 = vld [vmem:[%s2 + $0x60] sm:$0xff]
      %v242 = vld [vmem:[%s2 + $0x68] sm:$0xff]
      %v243 = vld [vmem:[%s2 + $0x70] sm:$0xff]
      %v244 = vld [vmem:[%s2 + $0x78] sm:$0xff]
      %246 = vset.pattern.permute.xlu0 0
      %247 = vperm.xlu0 %246, %v229
      %v248 = vpop.permute.xlu0 %247
      %251 = vset.pattern.permute.xlu0 0
      %252 = vperm.xlu0 %251, %v230
      %v253 = vpop.permute.xlu0 %252
      %256 = vset.pattern.permute.xlu0 0
      %257 = vperm.xlu0 %256, %v231
      %v258 = vpop.permute.xlu0 %257
      %261 = vset.pattern.permute.xlu0 0
      %262 = vperm.xlu0 %261, %v232
      %v263 = vpop.permute.xlu0 %262
      %266 = vset.pattern.permute.xlu0 0
      %267 = vperm.xlu0 %266, %v233
      %v268 = vpop.permute.xlu0 %267
      %271 = vset.pattern.permute.xlu0 0
      %272 = vperm.xlu0 %271, %v234
      %v273 = vpop.permute.xlu0 %272
      %276 = vset.pattern.permute.xlu0 0
      %277 = vperm.xlu0 %276, %v235
      %v278 = vpop.permute.xlu0 %277
      %281 = vset.pattern.permute.xlu0 0
      %282 = vperm.xlu0 %281, %v236
      %v283 = vpop.permute.xlu0 %282
      %286 = vset.pattern.permute.xlu0 0
      %287 = vperm.xlu0 %286, %v237
      %v288 = vpop.permute.xlu0 %287
      %291 = vset.pattern.permute.xlu0 0
      %292 = vperm.xlu0 %291, %v238
      %v293 = vpop.permute.xlu0 %292
      %296 = vset.pattern.permute.xlu0 0
      %297 = vperm.xlu0 %296, %v239
      %v298 = vpop.permute.xlu0 %297
      %301 = vset.pattern.permute.xlu0 0
      %302 = vperm.xlu0 %301, %v240
      %v303 = vpop.permute.xlu0 %302
      %306 = vset.pattern.permute.xlu0 0
      %307 = vperm.xlu0 %306, %v241
      %v308 = vpop.permute.xlu0 %307
      %311 = vset.pattern.permute.xlu0 0
      %312 = vperm.xlu0 %311, %v242
      %v313 = vpop.permute.xlu0 %312
      %316 = vset.pattern.permute.xlu0 0
      %317 = vperm.xlu0 %316, %v243
      %v318 = vpop.permute.xlu0 %317
      %321 = vset.pattern.permute.xlu0 0
      %322 = vperm.xlu0 %321, %v244
      %v323 = vpop.permute.xlu0 %322
      %v341 = vunpack.c.l.b16 %v213
      %v342 = vunpack.c.l.b16 %v214
      %v343 = vunpack.c.l.b16 %v215
      %v344 = vunpack.c.l.b16 %v216
      %v345 = vunpack.c.l.b16 %v217
      %v346 = vunpack.c.l.b16 %v218
      %v347 = vunpack.c.l.b16 %v219
      %v348 = vunpack.c.l.b16 %v220
      %v349 = vunpack.c.l.b16 %v221
      %v350 = vunpack.c.l.b16 %v222
      %v351 = vunpack.c.l.b16 %v223
      %v352 = vunpack.c.l.b16 %v224
      %v353 = vunpack.c.l.b16 %v225
      %v354 = vunpack.c.l.b16 %v226
      %v355 = vunpack.c.l.b16 %v227
      %v356 = vunpack.c.l.b16 %v228
      %v357 = vpack.c.b16 %v342, %v341
      %v358 = vpack.c.b16 %v344, %v343
      %v359 = vpack.c.b16 %v346, %v345
      %v360 = vpack.c.b16 %v348, %v347
      %v361 = vpack.c.b16 %v350, %v349
      %v362 = vpack.c.b16 %v352, %v351
      %v363 = vpack.c.b16 %v354, %v353
      %v364 = vpack.c.b16 %v356, %v355
      %v367 = vunpack.c.l.b16 %v211
      %v368 = vunpack.c.h.b16 %v211
      %v369 = vunpack.c.l.b16 %v212
      %v370 = vunpack.c.h.b16 %v212
      %v371 = vpack.c.b16 %v369, %v367
      %v372 = vpack.c.b16 %v370, %v368
      %vm375 = vcmask 130048
      %v377 = vsel %vm375, %v357, 0
      %v380 = vsel %vm375, %v358, 0
      %v383 = vsel %vm375, %v359, 0
      %v386 = vsel %vm375, %v360, 0
      %v389 = vsel %vm375, %v361, 0
      %v392 = vsel %vm375, %v362, 0
      %v395 = vsel %vm375, %v363, 0
      %v398 = vsel %vm375, %v364, 0
      %400 = vmatpush.bf16.msra.mxu0 0
      %401 = vmatpush.bf16.msra.mxu0 0
      %402 = vmatpush.bf16.msra.mxu0 0
      %403 = vmatpush.bf16.msra.mxu0 0
      %404 = vmatpush.bf16.msra.mxu0 0
      %405 = vmatpush.bf16.msra.mxu0 0
      %406 = vmatpush.bf16.msra.mxu0 0
      %407 = vmatpush.bf16.msra.mxu0 %v371
      %408 = vmatmul.bf16.gmra.mxu0 %v377
      %v409 = vpop.f32.mrf.mxu0
      %v410 = vadd.f32 %v248, %v409
      %v411 = vpop.f32.mrf.mxu0
      %v412 = vadd.f32 %v253, %v411
      %413 = vmatmul.bf16.gmra.mxu0 %v380
      %v414 = vpop.f32.mrf.mxu0
      %v415 = vadd.f32 %v258, %v414
      %v416 = vpop.f32.mrf.mxu0
      %v417 = vadd.f32 %v263, %v416
      %418 = vmatmul.bf16.gmra.mxu0 %v383
      %v419 = vpop.f32.mrf.mxu0
      %v420 = vadd.f32 %v268, %v419
      %v421 = vpop.f32.mrf.mxu0
      %v422 = vadd.f32 %v273, %v421
      %423 = vmatmul.bf16.gmra.mxu0 %v386
      %v424 = vpop.f32.mrf.mxu0
      %v425 = vadd.f32 %v278, %v424
      %v426 = vpop.f32.mrf.mxu0
      %v427 = vadd.f32 %v283, %v426
      %428 = vmatmul.bf16.gmra.mxu0 %v389
      %v429 = vpop.f32.mrf.mxu0
      %v430 = vadd.f32 %v288, %v429
      %v431 = vpop.f32.mrf.mxu0
      %v432 = vadd.f32 %v293, %v431
      %433 = vmatmul.bf16.gmra.mxu0 %v392
      %v434 = vpop.f32.mrf.mxu0
      %v435 = vadd.f32 %v298, %v434
      %v436 = vpop.f32.mrf.mxu0
      %v437 = vadd.f32 %v303, %v436
      %438 = vmatmul.bf16.gmra.mxu0 %v395
      %v439 = vpop.f32.mrf.mxu0
      %v440 = vadd.f32 %v308, %v439
      %v441 = vpop.f32.mrf.mxu0
      %v442 = vadd.f32 %v313, %v441
      %443 = vmatmul.bf16.gmra.mxu0 %v398
      %v444 = vpop.f32.mrf.mxu0
      %v445 = vadd.f32 %v318, %v444
      %v446 = vpop.f32.mrf.mxu0
      %v447 = vadd.f32 %v323, %v446
      %448 = vdwg.mxu0
      %449 = vmatpush.bf16.msra.mxu0 0
      %450 = vmatpush.bf16.msra.mxu0 0
      %451 = vmatpush.bf16.msra.mxu0 0
      %452 = vmatpush.bf16.msra.mxu0 0
      %453 = vmatpush.bf16.msra.mxu0 0
      %454 = vmatpush.bf16.msra.mxu0 0
      %455 = vmatpush.bf16.msra.mxu0 0
      %456 = vmatpush.bf16.msra.mxu0 %v372
      %457 = vmatmul.bf16.gmra.mxu0 %v377
      %v458 = vpop.f32.mrf.mxu0
      %v459 = vadd.f32 %v248, %v458
      %v460 = vpop.f32.mrf.mxu0
      %v461 = vadd.f32 %v253, %v460
      %462 = vmatmul.bf16.gmra.mxu0 %v380
      %v463 = vpop.f32.mrf.mxu0
      %v464 = vadd.f32 %v258, %v463
      %v465 = vpop.f32.mrf.mxu0
      %v466 = vadd.f32 %v263, %v465
      %467 = vmatmul.bf16.gmra.mxu0 %v383
      %v468 = vpop.f32.mrf.mxu0
      %v469 = vadd.f32 %v268, %v468
      %v470 = vpop.f32.mrf.mxu0
      %v471 = vadd.f32 %v273, %v470
      %472 = vmatmul.bf16.gmra.mxu0 %v386
      %v473 = vpop.f32.mrf.mxu0
      %v474 = vadd.f32 %v278, %v473
      %v475 = vpop.f32.mrf.mxu0
      %v476 = vadd.f32 %v283, %v475
      %477 = vmatmul.bf16.gmra.mxu0 %v389
      %v478 = vpop.f32.mrf.mxu0
      %v479 = vadd.f32 %v288, %v478
      %v480 = vpop.f32.mrf.mxu0
      %v481 = vadd.f32 %v293, %v480
      %482 = vmatmul.bf16.gmra.mxu0 %v392
      %v483 = vpop.f32.mrf.mxu0
      %v484 = vadd.f32 %v298, %v483
      %v485 = vpop.f32.mrf.mxu0
      %v486 = vadd.f32 %v303, %v485
      %487 = vmatmul.bf16.gmra.mxu0 %v395
      %v488 = vpop.f32.mrf.mxu0
      %v489 = vadd.f32 %v308, %v488
      %v490 = vpop.f32.mrf.mxu0
      %v491 = vadd.f32 %v313, %v490
      %492 = vmatmul.bf16.gmra.mxu0 %v398
      %v493 = vpop.f32.mrf.mxu0
      %v494 = vadd.f32 %v318, %v493
      %v495 = vpop.f32.mrf.mxu0
      %v496 = vadd.f32 %v323, %v495
      %497 = vdwg.mxu0
      %v498 = vmul.f32 %v410, 0.5
      %v499 = vmul.f32 %v459, 0.5
      %v500 = vmul.f32 %v412, 0.5
      %v501 = vmul.f32 %v461, 0.5
      %v502 = vmul.f32 %v415, 0.5
      %v503 = vmul.f32 %v464, 0.5
      %v504 = vmul.f32 %v417, 0.5
      %v505 = vmul.f32 %v466, 0.5
      %v506 = vmul.f32 %v420, 0.5
      %v507 = vmul.f32 %v469, 0.5
      %v508 = vmul.f32 %v422, 0.5
      %v509 = vmul.f32 %v471, 0.5
      %v510 = vmul.f32 %v425, 0.5
      %v511 = vmul.f32 %v474, 0.5
      %v512 = vmul.f32 %v427, 0.5
      %v513 = vmul.f32 %v476, 0.5
      %v514 = vmul.f32 %v430, 0.5
      %v515 = vmul.f32 %v479, 0.5
      %v516 = vmul.f32 %v432, 0.5
      %v517 = vmul.f32 %v481, 0.5
      %v518 = vmul.f32 %v435, 0.5
      %v519 = vmul.f32 %v484, 0.5
      %v520 = vmul.f32 %v437, 0.5
      %v521 = vmul.f32 %v486, 0.5
      %v522 = vmul.f32 %v440, 0.5
      %v523 = vmul.f32 %v489, 0.5
      %v524 = vmul.f32 %v442, 0.5
      %v525 = vmul.f32 %v491, 0.5
      %v526 = vmul.f32 %v445, 0.5
      %v527 = vmul.f32 %v494, 0.5
      %v528 = vmul.f32 %v447, 0.5
      %v529 = vmul.f32 %v496, 0.5
      %v530 = vmul.f32 %v410, 0.044715
      %v531 = vmul.f32 %v459, 0.044715
      %v532 = vmul.f32 %v412, 0.044715
      %v533 = vmul.f32 %v461, 0.044715
      %v534 = vmul.f32 %v415, 0.044715
      %v535 = vmul.f32 %v464, 0.044715
      %v536 = vmul.f32 %v417, 0.044715
      %v537 = vmul.f32 %v466, 0.044715
      %v538 = vmul.f32 %v420, 0.044715
      %v539 = vmul.f32 %v469, 0.044715
      %v540 = vmul.f32 %v422, 0.044715
      %v541 = vmul.f32 %v471, 0.044715
      %v542 = vmul.f32 %v425, 0.044715
      %v543 = vmul.f32 %v474, 0.044715
      %v544 = vmul.f32 %v427, 0.044715
      %v545 = vmul.f32 %v476, 0.044715
      %v546 = vmul.f32 %v430, 0.044715
      %v547 = vmul.f32 %v479, 0.044715
      %v548 = vmul.f32 %v432, 0.044715
      %v549 = vmul.f32 %v481, 0.044715
      %v550 = vmul.f32 %v435, 0.044715
      %v551 = vmul.f32 %v484, 0.044715
      %v552 = vmul.f32 %v437, 0.044715
      %v553 = vmul.f32 %v486, 0.044715
      %v554 = vmul.f32 %v440, 0.044715
      %v555 = vmul.f32 %v489, 0.044715
      %v556 = vmul.f32 %v442, 0.044715
      %v557 = vmul.f32 %v491, 0.044715
      %v558 = vmul.f32 %v445, 0.044715
      %v559 = vmul.f32 %v494, 0.044715
      %v560 = vmul.f32 %v447, 0.044715
      %v561 = vmul.f32 %v496, 0.044715
      %v562 = vmul.f32 %v530, %v410
      %v563 = vmul.f32 %v531, %v459
      %v564 = vmul.f32 %v532, %v412
      %v565 = vmul.f32 %v533, %v461
      %v566 = vmul.f32 %v534, %v415
      %v567 = vmul.f32 %v535, %v464
      %v568 = vmul.f32 %v536, %v417
      %v569 = vmul.f32 %v537, %v466
      %v570 = vmul.f32 %v538, %v420
      %v571 = vmul.f32 %v539, %v469
      %v572 = vmul.f32 %v540, %v422
      %v573 = vmul.f32 %v541, %v471
      %v574 = vmul.f32 %v542, %v425
      %v575 = vmul.f32 %v543, %v474
      %v576 = vmul.f32 %v544, %v427
      %v577 = vmul.f32 %v545, %v476
      %v578 = vmul.f32 %v546, %v430
      %v579 = vmul.f32 %v547, %v479
      %v580 = vmul.f32 %v548, %v432
      %v581 = vmul.f32 %v549, %v481
      %v582 = vmul.f32 %v550, %v435
      %v583 = vmul.f32 %v551, %v484
      %v584 = vmul.f32 %v552, %v437
      %v585 = vmul.f32 %v553, %v486
      %v586 = vmul.f32 %v554, %v440
      %v587 = vmul.f32 %v555, %v489
      %v588 = vmul.f32 %v556, %v442
      %v589 = vmul.f32 %v557, %v491
      %v590 = vmul.f32 %v558, %v445
      %v591 = vmul.f32 %v559, %v494
      %v592 = vmul.f32 %v560, %v447
      %v593 = vmul.f32 %v561, %v496
      %v594 = vmul.f32 %v562, %v410
      %v595 = vmul.f32 %v563, %v459
      %v596 = vmul.f32 %v564, %v412
      %v597 = vmul.f32 %v565, %v461
      %v598 = vmul.f32 %v566, %v415
      %v599 = vmul.f32 %v567, %v464
      %v600 = vmul.f32 %v568, %v417
      %v601 = vmul.f32 %v569, %v466
      %v602 = vmul.f32 %v570, %v420
      %v603 = vmul.f32 %v571, %v469
      %v604 = vmul.f32 %v572, %v422
      %v605 = vmul.f32 %v573, %v471
      %v606 = vmul.f32 %v574, %v425
      %v607 = vmul.f32 %v575, %v474
      %v608 = vmul.f32 %v576, %v427
      %v609 = vmul.f32 %v577, %v476
      %v610 = vmul.f32 %v578, %v430
      %v611 = vmul.f32 %v579, %v479
      %v612 = vmul.f32 %v580, %v432
      %v613 = vmul.f32 %v581, %v481
      %v614 = vmul.f32 %v582, %v435
      %v615 = vmul.f32 %v583, %v484
      %v616 = vmul.f32 %v584, %v437
      %v617 = vmul.f32 %v585, %v486
      %v618 = vmul.f32 %v586, %v440
      %v619 = vmul.f32 %v587, %v489
      %v620 = vmul.f32 %v588, %v442
      %v621 = vmul.f32 %v589, %v491
      %v622 = vmul.f32 %v590, %v445
      %v623 = vmul.f32 %v591, %v494
      %v624 = vmul.f32 %v592, %v447
      %v625 = vmul.f32 %v593, %v496
      %v626 = vadd.f32 %v410, %v594
      %v627 = vadd.f32 %v459, %v595
      %v628 = vadd.f32 %v412, %v596
      %v629 = vadd.f32 %v461, %v597
      %v630 = vadd.f32 %v415, %v598
      %v631 = vadd.f32 %v464, %v599
      %v632 = vadd.f32 %v417, %v600
      %v633 = vadd.f32 %v466, %v601
      %v634 = vadd.f32 %v420, %v602
      %v635 = vadd.f32 %v469, %v603
      %v636 = vadd.f32 %v422, %v604
      %v637 = vadd.f32 %v471, %v605
      %v638 = vadd.f32 %v425, %v606
      %v639 = vadd.f32 %v474, %v607
      %v640 = vadd.f32 %v427, %v608
      %v641 = vadd.f32 %v476, %v609
      %v642 = vadd.f32 %v430, %v610
      %v643 = vadd.f32 %v479, %v611
      %v644 = vadd.f32 %v432, %v612
      %v645 = vadd.f32 %v481, %v613
      %v646 = vadd.f32 %v435, %v614
      %v647 = vadd.f32 %v484, %v615
      %v648 = vadd.f32 %v437, %v616
      %v649 = vadd.f32 %v486, %v617
      %v650 = vadd.f32 %v440, %v618
      %v651 = vadd.f32 %v489, %v619
      %v652 = vadd.f32 %v442, %v620
      %v653 = vadd.f32 %v491, %v621
      %v654 = vadd.f32 %v445, %v622
      %v655 = vadd.f32 %v494, %v623
      %v656 = vadd.f32 %v447, %v624
      %v657 = vadd.f32 %v496, %v625
      %v658 = vmul.f32 %v626, 0.7978846
      %v659 = vmul.f32 %v627, 0.7978846
      %v660 = vmul.f32 %v628, 0.7978846
      %v661 = vmul.f32 %v629, 0.7978846
      %v662 = vmul.f32 %v630, 0.7978846
      %v663 = vmul.f32 %v631, 0.7978846
      %v664 = vmul.f32 %v632, 0.7978846
      %v665 = vmul.f32 %v633, 0.7978846
      %v666 = vmul.f32 %v634, 0.7978846
      %v667 = vmul.f32 %v635, 0.7978846
      %v668 = vmul.f32 %v636, 0.7978846
      %v669 = vmul.f32 %v637, 0.7978846
      %v670 = vmul.f32 %v638, 0.7978846
      %v671 = vmul.f32 %v639, 0.7978846
      %v672 = vmul.f32 %v640, 0.7978846
      %v673 = vmul.f32 %v641, 0.7978846
      %v674 = vmul.f32 %v642, 0.7978846
      %v675 = vmul.f32 %v643, 0.7978846
      %v676 = vmul.f32 %v644, 0.7978846
      %v677 = vmul.f32 %v645, 0.7978846
      %v678 = vmul.f32 %v646, 0.7978846
      %v679 = vmul.f32 %v647, 0.7978846
      %v680 = vmul.f32 %v648, 0.7978846
      %v681 = vmul.f32 %v649, 0.7978846
      %v682 = vmul.f32 %v650, 0.7978846
      %v683 = vmul.f32 %v651, 0.7978846
      %v684 = vmul.f32 %v652, 0.7978846
      %v685 = vmul.f32 %v653, 0.7978846
      %v686 = vmul.f32 %v654, 0.7978846
      %v687 = vmul.f32 %v655, 0.7978846
      %v688 = vmul.f32 %v656, 0.7978846
      %v689 = vmul.f32 %v657, 0.7978846
      %v690 = vtanh.pop %v658
      %v691 = vtanh.pop %v659
      %v692 = vtanh.pop %v660
      %v693 = vtanh.pop %v661
      %v694 = vtanh.pop %v662
      %v695 = vtanh.pop %v663
      %v696 = vtanh.pop %v664
      %v697 = vtanh.pop %v665
      %v698 = vtanh.pop %v666
      %v699 = vtanh.pop %v667
      %v700 = vtanh.pop %v668
      %v701 = vtanh.pop %v669
      %v702 = vtanh.pop %v670
      %v703 = vtanh.pop %v671
      %v704 = vtanh.pop %v672
      %v705 = vtanh.pop %v673
      %v706 = vtanh.pop %v674
      %v707 = vtanh.pop %v675
      %v708 = vtanh.pop %v676
      %v709 = vtanh.pop %v677
      %v710 = vtanh.pop %v678
      %v711 = vtanh.pop %v679
      %v712 = vtanh.pop %v680
      %v713 = vtanh.pop %v681
      %v714 = vtanh.pop %v682
      %v715 = vtanh.pop %v683
      %v716 = vtanh.pop %v684
      %v717 = vtanh.pop %v685
      %v718 = vtanh.pop %v686
      %v719 = vtanh.pop %v687
      %v720 = vtanh.pop %v688
      %v721 = vtanh.pop %v689
      %v722 = vadd.f32 %v690, 1.0
      %v723 = vadd.f32 %v691, 1.0
      %v724 = vadd.f32 %v692, 1.0
      %v725 = vadd.f32 %v693, 1.0
      %v726 = vadd.f32 %v694, 1.0
      %v727 = vadd.f32 %v695, 1.0
      %v728 = vadd.f32 %v696, 1.0
      %v729 = vadd.f32 %v697, 1.0
      %v730 = vadd.f32 %v698, 1.0
      %v731 = vadd.f32 %v699, 1.0
      %v732 = vadd.f32 %v700, 1.0
      %v733 = vadd.f32 %v701, 1.0
      %v734 = vadd.f32 %v702, 1.0
      %v735 = vadd.f32 %v703, 1.0
      %v736 = vadd.f32 %v704, 1.0
      %v737 = vadd.f32 %v705, 1.0
      %v738 = vadd.f32 %v706, 1.0
      %v739 = vadd.f32 %v707, 1.0
      %v740 = vadd.f32 %v708, 1.0
      %v741 = vadd.f32 %v709, 1.0
      %v742 = vadd.f32 %v710, 1.0
      %v743 = vadd.f32 %v711, 1.0
      %v744 = vadd.f32 %v712, 1.0
      %v745 = vadd.f32 %v713, 1.0
      %v746 = vadd.f32 %v714, 1.0
      %v747 = vadd.f32 %v715, 1.0
      %v748 = vadd.f32 %v716, 1.0
      %v749 = vadd.f32 %v717, 1.0
      %v750 = vadd.f32 %v718, 1.0
      %v751 = vadd.f32 %v719, 1.0
      %v752 = vadd.f32 %v720, 1.0
      %v753 = vadd.f32 %v721, 1.0
      %v754 = vmul.f32 %v498, %v722
      %v755 = vmul.f32 %v499, %v723
      %v756 = vmul.f32 %v500, %v724
      %v757 = vmul.f32 %v501, %v725
      %v758 = vmul.f32 %v502, %v726
      %v759 = vmul.f32 %v503, %v727
      %v760 = vmul.f32 %v504, %v728
      %v761 = vmul.f32 %v505, %v729
      %v762 = vmul.f32 %v506, %v730
      %v763 = vmul.f32 %v507, %v731
      %v764 = vmul.f32 %v508, %v732
      %v765 = vmul.f32 %v509, %v733
      %v766 = vmul.f32 %v510, %v734
      %v767 = vmul.f32 %v511, %v735
      %v768 = vmul.f32 %v512, %v736
      %v769 = vmul.f32 %v513, %v737
      %v770 = vmul.f32 %v514, %v738
      %v771 = vmul.f32 %v515, %v739
      %v772 = vmul.f32 %v516, %v740
      %v773 = vmul.f32 %v517, %v741
      %v774 = vmul.f32 %v518, %v742
      %v775 = vmul.f32 %v519, %v743
      %v776 = vmul.f32 %v520, %v744
      %v777 = vmul.f32 %v521, %v745
      %v778 = vmul.f32 %v522, %v746
      %v779 = vmul.f32 %v523, %v747
      %v780 = vmul.f32 %v524, %v748
      %v781 = vmul.f32 %v525, %v749
      %v782 = vmul.f32 %v526, %v750
      %v783 = vmul.f32 %v527, %v751
      %v784 = vmul.f32 %v528, %v752
      %v785 = vmul.f32 %v529, %v753
      %v786 = vpack.c.bf16 %v755, %v754
      %v787 = vpack.c.bf16 %v757, %v756
      %v788 = vpack.c.bf16 %v759, %v758
      %v789 = vpack.c.bf16 %v761, %v760
      %v790 = vpack.c.bf16 %v763, %v762
      %v791 = vpack.c.bf16 %v765, %v764
      %v792 = vpack.c.bf16 %v767, %v766
      %v793 = vpack.c.bf16 %v769, %v768
      %v794 = vpack.c.bf16 %v771, %v770
      %v795 = vpack.c.bf16 %v773, %v772
      %v796 = vpack.c.bf16 %v775, %v774
      %v797 = vpack.c.bf16 %v777, %v776
      %v798 = vpack.c.bf16 %v779, %v778
      %v799 = vpack.c.bf16 %v781, %v780
      %v800 = vpack.c.bf16 %v783, %v782
      %v801 = vpack.c.bf16 %v785, %v784
      %802 = vst [vmem:[%s208] sm:$0xff] %v786
      %803 = vst [vmem:[%s208 + $0x8] sm:$0xff] %v787
      %804 = vst [vmem:[%s208 + $0x10] sm:$0xff] %v788
      %805 = vst [vmem:[%s208 + $0x18] sm:$0xff] %v789
      %806 = vst [vmem:[%s208 + $0x20] sm:$0xff] %v790
      %807 = vst [vmem:[%s208 + $0x28] sm:$0xff] %v791
      %808 = vst [vmem:[%s208 + $0x30] sm:$0xff] %v792
      %809 = vst [vmem:[%s208 + $0x38] sm:$0xff] %v793
      %810 = vst [vmem:[%s208 + $0x40] sm:$0xff] %v794
      %811 = vst [vmem:[%s208 + $0x48] sm:$0xff] %v795
      %812 = vst [vmem:[%s208 + $0x50] sm:$0xff] %v796
      %813 = vst [vmem:[%s208 + $0x58] sm:$0xff] %v797
      %814 = vst [vmem:[%s208 + $0x60] sm:$0xff] %v798
      %815 = vst [vmem:[%s208 + $0x68] sm:$0xff] %v799
      %816 = vst [vmem:[%s208 + $0x70] sm:$0xff] %v800
      %817 = vst [vmem:[%s208 + $0x78] sm:$0xff] %v801
      %s818 = smul.u32 2, %s19
      %p819 = scmp.lt.s32.totalorder %s18, 1
      %s820 = scalar_select %p819, %s18, 1
      %p821 = scmp.lt.s32.totalorder %s818, 1
      %s822 = scalar_select %p821, %s818, 1
      %s823 = smul.addr %s820, 32
      %s824 = sadd.s32 %s822, %s823
      %s825 = smul.addr %s824, 4
      %s826 = scalar_lea.vmem %s3, %s825
      // Predicated region
      $region33: #{fno2d_forward.20} parent=31 // pred_check
        %p827 = pneg %p116
      $region34: #{fno2d_forward.20} parent=31 // pred_check_branch
        %829 = sbr.rel (%p827) target = $region36
      $region35: #{fno2d_forward.20} parent=31 // pred_region
        %s830 = smul.u32 2, %s19
      $region36: #{fno2d_forward.20} parent=31 // pred_fallthru
        _
    $region32: #{fno2d_forward.20} parent=5 // pred_fallthru
      _
    %p831 = scmp.le.s32.totalorder 2, %s9
    // Predicated region
    $region37: #{fno2d_forward.20} parent=5 // pred_check
      %p832 = pneg %p831
    $region38: #{fno2d_forward.20} parent=5 // pred_check_branch
      %834 = sbr.rel (%p832) target = $region40
    $region39: #{fno2d_forward.20} parent=5 // pred_region
      %s835 = ssub.s32 %s9, 2
      // Predicated region
      $region41: #{fno2d_forward.20} parent=39 // pred_check
        %p836 = pneg %p122
      $region42: #{fno2d_forward.20} parent=39 // pred_check_branch
        %838 = sbr.rel (%p836) target = $region44
      $region43: #{fno2d_forward.20} parent=39 // pred_region
        %s839 = smul.u32 2, %s21
        %p840 = scmp.lt.s32.totalorder %s20, 1
        %s841 = scalar_select %p840, %s20, 1
        %p842 = scmp.lt.s32.totalorder %s839, 1
        %s843 = scalar_select %p842, %s839, 1
        %s844 = smul.addr %s841, 32
        %s845 = sadd.s32 %s843, %s844
        %s846 = smul.addr %s845, 4
        %s847 = scalar_lea.vmem %s3, %s846
      $region44: #{fno2d_forward.20} parent=39 // pred_fallthru
        _
    $region40: #{fno2d_forward.20} parent=5 // pred_fallthru
      _
  $region6: #{fno2d_forward.20} parent=0 // loop_footer
    %s13 = sadd.s32 1, %s9
  $region7: #{fno2d_forward.20} parent=0 // loop_footer_branch
    %8 = sbr.rel target = $region3
  $region8: #{fno2d_forward.20} parent=0 // loop_exit
    _

// kernel: fno2d_forward.21
$region0: #{fno2d_forward.21}
  #allocation0 [shape = 'u32[]', space=smem, size = 0x4, offset = 0x4, fixed_abs, tag = 'smem constant byte address 0x4 - core index']
  #allocation1 [shape = 'u32[72,128]{1,0:T(1,128)}', space=vmem, size = 0x9000, scoped, tag = 'internal scratch']
  %s0 = inlined_call_operand.vmem [shape: bf16[2,128,256], index: 0, kind: input, shape index: {}]
  %s1 = inlined_call_operand.vmem [shape: bf16[4,128], index: 1, kind: input, shape index: {}]
  %s2 = inlined_call_operand.vmem [shape: f32[4,1], index: 2, kind: input, shape index: {}]
  %s3 = inlined_call_operand.vmem [shape: f32[2,4,256], index: 3, kind: output, shape index: {}]
  %s4 = sld [smem:[#allocation0]]
  $region45: #{fno2d_forward.21} parent=0
    _
  %s6 = ssub.s32 1, %s4
  %s7 = scalar_select 0, %s6, %s4
  loop: start=0, step=1, limit=4
  $region2: #{fno2d_forward.21} parent=0 // loop_pre_header
    _
  $region3: #{fno2d_forward.21} parent=0 // loop_header
    %s9 = sphi 0, %s13
    %p10 = scmp.ge.s32.totalorder %s9, 4
    %s16 = sphi 0, %s28
    %s17 = sphi 0, %s24
    %s18 = sphi 0, %s16
    %s19 = sphi 0, %s17
    %s20 = sphi 0, %s18
    %s21 = sphi 0, %s19
    %s33 = sphi 0, %s35
    %s36 = sphi 0, %s33
    %s37 = sphi 0, %s36
    %s53 = sphi 0, %s37
    %s57 = sphi 0, %s57
    %s59 = sphi 0, %s57
    %s60 = sphi 0, %s59
    %s74 = sphi 0, %s60
    %s78 = sphi 0, %s78
    %s80 = sphi 0, %s78
    %s81 = sphi 0, %s80
    %s95 = sphi 0, %s81
    %s103 = sphi 0, %s105
    %s106 = sphi 0, %s103
    %s107 = sphi 0, %s106
    %s123 = sphi 0, %s107
  $region4: #{fno2d_forward.21} parent=0 // loop_header_branch
    %12 = sbr.rel (%p10) target = $region8
  $region5: #{fno2d_forward.21} parent=0 // loop_body
    %s14 = ssub.s32 %s9, 1
    %s15 = ssub.s32 %s9, 2
    %s22 = sadd.s32 1, %s17
    %p23 = scmp.ge.s32.totalorder %s22, 1
    %s24 = scalar_select %p23, 0, %s22
    %s25 = sadd.s32 1, %s16
    %s26 = scalar_select %p23, %s25, %s16
    %p27 = scmp.ge.s32.totalorder %s26, 2
    %s28 = scalar_select %p27, 0, %s26
    %s29 = ssub.s32 %s16, %s28
    %s30 = ssub.s32 %s17, %s24
    %s31 = sor.u32 %s29, %s30
    %p32 = scmp.eq.s32.totalorder %s31, 0
    %s34 = sadd.s32 %s33, 1
    %s35 = scalar_select %p32, %s33, %s34
    %p38 = pneg %p32
    %p39 = scmp.eq.s32.totalorder %s9, 1
    %p40 = por %p38, %p39
    %p41 = scmp.ne.s32.totalorder %s33, %s36
    %p42 = scmp.eq.s32.totalorder %s9, 0
    %p43 = por %p41, %p42
    %p44 = scmp.ne.s32.totalorder %s33, %s36
    %p45 = scmp.eq.s32.totalorder %s14, 1
    %p46 = por %p44, %p45
    %p47 = scmp.ne.s32.totalorder %s36, %s37
    %p48 = scmp.eq.s32.totalorder %s14, 0
    %p49 = por %p47, %p48
    %p50 = scmp.ne.s32.totalorder %s36, %s37
    %p51 = scmp.eq.s32.totalorder %s15, 1
    %p52 = por %p50, %p51
    %p54 = scmp.ne.s32.totalorder %s37, %s53
    %p55 = scmp.eq.s32.totalorder %s15, 0
    %p56 = por %p54, %p55
    %s58 = sadd.s32 %s57, 1
    %p61 = scmp.eq.s32.totalorder %s9, 1
    %p62 = scmp.ne.s32.totalorder %s57, %s59
    %p63 = scmp.eq.s32.totalorder %s9, 0
    %p64 = por %p62, %p63
    %p65 = scmp.ne.s32.totalorder %s57, %s59
    %p66 = scmp.eq.s32.totalorder %s14, 1
    %p67 = por %p65, %p66
    %p68 = scmp.ne.s32.totalorder %s59, %s60
    %p69 = scmp.eq.s32.totalorder %s14, 0
    %p70 = por %p68, %p69
    %p71 = scmp.ne.s32.totalorder %s59, %s60
    %p72 = scmp.eq.s32.totalorder %s15, 1
    %p73 = por %p71, %p72
    %p75 = scmp.ne.s32.totalorder %s60, %s74
    %p76 = scmp.eq.s32.totalorder %s15, 0
    %p77 = por %p75, %p76
    %s79 = sadd.s32 %s78, 1
    %p82 = scmp.eq.s32.totalorder %s9, 1
    %p83 = scmp.ne.s32.totalorder %s78, %s80
    %p84 = scmp.eq.s32.totalorder %s9, 0
    %p85 = por %p83, %p84
    %p86 = scmp.ne.s32.totalorder %s78, %s80
    %p87 = scmp.eq.s32.totalorder %s14, 1
    %p88 = por %p86, %p87
    %p89 = scmp.ne.s32.totalorder %s80, %s81
    %p90 = scmp.eq.s32.totalorder %s14, 0
    %p91 = por %p89, %p90
    %p92 = scmp.ne.s32.totalorder %s80, %s81
    %p93 = scmp.eq.s32.totalorder %s15, 1
    %p94 = por %p92, %p93
    %p96 = scmp.ne.s32.totalorder %s81, %s95
    %p97 = scmp.eq.s32.totalorder %s15, 0
    %p98 = por %p96, %p97
    %s99 = ssub.s32 %s16, %s28
    %s100 = ssub.s32 %s17, %s24
    %s101 = sor.u32 %s99, %s100
    %p102 = scmp.eq.s32.totalorder %s101, 0
    %s104 = sadd.s32 %s103, 1
    %s105 = scalar_select %p102, %s103, %s104
    %p108 = pneg %p102
    %p109 = scmp.eq.s32.totalorder %s9, 1
    %p110 = por %p108, %p109
    %p111 = scmp.ne.s32.totalorder %s103, %s106
    %p112 = scmp.eq.s32.totalorder %s9, 0
    %p113 = por %p111, %p112
    %p114 = scmp.ne.s32.totalorder %s103, %s106
    %p115 = scmp.eq.s32.totalorder %s14, 1
    %p116 = por %p114, %p115
    %p117 = scmp.ne.s32.totalorder %s106, %s107
    %p118 = scmp.eq.s32.totalorder %s14, 0
    %p119 = por %p117, %p118
    %p120 = scmp.ne.s32.totalorder %s106, %s107
    %p121 = scmp.eq.s32.totalorder %s15, 1
    %p122 = por %p120, %p121
    %p124 = scmp.ne.s32.totalorder %s107, %s123
    %p125 = scmp.eq.s32.totalorder %s15, 0
    %p126 = por %p124, %p125
    %p127 = scmp.le.s32.totalorder 1, %s9
    %p128 = scmp.lt.s32.totalorder %s9, 3
    %p129 = pnand %p127, %p128
    %p130 = pneg %p129
    // Predicated region
    $region9: #{fno2d_forward.21} parent=5 // pred_check
      _
    $region10: #{fno2d_forward.21} parent=5 // pred_check_branch
      %132 = sbr.rel (%p129) target = $region12
    $region11: #{fno2d_forward.21} parent=5 // pred_region
      %s133 = ssub.s32 %s9, 1
      // Predicated region
      $region13: #{fno2d_forward.21} parent=11 // pred_check
        %p134 = pneg %p70
      $region14: #{fno2d_forward.21} parent=11 // pred_check_branch
        %136 = sbr.rel (%p134) target = $region16
      $region15: #{fno2d_forward.21} parent=11 // pred_region
        _
      $region16: #{fno2d_forward.21} parent=11 // pred_fallthru
        _
      // Predicated region
      $region17: #{fno2d_forward.21} parent=11 // pred_check
        %p137 = pneg %p91
      $region18: #{fno2d_forward.21} parent=11 // pred_check_branch
        %139 = sbr.rel (%p137) target = $region20
      $region19: #{fno2d_forward.21} parent=11 // pred_region
        _
      $region20: #{fno2d_forward.21} parent=11 // pred_fallthru
        _
    $region12: #{fno2d_forward.21} parent=5 // pred_fallthru
      _
    %p140 = scmp.lt.s32.totalorder %s9, 2
    // Predicated region
    $region21: #{fno2d_forward.21} parent=5 // pred_check
      %p141 = pneg %p140
    $region22: #{fno2d_forward.21} parent=5 // pred_check_branch
      %143 = sbr.rel (%p141) target = $region24
    $region23: #{fno2d_forward.21} parent=5 // pred_region
      // Predicated region
      $region25: #{fno2d_forward.21} parent=23 // pred_check
        %p144 = pneg %p43
      $region26: #{fno2d_forward.21} parent=23 // pred_check_branch
        %146 = sbr.rel (%p144) target = $region28
      $region27: #{fno2d_forward.21} parent=23 // pred_region
        %s147 = smul.u32 2, %s17
        %p148 = scmp.lt.s32.totalorder %s16, 1
        %s149 = scalar_select %p148, %s16, 1
        %p150 = scmp.lt.s32.totalorder %s147, 1
        %s151 = scalar_select %p150, %s147, 1
        %s152 = smul.addr %s149, 32
        %s153 = sadd.s32 %s151, %s152
        %s154 = smul.addr %s153, 4
        %s155 = scalar_lea.vmem %s0, %s154
        %s156 = smul.u32 2, %s17
      $region28: #{fno2d_forward.21} parent=23 // pred_fallthru
        _
    $region24: #{fno2d_forward.21} parent=5 // pred_fallthru
      _
    %p157 = scmp.le.s32.totalorder 1, %s9
    %p158 = scmp.lt.s32.totalorder %s9, 3
    %p159 = pnand %p157, %p158
    %p160 = pneg %p159
    // Predicated region
    $region29: #{fno2d_forward.21} parent=5 // pred_check
      _
    $region30: #{fno2d_forward.21} parent=5 // pred_check_branch
      %162 = sbr.rel (%p159) target = $region32
    $region31: #{fno2d_forward.21} parent=5 // pred_region
      %s163 = ssub.s32 %s9, 1
      %s164 = smul.u32 2, %s19
      %p165 = scmp.lt.s32.totalorder %s18, 1
      %s166 = scalar_select %p165, %s18, 1
      %p167 = scmp.lt.s32.totalorder %s164, 1
      %s168 = scalar_select %p167, %s164, 1
      %s169 = smul.addr %s166, 32
      %s170 = sadd.s32 %s168, %s169
      %s171 = smul.addr %s170, 4
      %s172 = scalar_lea.vmem %s0, %s171
      %p173 = pneg %p49
      %p174 = pneg %p46
      %p175 = pneg %p70
      %p176 = pneg %p67
      %p177 = pneg %p91
      %p178 = pneg %p88
      %p179 = pneg %p119
      %p180 = pneg %p116
      %s181 = smul.u32 2, %s19
      %p182 = scmp.lt.s32.totalorder %s18, 1
      %s183 = scalar_select %p182, %s18, 1
      %p184 = scmp.lt.s32.totalorder %s181, 1
      %s185 = scalar_select %p184, %s181, 1
      %s186 = smul.addr %s183, 2
      %s187 = sadd.s32 %s185, %s186
      %s188 = smul.addr %s187, 4
      %s189 = scalar_lea.vmem %s3, %s188
      %s190 = smul.u32 2, %s19
      %p191 = scmp.lt.s32.totalorder %s18, 1
      %s192 = scalar_select %p191, %s18, 1
      %p193 = scmp.lt.s32.totalorder %s190, 1
      %s194 = scalar_select %p193, %s190, 1
      %s195 = smul.addr %s192, 32
      %s196 = sadd.s32 %s194, %s195
      %s197 = smul.addr %s196, 4
      %s198 = scalar_lea.vmem %s0, %s197
      %s199 = smul.u32 2, %s19
      %s200 = smul.u32 2, %s19
      %p201 = scmp.lt.s32.totalorder %s18, 1
      %s202 = scalar_select %p201, %s18, 1
      %p203 = scmp.lt.s32.totalorder %s200, 1
      %s204 = scalar_select %p203, %s200, 1
      %s205 = smul.addr %s202, 2
      %s206 = sadd.s32 %s204, %s205
      %s207 = smul.addr %s206, 4
      %s208 = scalar_lea.vmem %s3, %s207
      %s209 = smul.u32 2, %s19
      %v210 = vld [vmem:[%s198] sm:$0xff]
      %v211 = vld [vmem:[%s198 + $0x8] sm:$0xff]
      %v212 = vld [vmem:[%s198 + $0x10] sm:$0xff]
      %v213 = vld [vmem:[%s198 + $0x18] sm:$0xff]
      %v214 = vld [vmem:[%s198 + $0x20] sm:$0xff]
      %v215 = vld [vmem:[%s198 + $0x28] sm:$0xff]
      %v216 = vld [vmem:[%s198 + $0x30] sm:$0xff]
      %v217 = vld [vmem:[%s198 + $0x38] sm:$0xff]
      %v218 = vld [vmem:[%s198 + $0x40] sm:$0xff]
      %v219 = vld [vmem:[%s198 + $0x48] sm:$0xff]
      %v220 = vld [vmem:[%s198 + $0x50] sm:$0xff]
      %v221 = vld [vmem:[%s198 + $0x58] sm:$0xff]
      %v222 = vld [vmem:[%s198 + $0x60] sm:$0xff]
      %v223 = vld [vmem:[%s198 + $0x68] sm:$0xff]
      %v224 = vld [vmem:[%s198 + $0x70] sm:$0xff]
      %v225 = vld [vmem:[%s198 + $0x78] sm:$0xff]
      %v226 = vld [vmem:[%s1] sm:$0x3]
      %v227 = vld [vmem:[%s2] sm:$0xf]
      %229 = vset.pattern.permute.xlu0 0
      %230 = vperm.xlu0 %229, %v227
      %v231 = vpop.permute.xlu0 %230
      %v249 = vunpack.c.l.b16 %v210
      %v250 = vunpack.c.h.b16 %v210
      %v251 = vunpack.c.l.b16 %v211
      %v252 = vunpack.c.h.b16 %v211
      %v253 = vunpack.c.l.b16 %v212
      %v254 = vunpack.c.h.b16 %v212
      %v255 = vunpack.c.l.b16 %v213
      %v256 = vunpack.c.h.b16 %v213
      %v257 = vunpack.c.l.b16 %v214
      %v258 = vunpack.c.h.b16 %v214
      %v259 = vunpack.c.l.b16 %v215
      %v260 = vunpack.c.h.b16 %v215
      %v261 = vunpack.c.l.b16 %v216
      %v262 = vunpack.c.h.b16 %v216
      %v263 = vunpack.c.l.b16 %v217
      %v264 = vunpack.c.h.b16 %v217
      %v265 = vunpack.c.l.b16 %v218
      %v266 = vunpack.c.h.b16 %v218
      %v267 = vunpack.c.l.b16 %v219
      %v268 = vunpack.c.h.b16 %v219
      %v269 = vunpack.c.l.b16 %v220
      %v270 = vunpack.c.h.b16 %v220
      %v271 = vunpack.c.l.b16 %v221
      %v272 = vunpack.c.h.b16 %v221
      %v273 = vunpack.c.l.b16 %v222
      %v274 = vunpack.c.h.b16 %v222
      %v275 = vunpack.c.l.b16 %v223
      %v276 = vunpack.c.h.b16 %v223
      %v277 = vunpack.c.l.b16 %v224
      %v278 = vunpack.c.h.b16 %v224
      %v279 = vunpack.c.l.b16 %v225
      %v280 = vunpack.c.h.b16 %v225
      %v281 = vpack.c.b16 %v251, %v249
      %v282 = vpack.c.b16 %v252, %v250
      %v283 = vpack.c.b16 %v255, %v253
      %v284 = vpack.c.b16 %v256, %v254
      %v285 = vpack.c.b16 %v259, %v257
      %v286 = vpack.c.b16 %v260, %v258
      %v287 = vpack.c.b16 %v263, %v261
      %v288 = vpack.c.b16 %v264, %v262
      %v289 = vpack.c.b16 %v267, %v265
      %v290 = vpack.c.b16 %v268, %v266
      %v291 = vpack.c.b16 %v271, %v269
      %v292 = vpack.c.b16 %v272, %v270
      %v293 = vpack.c.b16 %v275, %v273
      %v294 = vpack.c.b16 %v276, %v274
      %v295 = vpack.c.b16 %v279, %v277
      %v296 = vpack.c.b16 %v280, %v278
      %313 = vmatpush.bf16.msra.mxu0 %v295
      %314 = vmatpush.bf16.msra.mxu0 %v293
      %315 = vmatpush.bf16.msra.mxu0 %v291
      %316 = vmatpush.bf16.msra.mxu0 %v289
      %317 = vmatpush.bf16.msra.mxu0 %v287
      %318 = vmatpush.bf16.msra.mxu0 %v285
      %319 = vmatpush.bf16.msra.mxu0 %v283
      %320 = vmatpush.bf16.msra.mxu0 %v281
      %321 = vmatmul.bf16.gmra.mxu0 %v226
      %v322 = vpop.f32.mrf.mxu0
      %v323 = vadd.f32 %v231, %v322
      %v324 = vpop.f32.mrf.mxu0
      %325 = vdwg.mxu0
      %326 = vmatpush.bf16.msra.mxu0 %v296
      %327 = vmatpush.bf16.msra.mxu0 %v294
      %328 = vmatpush.bf16.msra.mxu0 %v292
      %329 = vmatpush.bf16.msra.mxu0 %v290
      %330 = vmatpush.bf16.msra.mxu0 %v288
      %331 = vmatpush.bf16.msra.mxu0 %v286
      %332 = vmatpush.bf16.msra.mxu0 %v284
      %333 = vmatpush.bf16.msra.mxu0 %v282
      %334 = vmatmul.bf16.gmra.mxu0 %v226
      %v335 = vpop.f32.mrf.mxu0
      %v336 = vadd.f32 %v231, %v335
      %v337 = vpop.f32.mrf.mxu0
      %338 = vdwg.mxu0
      %v341 = vrot.slane %v336, 4
      %vm342 = vcmask 1043456
      %v343 = vsel %vm342, %v323, %v341
      %345 = vst [vmem:[%s208] sm:$0xff] %v343
      %s346 = smul.u32 2, %s19
      %p347 = scmp.lt.s32.totalorder %s18, 1
      %s348 = scalar_select %p347, %s18, 1
      %p349 = scmp.lt.s32.totalorder %s346, 1
      %s350 = scalar_select %p349, %s346, 1
      %s351 = smul.addr %s348, 2
      %s352 = sadd.s32 %s350, %s351
      %s353 = smul.addr %s352, 4
      %s354 = scalar_lea.vmem %s3, %s353
      // Predicated region
      $region33: #{fno2d_forward.21} parent=31 // pred_check
        %p355 = pneg %p116
      $region34: #{fno2d_forward.21} parent=31 // pred_check_branch
        %357 = sbr.rel (%p355) target = $region36
      $region35: #{fno2d_forward.21} parent=31 // pred_region
        %s358 = smul.u32 2, %s19
      $region36: #{fno2d_forward.21} parent=31 // pred_fallthru
        _
    $region32: #{fno2d_forward.21} parent=5 // pred_fallthru
      _
    %p359 = scmp.le.s32.totalorder 2, %s9
    // Predicated region
    $region37: #{fno2d_forward.21} parent=5 // pred_check
      %p360 = pneg %p359
    $region38: #{fno2d_forward.21} parent=5 // pred_check_branch
      %362 = sbr.rel (%p360) target = $region40
    $region39: #{fno2d_forward.21} parent=5 // pred_region
      %s363 = ssub.s32 %s9, 2
      // Predicated region
      $region41: #{fno2d_forward.21} parent=39 // pred_check
        %p364 = pneg %p122
      $region42: #{fno2d_forward.21} parent=39 // pred_check_branch
        %366 = sbr.rel (%p364) target = $region44
      $region43: #{fno2d_forward.21} parent=39 // pred_region
        %s367 = smul.u32 2, %s21
        %p368 = scmp.lt.s32.totalorder %s20, 1
        %s369 = scalar_select %p368, %s20, 1
        %p370 = scmp.lt.s32.totalorder %s367, 1
        %s371 = scalar_select %p370, %s367, 1
        %s372 = smul.addr %s369, 2
        %s373 = sadd.s32 %s371, %s372
        %s374 = smul.addr %s373, 4
        %s375 = scalar_lea.vmem %s3, %s374
      $region44: #{fno2d_forward.21} parent=39 // pred_fallthru
        _
    $region40: #{fno2d_forward.21} parent=5 // pred_fallthru
      _
  $region6: #{fno2d_forward.21} parent=0 // loop_footer
    %s13 = sadd.s32 1, %s9
  $region7: #{fno2d_forward.21} parent=0 // loop_footer_branch
    %8 = sbr.rel target = $region3
  $region8: #{fno2d_forward.21} parent=0 // loop_exit
    _

</llo_original>
